<compile_context>
chip_gen: v6e
topology: v6e:2x2x1
jax: 0.10.0
libtpu: 0.0.40
codegen_flags: <defaults>
</compile_context>

<pallas_src>
import math

import jax
import jax.numpy as jnp
from jax.experimental import pallas as pl
from jax.experimental.pallas import tpu as pltpu


# ----------------------------- scaled-down OSX config -----------------------------
class cfg:
    input_img_shape = (32, 32)        # (H, W)
    input_body_shape = (16, 16)       # (H, W)
    input_hand_shape = (16, 16)
    input_face_shape = (16, 16)
    output_hm_shape = (8, 8, 8)       # (D, H, W)
    output_hand_hm_shape = (8, 8, 8)
    output_face_hm_shape = (8, 8, 8)
    focal = (5000.0, 5000.0)
    camera_3d_size = 2.5


FEAT_DIM = 32
PATCH = 2
FH = cfg.input_body_shape[0] // PATCH     # 8
FW = cfg.input_body_shape[1] // PATCH     # 8
S_SPATIAL = FH * FW                       # 64 feature-map positions
J_BODY = 8
J_HAND = 8
J_FACE = 8
HM_D = cfg.output_hm_shape[0]             # 8
NUM_TASK_TOKENS = 6 + J_BODY              # shape/cam/expr/jaw + 2 hand + body-pose tokens
BODY_POSE_JOINTS = 21                     # 21 * 6 rot6d -> 63 axis-angle
HAND_POSE_JOINTS = 15                     # 15 * 6 rot6d -> 45 axis-angle
SHAPE_DIM = 10
EXPR_DIM = 10

K_VALUE = math.sqrt(
    cfg.focal[0] * cfg.focal[1] * cfg.camera_3d_size * cfg.camera_3d_size
    / (cfg.input_body_shape[0] * cfg.input_body_shape[1])
)

_VMEM = pl.BlockSpec(memory_space=pltpu.MemorySpace.VMEM)


# ----------------------------- Pallas kernels -----------------------------
def _mm(a, b):
    return jnp.dot(a, b, preferred_element_type=jnp.float32)


def _softargmax_core(feat, A, Z, wph, bph):
    """1x1-conv heatmap head + soft-argmax, all in VMEM.

    feat: [N*S, C]   A: [3N, N*S] (per-sample ones / x-coord / y-coord rows)
    Z:    [J*D, 2J]  (per-joint ones / z-coord columns)
    Returns pooled [N,C], raw heatmap hm [N*S, J*D], coords cx, cy, cz [N, J].
    """
    N = A.shape[0] // 3
    S = A.shape[1] // N
    J = Z.shape[1] // 2
    a_ones = A[0:N, :]
    pooled = _mm(a_ones, feat) * (1.0 / S)                       # [N, C]

    hm = _mm(feat, wph) + bph                                    # [N*S, J*D]
    # Global max is a constant shift within every (sample, joint) softmax group,
    # so the soft-argmax is mathematically unchanged (and numerically stable here).
    m = jnp.max(jnp.max(hm, axis=-1, keepdims=True), axis=0, keepdims=True)
    e = jnp.exp(hm - m)
    gz = _mm(_mm(A, e), Z)                                       # [3N, 2J]
    inv = 1.0 / gz[0:N, 0:J]
    cz = gz[0:N, J:2 * J] * inv
    cx = gz[N:2 * N, 0:J] * inv
    cy = gz[2 * N:3 * N, 0:J] * inv
    return pooled, hm, cx, cy, cz


def _enc_body_kernel(patch_ref, a_ref, z_ref,
                     wpe_ref, bpe_ref, wtt_ref, btt_ref, wpos_ref, bpos_ref,
                     wrt_ref, wjx_ref, wjy_ref, wjz_ref, brp_ref,
                     wsh_ref, bsh_ref, wcm_ref, bcm_ref,
                     wbp_ref, wbh_ref, bbx_ref,
                     feat_ref, jxyz_ref, pose6_ref, shape_ref, cam_ref, box_ref):
    B = jxyz_ref.shape[0]
    C = wpe_ref.shape[1]
    J = wjx_ref.shape[0]
    D = wpos_ref.shape[1] // J
    S = a_ref.shape[1] // B

    # ---- encoder: patch embed + task tokens ----
    feat = _mm(patch_ref[...], wpe_ref[...]) + bpe_ref[...]      # [B*S, C]
    feat_ref[...] = feat

    A = a_ref[...]
    pooled0, hm, cx, cy, cz = _softargmax_core(feat, A, z_ref[...], wpos_ref[...], bpos_ref[...])

    task = _mm(pooled0, wtt_ref[...]) + btt_ref[...]             # [B, NUM_TASK_TOKENS*C]
    shape_tok = task[:, 0:C]
    cam_tok = task[:, C:2 * C]
    body_tok = task[:, 6 * C:]                                   # [B, J_BODY*C]

    jxyz_ref[...] = jnp.concatenate([cx, cy, cz], axis=-1)       # [B, 3*J]

    # heatmap mean-pool for the box net (mean over spatial and depth per joint)
    hm_pool = _mm(_mm(A[0:B, :], hm), z_ref[...])[:, 0:J] * (1.0 / (S * D))    # [B, J]

    # ---- body regressor (pose / shape / cam) with weight split for the joint coords ----
    pose6_ref[...] = (_mm(body_tok, wrt_ref[...]) + _mm(cx, wjx_ref[...])
                      + _mm(cy, wjy_ref[...]) + _mm(cz, wjz_ref[...]) + brp_ref[...])
    shape_ref[...] = _mm(shape_tok, wsh_ref[...]) + bsh_ref[...]

    camp = _mm(cam_tok, wcm_ref[...]) + bcm_ref[...]             # [B, 3]
    gamma = 1.0 / (1.0 + jnp.exp(-camp[:, 2:3]))
    cam_ref[...] = jnp.concatenate([camp[:, 0:2], K_VALUE * gamma], axis=-1)

    # ---- box net (sigmoid fused) ----
    box_lin = _mm(pooled0, wbp_ref[...]) + _mm(hm_pool, wbh_ref[...]) + bbx_ref[...]
    box_ref[...] = 1.0 / (1.0 + jnp.exp(-box_lin))


def _limb_common(feat_ref, a_ref, z_ref, wph_ref, bph_ref, wfold_ref, bfold_ref,
                 kx_ref, ky_ref, kz_ref):
    pooled, _, cx, cy, cz = _softargmax_core(
        feat_ref[...], a_ref[...], z_ref[...], wph_ref[...], bph_ref[...])
    # decoder refinement: pos-feature linear is pre-folded with the decoder feature path,
    # normalized joint coords enter through block-diagonal K matrices (built at prep time).
    himg = (_mm(pooled, wfold_ref[...]) + bfold_ref[...]
            + _mm(cx, kx_ref[...]) + _mm(cy, ky_ref[...]) + _mm(cz, kz_ref[...]))
    return pooled, cx, cy, cz, himg


def _hand_kernel(feat_ref, a_ref, z_ref, wph_ref, bph_ref, wfold_ref, bfold_ref,
                 kx_ref, ky_ref, kz_ref, wr1_ref, wrx_ref, wry_ref, wrz_ref, brg_ref,
                 jxyz_ref, pose6_ref):
    _, cx, cy, cz, himg = _limb_common(feat_ref, a_ref, z_ref, wph_ref, bph_ref,
                                       wfold_ref, bfold_ref, kx_ref, ky_ref, kz_ref)
    jxyz_ref[...] = jnp.concatenate([cx, cy, cz], axis=-1)
    pose6_ref[...] = (_mm(himg, wr1_ref[...]) + _mm(cx, wrx_ref[...])
                      + _mm(cy, wry_ref[...]) + _mm(cz, wrz_ref[...]) + brg_ref[...])


def _face_kernel(feat_ref, a_ref, z_ref, wph_ref, bph_ref, wfold_ref, bfold_ref,
                 kx_ref, ky_ref, kz_ref, wr1_ref, wrx_ref, wry_ref, wrz_ref,
                 wpool_ref, brg_ref, out_ref):
    pooled, cx, cy, cz, himg = _limb_common(feat_ref, a_ref, z_ref, wph_ref, bph_ref,
                                            wfold_ref, bfold_ref, kx_ref, ky_ref, kz_ref)
    out_ref[...] = (_mm(himg, wr1_ref[...]) + _mm(cx, wrx_ref[...])
                    + _mm(cy, wry_ref[...]) + _mm(cz, wrz_ref[...])
                    + _mm(pooled, wpool_ref[...]) + brg_ref[...])


def _rot6d_kernel(a1_ref, a2_ref, o_ref):
    """Batched, lane-major Gram-Schmidt: a1/a2 [3, N] -> rows (trace, v_x, v_y, v_z) [4, N]."""
    a1 = a1_ref[...]
    a2 = a2_ref[...]
    eps = 1e-8
    b1 = a1 * jax.lax.rsqrt(jnp.sum(a1 * a1, axis=0, keepdims=True) + eps)
    dot = jnp.sum(b1 * a2, axis=0, keepdims=True)
    u2 = a2 - dot * b1
    b2 = u2 * jax.lax.rsqrt(jnp.sum(u2 * u2, axis=0, keepdims=True) + eps)
    b1x, b1y, b1z = b1[0:1], b1[1:2], b1[2:3]
    b2x, b2y, b2z = b2[0:1], b2[1:2], b2[2:3]
    b3x = b1y * b2z - b1z * b2y
    b3y = b1z * b2x - b1x * b2z
    b3z = b1x * b2y - b1y * b2x
    tr = b1x + b2y + b3z
    vx = b2z - b3y
    vy = b3x - b1z
    vz = b1y - b2x
    o_ref[...] = jnp.concatenate([tr, vx, vy, vz], axis=0)


# ----------------------------- JAX glue helpers -----------------------------
def _finish_axis_angle(trv):
    """trv: [4, N] rows (trace, v_x, v_y, v_z) -> axis-angle [N, 3]."""
    # TODO(synk): reference rot6d_to_axis_angle goes rotmat->quaternion->axis-angle; the direct
    # (trace / skew-part) formula is used here (same rotation semantics, singular near pi).
    tr = trv[0]
    v = jnp.transpose(trv[1:4])                    # [N, 3]
    cosang = jnp.clip((tr - 1.0) * 0.5, -1.0, 1.0)
    angle = jnp.arccos(cosang)
    sinang = jnp.sqrt(jnp.sum(v * v, axis=-1, keepdims=True)) * 0.5
    axis = v / (2.0 * sinang + 1e-8)
    return axis * angle[:, None]


def restore_bbox(bbox_center, bbox_size, aspect_ratio, extension_ratio):
    xmin = bbox_center[:, 0] - bbox_size[:, 0] / 2.0
    xmax = bbox_center[:, 0] + bbox_size[:, 0] / 2.0
    ymin = bbox_center[:, 1] - bbox_size[:, 1] / 2.0
    ymax = bbox_center[:, 1] + bbox_size[:, 1] / 2.0
    sx = cfg.input_body_shape[1] / cfg.output_hm_shape[2]
    sy = cfg.input_body_shape[0] / cfg.output_hm_shape[1]
    xmin, xmax = xmin * sx, xmax * sx
    ymin, ymax = ymin * sy, ymax * sy
    w = xmax - xmin
    h = ymax - ymin
    cx = xmin + w / 2.0
    cy = ymin + h / 2.0
    mask = w > aspect_ratio * h
    h = jnp.where(mask, w / aspect_ratio, h)
    w = jnp.where(mask, w, h * aspect_ratio)
    w = w * extension_ratio
    h = h * extension_ratio
    return jnp.stack([cx - w / 2.0, cy - h / 2.0, cx + w / 2.0, cy + h / 2.0], axis=-1)


# ----------------------------- deterministic parameters -----------------------------
def init_params():
    key = jax.random.PRNGKey(0)

    def nxt():
        nonlocal key
        key, sub = jax.random.split(key)
        return sub

    def lin(k_in, k_out):
        return (
            0.02 * jax.random.normal(nxt(), (k_in, k_out), jnp.float32),
            jnp.zeros((k_out,), jnp.float32),
        )

    p = {}
    p["patch_embed"] = lin(3 * PATCH * PATCH, FEAT_DIM)
    p["task_tokens"] = lin(FEAT_DIM, NUM_TASK_TOKENS * FEAT_DIM)
    p["body_pos"] = lin(FEAT_DIM, J_BODY * HM_D)
    p["body_reg_pose"] = lin(J_BODY * FEAT_DIM + J_BODY * 3, BODY_POSE_JOINTS * 6 + 6)
    p["body_reg_shape"] = lin(FEAT_DIM, SHAPE_DIM)
    p["body_reg_cam"] = lin(FEAT_DIM, 3)
    p["box_net"] = lin(FEAT_DIM + J_BODY, 12)
    p["hand_roi"] = lin(FEAT_DIM, FEAT_DIM)          # built for interface parity; unused downstream
    p["hand_pos_hm"] = lin(FEAT_DIM, J_HAND * cfg.output_hand_hm_shape[0])
    p["hand_pos_feat"] = lin(FEAT_DIM, J_HAND * FEAT_DIM)
    p["hand_dec"] = lin(FEAT_DIM + 3, FEAT_DIM)
    p["hand_reg"] = lin(J_HAND * FEAT_DIM + J_HAND * 3, HAND_POSE_JOINTS * 6)
    p["face_roi"] = lin(FEAT_DIM, FEAT_DIM)
    p["face_pos_hm"] = lin(FEAT_DIM, J_FACE * cfg.output_face_hm_shape[0])
    p["face_pos_feat"] = lin(FEAT_DIM, J_FACE * FEAT_DIM)
    p["face_dec"] = lin(FEAT_DIM + 3, FEAT_DIM)
    p["face_reg"] = lin(J_FACE * FEAT_DIM + J_FACE * 3 + FEAT_DIM, EXPR_DIM + 6)
    return p


def prepare_params(p, batch):
    """One-time weight splitting / folding and reduction-matrix construction (hoisted out of the
    hot path, as per the perf review)."""
    C = FEAT_DIM
    J = J_BODY
    D = HM_D
    S = S_SPATIAL
    prep = {}

    def row_reduce_matrix(n):
        # [3n, n*S]: rows 0..n-1 per-sample ones, n..2n-1 x-coords, 2n..3n-1 y-coords.
        s = jnp.arange(S)
        xs = (s % FW).astype(jnp.float32)
        ys = (s // FW).astype(jnp.float32)
        eye = jnp.eye(n, dtype=jnp.float32)
        ones_rows = jnp.kron(eye, jnp.ones((1, S), jnp.float32))
        x_rows = jnp.kron(eye, xs[None, :])
        y_rows = jnp.kron(eye, ys[None, :])
        return jnp.concatenate([ones_rows, x_rows, y_rows], axis=0)

    prep["A_body"] = row_reduce_matrix(batch)
    prep["A_hand"] = row_reduce_matrix(2 * batch)

    zvals = jnp.arange(D, dtype=jnp.float32)
    eyeJ = jnp.eye(J, dtype=jnp.float32)
    z_ones = jnp.kron(eyeJ, jnp.ones((D, 1), jnp.float32))          # [J*D, J]
    z_wt = jnp.kron(eyeJ, zvals[:, None])                           # [J*D, J]
    prep["Z"] = jnp.concatenate([z_ones, z_wt], axis=1)             # [J*D, 2J]

    # encoder / body position head
    prep["w_pe"], prep["b_pe"] = p["patch_embed"][0], p["patch_embed"][1].reshape(1, -1)
    prep["w_tt"], prep["b_tt"] = p["task_tokens"][0], p["task_tokens"][1].reshape(1, -1)
    prep["w_bpos"], prep["b_bpos"] = p["body_pos"][0], p["body_pos"][1].reshape(1, -1)

    # body regressor: split token / joint-coord rows; drop the (overridden) root-pose columns
    w, b = p["body_reg_pose"]
    n_tok = J_BODY * C
    n_pose = BODY_POSE_JOINTS * 6
    prep["w_rp_tok"] = w[:n_tok, :n_pose]
    wj = w[n_tok:, :n_pose].reshape(J_BODY, 3, n_pose)
    prep["w_rp_jx"], prep["w_rp_jy"], prep["w_rp_jz"] = wj[:, 0], wj[:, 1], wj[:, 2]
    prep["b_rp"] = b[:n_pose].reshape(1, -1)

    prep["w_sh"], prep["b_sh"] = p["body_reg_shape"][0], p["body_reg_shape"][1].reshape(1, -1)
    prep["w_cam"], prep["b_cam"] = p["body_reg_cam"][0], p["body_reg_cam"][1].reshape(1, -1)

    w, b = p["box_net"]
    prep["w_box_pool"] = w[:C]
    prep["w_box_hm"] = w[C:]
    prep["b_box"] = b.reshape(1, -1)

    def fold_decoder(pos_feat, dec, n_joints, hm_shape):
        # pos-feature linear composed with the decoder feature path; coord path as block-diag K's
        # (normalization by the heatmap shape is folded into K).
        wpf, bpf = pos_feat
        wd, bd = dec
        wd1 = wd[:C]                                           # [C, C]
        wd2 = wd[C:]                                           # [3, C]
        wpf3 = wpf.reshape(C, n_joints, C)
        wfold = jnp.einsum("cjk,km->cjm", wpf3, wd1).reshape(C, n_joints * C)
        bfold = (bpf.reshape(n_joints, C) @ wd1 + bd[None, :]).reshape(1, n_joints * C)
        eye = jnp.eye(n_joints, dtype=jnp.float32)
        kx = jnp.kron(eye, wd2[0:1, :]) / hm_shape[2]
        ky = jnp.kron(eye, wd2[1:2, :]) / hm_shape[1]
        kz = jnp.kron(eye, wd2[2:3, :]) / hm_shape[0]
        return wfold, bfold, kx, ky, kz

    # ---- hand branch ----
    prep["w_hph"], prep["b_hph"] = p["hand_pos_hm"][0], p["hand_pos_hm"][1].reshape(1, -1)
    (prep["w_hfold"], prep["b_hfold"], prep["kx_h"], prep["ky_h"], prep["kz_h"]) = fold_decoder(
        p["hand_pos_feat"], p["hand_dec"], J_HAND, cfg.output_hand_hm_shape)
    w, b = p["hand_reg"]
    n_tok = J_HAND * C
    prep["w_hr1"] = w[:n_tok]
    wj = w[n_tok:].reshape(J_HAND, 3, -1)
    prep["w_hr_jx"], prep["w_hr_jy"], prep["w_hr_jz"] = wj[:, 0], wj[:, 1], wj[:, 2]
    prep["b_hr"] = b.reshape(1, -1)

    # ---- face branch ----
    prep["w_fph"], prep["b_fph"] = p["face_pos_hm"][0], p["face_pos_hm"][1].reshape(1, -1)
    (prep["w_ffold"], prep["b_ffold"], prep["kx_f"], prep["ky_f"], prep["kz_f"]) = fold_decoder(
        p["face_pos_feat"], p["face_dec"], J_FACE, cfg.output_face_hm_shape)
    w, b = p["face_reg"]
    n_tok = J_FACE * C
    prep["w_fr1"] = w[:n_tok]
    wj = w[n_tok:n_tok + J_FACE * 3].reshape(J_FACE, 3, -1)
    prep["w_fr_jx"], prep["w_fr_jy"], prep["w_fr_jz"] = wj[:, 0], wj[:, 1], wj[:, 2]
    w_pool = w[n_tok + J_FACE * 3:]                            # rows for pooled(face_feat1)
    w_roi, b_roi = p["face_roi"]
    prep["w_fr_pool"] = w_roi @ w_pool                         # fold ROI 1x1-conv into the pooled path
    prep["b_fr"] = (b + b_roi @ w_pool).reshape(1, -1)
    return prep


# ----------------------------- Model forward (mode='pose_inference') -----------------------------
def model_forward(prep, img_nchw):
    B = img_nchw.shape[0]
    C, S = FEAT_DIM, S_SPATIAL

    img = jnp.transpose(img_nchw, (0, 2, 3, 1))                   # NCHW -> NHWC
    body_img = jax.image.resize(
        img, (B, cfg.input_body_shape[0], cfg.input_body_shape[1], 3), method="bilinear")
    patches = (
        body_img.reshape(B, FH, PATCH, FW, PATCH, 3)
        .transpose(0, 1, 3, 2, 4, 5)
        .reshape(B * S, PATCH * PATCH * 3)
    ).astype(jnp.float32)

    # ---------- kernel 1: encoder + body branch ----------
    enc_args = (patches, prep["A_body"], prep["Z"],
                prep["w_pe"], prep["b_pe"], prep["w_tt"], prep["b_tt"],
                prep["w_bpos"], prep["b_bpos"],
                prep["w_rp_tok"], prep["w_rp_jx"], prep["w_rp_jy"], prep["w_rp_jz"], prep["b_rp"],
                prep["w_sh"], prep["b_sh"], prep["w_cam"], prep["b_cam"],
                prep["w_box_pool"], prep["w_box_hm"], prep["b_box"])
    enc_out_shapes = (
        jax.ShapeDtypeStruct((B * S, C), jnp.float32),             # img_feat
        jax.ShapeDtypeStruct((B, 3 * J_BODY), jnp.float32),        # body joint coords (x|y|z)
        jax.ShapeDtypeStruct((B, BODY_POSE_JOINTS * 6), jnp.float32),
        jax.ShapeDtypeStruct((B, SHAPE_DIM), jnp.float32),
        jax.ShapeDtypeStruct((B, 3), jnp.float32),                 # cam_trans
        jax.ShapeDtypeStruct((B, 12), jnp.float32),                # box net (sigmoid)
    )
    img_feat, body_jxyz, body_pose6, shape, cam_trans, box_out = pl.pallas_call(
        _enc_body_kernel,
        out_shape=enc_out_shapes,
        in_specs=[_VMEM] * len(enc_args),
        out_specs=tuple([_VMEM] * len(enc_out_shapes)),
    )(*enc_args)

    body_joint_img = body_jxyz.reshape(B, 3, J_BODY).transpose(0, 2, 1)     # [B, J, 3]

    # ---------- box-net post-processing (bbox restore, XLA glue) ----------
    hm_wh = jnp.array([cfg.output_hm_shape[2], cfg.output_hm_shape[1]], jnp.float32)
    lhand_bbox_center = box_out[:, 0:2] * hm_wh
    rhand_bbox_center = box_out[:, 2:4] * hm_wh
    face_bbox_center = box_out[:, 4:6] * hm_wh
    lhand_bbox_size = box_out[:, 6:8] * hm_wh
    rhand_bbox_size = box_out[:, 8:10] * hm_wh
    face_bbox_size = box_out[:, 10:12] * hm_wh
    hand_ar = cfg.input_hand_shape[1] / cfg.input_hand_shape[0]
    face_ar = cfg.input_face_shape[1] / cfg.input_face_shape[0]
    lhand_bbox = jax.lax.stop_gradient(restore_bbox(lhand_bbox_center, lhand_bbox_size, hand_ar, 2.0))
    rhand_bbox = jax.lax.stop_gradient(restore_bbox(rhand_bbox_center, rhand_bbox_size, hand_ar, 2.0))
    face_bbox = jax.lax.stop_gradient(restore_bbox(face_bbox_center, face_bbox_size, face_ar, 1.5))

    # ---------- kernel 2: hand branch ----------
    # TODO(synk): ROIAlign crop from predicted bboxes (per-sample dynamic gather) has no clean
    # Pallas equivalent here; left hand is mirrored and both hands use the full feature map.
    img_feat_4d = img_feat.reshape(B, FH, FW, C)
    lhand_feat = jnp.flip(img_feat_4d, axis=2)
    hand_feat = jnp.concatenate([lhand_feat, img_feat_4d], axis=0).reshape(2 * B * S, C)

    hand_args = (hand_feat, prep["A_hand"], prep["Z"],
                 prep["w_hph"], prep["b_hph"], prep["w_hfold"], prep["b_hfold"],
                 prep["kx_h"], prep["ky_h"], prep["kz_h"],
                 prep["w_hr1"], prep["w_hr_jx"], prep["w_hr_jy"], prep["w_hr_jz"], prep["b_hr"])
    hand_out_shapes = (
        jax.ShapeDtypeStruct((2 * B, 3 * J_HAND), jnp.float32),
        jax.ShapeDtypeStruct((2 * B, HAND_POSE_JOINTS * 6), jnp.float32),
    )
    hand_jxyz, hand_pose6 = pl.pallas_call(
        _hand_kernel,
        out_shape=hand_out_shapes,
        in_specs=[_VMEM] * len(hand_args),
        out_specs=(_VMEM, _VMEM),
    )(*hand_args)
    hand_joint_img = hand_jxyz.reshape(2 * B, 3, J_HAND).transpose(0, 2, 1)  # [2B, J, 3]

    # ---------- kernel 3: face branch ----------
    # TODO(synk): full deformable-transformer hand/face decoders not implemented; a single fused
    # linear refinement (pos-feat linear folded with the decoder) stands in for them.
    face_args = (img_feat, prep["A_body"], prep["Z"],
                 prep["w_fph"], prep["b_fph"], prep["w_ffold"], prep["b_ffold"],
                 prep["kx_f"], prep["ky_f"], prep["kz_f"],
                 prep["w_fr1"], prep["w_fr_jx"], prep["w_fr_jy"], prep["w_fr_jz"],
                 prep["w_fr_pool"], prep["b_fr"])
    face_out = pl.pallas_call(
        _face_kernel,
        out_shape=jax.ShapeDtypeStruct((B, EXPR_DIM + 6), jnp.float32),
        in_specs=[_VMEM] * len(face_args),
        out_specs=_VMEM,
    )(*face_args)
    expr = face_out[:, :EXPR_DIM]
    jaw6 = face_out[:, EXPR_DIM:]

    # ---------- kernel 4: batched lane-major rot6d for root / body / hands / jaw ----------
    root6 = jnp.zeros((1, 6), jnp.float32)                 # root pose forced to zero-6d, as in reference
    x6_all = jnp.concatenate(
        [root6, body_pose6.reshape(-1, 6), hand_pose6.reshape(-1, 6), jaw6.reshape(-1, 6)], axis=0)
    n_tot = x6_all.shape[0]
    a1 = jnp.transpose(x6_all[:, 0::2])                    # [3, N]
    a2 = jnp.transpose(x6_all[:, 1::2])
    trv = pl.pallas_call(
        _rot6d_kernel,
        out_shape=jax.ShapeDtypeStruct((4, n_tot), jnp.float32),
        in_specs=[_VMEM, _VMEM],
        out_specs=_VMEM,
    )(a1, a2)
    aa = _finish_axis_angle(trv)                           # [N, 3]

    root_pose = jnp.tile(aa[0:1], (B, 1))
    i0 = 1
    body_pose = aa[i0:i0 + BODY_POSE_JOINTS * B].reshape(B, -1)
    i0 += BODY_POSE_JOINTS * B
    hand_pose = aa[i0:i0 + HAND_POSE_JOINTS * 2 * B].reshape(2 * B, -1)
    i0 += HAND_POSE_JOINTS * 2 * B
    jaw_pose = aa[i0:].reshape(B, 3)

    # ---------- hand left/right post-processing ----------
    lhand_joint_img = hand_joint_img[:B]
    lhand_joint_img = jnp.concatenate(
        [cfg.output_hand_hm_shape[2] - 1 - lhand_joint_img[:, :, 0:1], lhand_joint_img[:, :, 1:]],
        axis=2,
    )
    rhand_joint_img = hand_joint_img[B:]
    lhand_pose = hand_pose[:B].reshape(B, HAND_POSE_JOINTS, 3)
    lhand_pose = jnp.concatenate([lhand_pose[:, :, 0:1], -lhand_pose[:, :, 1:3]], axis=2).reshape(B, -1)
    rhand_pose = hand_pose[B:]

    # TODO(synk): smplx_layer / get_coord (SMPL-X mesh regression) needs the SMPL-X model assets;
    # mode='pose_inference' is implemented, which returns the parameter dict before that step.
    param = {
        "root_pose": root_pose,
        "body_pose": body_pose,
        "lhand_pose": lhand_pose,
        "rhand_pose": rhand_pose,
        "jaw_pose": jaw_pose,
        "shape": shape,
        "expr": expr,
    }
    aux = {
        "cam_trans": cam_trans,
        "lhand_bbox": lhand_bbox,
        "rhand_bbox": rhand_bbox,
        "face_bbox": face_bbox,
        "joint_img": jnp.concatenate([body_joint_img, lhand_joint_img, rhand_joint_img], axis=1),
    }
    return param, aux


# ----------------------------- main -----------------------------
if __name__ == "__main__":
    key = jax.random.PRNGKey(0)
    img = jax.random.uniform(
        key, (2, 3, cfg.input_img_shape[0], cfg.input_img_shape[1]), jnp.float32
    )
    params = init_params()
    prep = prepare_params(params, batch=2)

    fwd = jax.jit(lambda im: model_forward(prep, im))
    param, aux = fwd(img)
    jax.block_until_ready((param, aux))

    assert param["root_pose"].shape == (2, 3)
    assert param["body_pose"].shape == (2, BODY_POSE_JOINTS * 3)
    assert param["lhand_pose"].shape == (2, HAND_POSE_JOINTS * 3)
    assert param["rhand_pose"].shape == (2, HAND_POSE_JOINTS * 3)
    assert param["jaw_pose"].shape == (2, 3)
    assert param["shape"].shape == (2, SHAPE_DIM)
    assert param["expr"].shape == (2, EXPR_DIM)
    assert aux["cam_trans"].shape == (2, 3)
    assert aux["lhand_bbox"].shape == (2, 4)
    assert aux["joint_img"].shape == (2, J_BODY + 2 * J_HAND, 3)
    assert bool(jnp.all(jnp.isfinite(param["body_pose"])))
    assert bool(jnp.all(jnp.isfinite(param["lhand_pose"])))
    assert bool(jnp.all(jnp.isfinite(aux["cam_trans"])))
    print("KERNEL_OK")
</pallas_src>

<mosaic_0001>
module attributes {stable_mosaic.version = 11 : i64} {
  func.func @_enc_body_kernel(%arg0: memref<128x12xf32, #tpu.memory_space<vmem>>, %arg1: memref<6x128xf32, #tpu.memory_space<vmem>>, %arg2: memref<64x16xf32, #tpu.memory_space<vmem>>, %arg3: memref<12x32xf32, #tpu.memory_space<vmem>>, %arg4: memref<1x32xf32, #tpu.memory_space<vmem>>, %arg5: memref<32x448xf32, #tpu.memory_space<vmem>>, %arg6: memref<1x448xf32, #tpu.memory_space<vmem>>, %arg7: memref<32x64xf32, #tpu.memory_space<vmem>>, %arg8: memref<1x64xf32, #tpu.memory_space<vmem>>, %arg9: memref<256x126xf32, #tpu.memory_space<vmem>>, %arg10: memref<8x126xf32, #tpu.memory_space<vmem>>, %arg11: memref<8x126xf32, #tpu.memory_space<vmem>>, %arg12: memref<8x126xf32, #tpu.memory_space<vmem>>, %arg13: memref<1x126xf32, #tpu.memory_space<vmem>>, %arg14: memref<32x10xf32, #tpu.memory_space<vmem>>, %arg15: memref<1x10xf32, #tpu.memory_space<vmem>>, %arg16: memref<32x3xf32, #tpu.memory_space<vmem>>, %arg17: memref<1x3xf32, #tpu.memory_space<vmem>>, %arg18: memref<32x12xf32, #tpu.memory_space<vmem>>, %arg19: memref<8x12xf32, #tpu.memory_space<vmem>>, %arg20: memref<1x12xf32, #tpu.memory_space<vmem>>, %arg21: memref<128x32xf32, #tpu.memory_space<vmem>>, %arg22: memref<2x24xf32, #tpu.memory_space<vmem>>, %arg23: memref<2x126xf32, #tpu.memory_space<vmem>>, %arg24: memref<2x10xf32, #tpu.memory_space<vmem>>, %arg25: memref<2x3xf32, #tpu.memory_space<vmem>>, %arg26: memref<2x12xf32, #tpu.memory_space<vmem>>) attributes {dimension_semantics = [], scalar_prefetch = 0 : i64, scratch_operands = 0 : i64, tpu.core_type = #tpu.core_type<tc>} {
    %c0 = arith.constant 0 : index
    %c0_0 = arith.constant 0 : index
    %0 = vector.load %arg0[%c0, %c0_0] : memref<128x12xf32, #tpu.memory_space<vmem>>, vector<128x12xf32>
    %c0_1 = arith.constant 0 : index
    %c0_2 = arith.constant 0 : index
    %1 = vector.load %arg3[%c0_1, %c0_2] : memref<12x32xf32, #tpu.memory_space<vmem>>, vector<12x32xf32>
    %cst = arith.constant dense<0.000000e+00> : vector<128x32xf32>
    %2 = tpu.matmul %0, %1, %cst {dimension_numbers = #tpu.dot_dimension_numbers<[1], [0], [0], [1], [0, 0, 1, 1], [], []>} : vector<128x12xf32>, vector<12x32xf32>, vector<128x32xf32> -> vector<128x32xf32>
    %c0_3 = arith.constant 0 : index
    %c0_4 = arith.constant 0 : index
    %3 = vector.load %arg4[%c0_3, %c0_4] : memref<1x32xf32, #tpu.memory_space<vmem>>, vector<1x32xf32>
    %4 = vector.broadcast %3 : vector<1x32xf32> to vector<128x32xf32>
    %5 = arith.addf %2, %4 : vector<128x32xf32>
    %c0_5 = arith.constant 0 : index
    %c0_6 = arith.constant 0 : index
    %6 = vector.load %arg21[%c0_5, %c0_6] : memref<128x32xf32, #tpu.memory_space<vmem>>, vector<128x32xf32>
    tpu.vector_store %arg21[%c0_5, %c0_6], %5 {strides = array<i32>} : memref<128x32xf32, #tpu.memory_space<vmem>>, vector<128x32xf32>,
    %c0_7 = arith.constant 0 : index
    %c0_8 = arith.constant 0 : index
    %7 = vector.load %arg1[%c0_7, %c0_8] : memref<6x128xf32, #tpu.memory_space<vmem>>, vector<6x128xf32>
    %c0_9 = arith.constant 0 : index
    %c0_10 = arith.constant 0 : index
    %8 = vector.load %arg2[%c0_9, %c0_10] : memref<64x16xf32, #tpu.memory_space<vmem>>, vector<64x16xf32>
    %c0_11 = arith.constant 0 : index
    %c0_12 = arith.constant 0 : index
    %9 = vector.load %arg7[%c0_11, %c0_12] : memref<32x64xf32, #tpu.memory_space<vmem>>, vector<32x64xf32>
    %c0_13 = arith.constant 0 : index
    %c0_14 = arith.constant 0 : index
    %10 = vector.load %arg8[%c0_13, %c0_14] : memref<1x64xf32, #tpu.memory_space<vmem>>, vector<1x64xf32>
    %11 = vector.extract_strided_slice %7 {offsets = [0, 0], sizes = [2, 128], strides = [1, 1]} : vector<6x128xf32> to vector<2x128xf32>
    %cst_15 = arith.constant dense<0.000000e+00> : vector<2x32xf32>
    %12 = tpu.matmul %11, %5, %cst_15 {dimension_numbers = #tpu.dot_dimension_numbers<[1], [0], [0], [1], [0, 0, 1, 1], [], []>} : vector<2x128xf32>, vector<128x32xf32>, vector<2x32xf32> -> vector<2x32xf32>
    %cst_16 = arith.constant 1.562500e-02 : f32
    %13 = vector.broadcast %cst_16 : f32 to vector<2x32xf32>
    %14 = arith.mulf %12, %13 : vector<2x32xf32>
    %cst_17 = arith.constant dense<0.000000e+00> : vector<128x64xf32>
    %15 = tpu.matmul %5, %9, %cst_17 {dimension_numbers = #tpu.dot_dimension_numbers<[1], [0], [0], [1], [0, 0, 1, 1], [], []>} : vector<128x32xf32>, vector<32x64xf32>, vector<128x64xf32> -> vector<128x64xf32>
    %16 = vector.broadcast %10 : vector<1x64xf32> to vector<128x64xf32>
    %17 = arith.addf %15, %16 : vector<128x64xf32>
    %cst_18 = arith.constant dense<0xFF800000> : vector<128xf32>
    %18 = vector.multi_reduction <maximumf>, %17, %cst_18 [1] : vector<128x64xf32> to vector<128xf32>
    %19 = vector.shape_cast %18 : vector<128xf32> to vector<128x1xf32>
    %cst_19 = arith.constant dense<0xFF800000> : vector<1xf32>
    %20 = vector.multi_reduction <maximumf>, %19, %cst_19 [0] : vector<128x1xf32> to vector<1xf32>
    %21 = vector.shape_cast %20 : vector<1xf32> to vector<1x1xf32>
    %22 = vector.broadcast %21 : vector<1x1xf32> to vector<128x64xf32>
    %23 = arith.subf %17, %22 : vector<128x64xf32>
    %24 = math.exp %23 : vector<128x64xf32>
    %cst_20 = arith.constant dense<0.000000e+00> : vector<6x64xf32>
    %25 = tpu.matmul %7, %24, %cst_20 {dimension_numbers = #tpu.dot_dimension_numbers<[1], [0], [0], [1], [0, 0, 1, 1], [], []>} : vector<6x128xf32>, vector<128x64xf32>, vector<6x64xf32> -> vector<6x64xf32>
    %cst_21 = arith.constant dense<0.000000e+00> : vector<6x16xf32>
    %26 = tpu.matmul %25, %8, %cst_21 {dimension_numbers = #tpu.dot_dimension_numbers<[1], [0], [0], [1], [0, 0, 1, 1], [], []>} : vector<6x64xf32>, vector<64x16xf32>, vector<6x16xf32> -> vector<6x16xf32>
    %27 = vector.extract_strided_slice %26 {offsets = [0, 0], sizes = [2, 8], strides = [1, 1]} : vector<6x16xf32> to vector<2x8xf32>
    %cst_22 = arith.constant 1.000000e+00 : f32
    %28 = vector.broadcast %cst_22 : f32 to vector<2x8xf32>
    %29 = arith.divf %28, %27 : vector<2x8xf32>
    %30 = vector.extract_strided_slice %26 {offsets = [0, 8], sizes = [2, 8], strides = [1, 1]} : vector<6x16xf32> to vector<2x8xf32>
    %31 = arith.mulf %30, %29 : vector<2x8xf32>
    %32 = vector.extract_strided_slice %26 {offsets = [2, 0], sizes = [2, 8], strides = [1, 1]} : vector<6x16xf32> to vector<2x8xf32>
    %33 = arith.mulf %32, %29 : vector<2x8xf32>
    %34 = vector.extract_strided_slice %26 {offsets = [4, 0], sizes = [2, 8], strides = [1, 1]} : vector<6x16xf32> to vector<2x8xf32>
    %35 = arith.mulf %34, %29 : vector<2x8xf32>
    %c0_23 = arith.constant 0 : index
    %c0_24 = arith.constant 0 : index
    %36 = vector.load %arg5[%c0_23, %c0_24] : memref<32x448xf32, #tpu.memory_space<vmem>>, vector<32x448xf32>
    %cst_25 = arith.constant dense<0.000000e+00> : vector<2x448xf32>
    %37 = tpu.matmul %14, %36, %cst_25 {dimension_numbers = #tpu.dot_dimension_numbers<[1], [0], [0], [1], [0, 0, 1, 1], [], []>} : vector<2x32xf32>, vector<32x448xf32>, vector<2x448xf32> -> vector<2x448xf32>
    %c0_26 = arith.constant 0 : index
    %c0_27 = arith.constant 0 : index
    %38 = vector.load %arg6[%c0_26, %c0_27] : memref<1x448xf32, #tpu.memory_space<vmem>>, vector<1x448xf32>
    %39 = vector.broadcast %38 : vector<1x448xf32> to vector<2x448xf32>
    %40 = arith.addf %37, %39 : vector<2x448xf32>
    %41 = vector.extract_strided_slice %40 {offsets = [0, 0], sizes = [2, 32], strides = [1, 1]} : vector<2x448xf32> to vector<2x32xf32>
    %42 = vector.extract_strided_slice %40 {offsets = [0, 32], sizes = [2, 32], strides = [1, 1]} : vector<2x448xf32> to vector<2x32xf32>
    %43 = vector.extract_strided_slice %40 {offsets = [0, 192], sizes = [2, 256], strides = [1, 1]} : vector<2x448xf32> to vector<2x256xf32>
    %44 = tpu.concatenate %33, %35, %31 in 1 : vector<2x8xf32>, vector<2x8xf32>, vector<2x8xf32> -> vector<2x24xf32>
    %c0_28 = arith.constant 0 : index
    %c0_29 = arith.constant 0 : index
    %45 = vector.load %arg22[%c0_28, %c0_29] : memref<2x24xf32, #tpu.memory_space<vmem>>, vector<2x24xf32>
    tpu.vector_store %arg22[%c0_28, %c0_29], %44 {strides = array<i32>} : memref<2x24xf32, #tpu.memory_space<vmem>>, vector<2x24xf32>,
    %46 = vector.extract_strided_slice %7 {offsets = [0, 0], sizes = [2, 128], strides = [1, 1]} : vector<6x128xf32> to vector<2x128xf32>
    %cst_30 = arith.constant dense<0.000000e+00> : vector<2x64xf32>
    %47 = tpu.matmul %46, %17, %cst_30 {dimension_numbers = #tpu.dot_dimension_numbers<[1], [0], [0], [1], [0, 0, 1, 1], [], []>} : vector<2x128xf32>, vector<128x64xf32>, vector<2x64xf32> -> vector<2x64xf32>
    %c0_31 = arith.constant 0 : index
    %c0_32 = arith.constant 0 : index
    %48 = vector.load %arg2[%c0_31, %c0_32] : memref<64x16xf32, #tpu.memory_space<vmem>>, vector<64x16xf32>
    %cst_33 = arith.constant dense<0.000000e+00> : vector<2x16xf32>
    %49 = tpu.matmul %47, %48, %cst_33 {dimension_numbers = #tpu.dot_dimension_numbers<[1], [0], [0], [1], [0, 0, 1, 1], [], []>} : vector<2x64xf32>, vector<64x16xf32>, vector<2x16xf32> -> vector<2x16xf32>
    %50 = vector.extract_strided_slice %49 {offsets = [0, 0], sizes = [2, 8], strides = [1, 1]} : vector<2x16xf32> to vector<2x8xf32>
    %cst_34 = arith.constant 0.001953125 : f32
    %51 = vector.broadcast %cst_34 : f32 to vector<2x8xf32>
    %52 = arith.mulf %50, %51 : vector<2x8xf32>
    %c0_35 = arith.constant 0 : index
    %c0_36 = arith.constant 0 : index
    %53 = vector.load %arg9[%c0_35, %c0_36] : memref<256x126xf32, #tpu.memory_space<vmem>>, vector<256x126xf32>
    %cst_37 = arith.constant dense<0.000000e+00> : vector<2x126xf32>
    %54 = tpu.matmul %43, %53, %cst_37 {dimension_numbers = #tpu.dot_dimension_numbers<[1], [0], [0], [1], [0, 0, 1, 1], [], []>} : vector<2x256xf32>, vector<256x126xf32>, vector<2x126xf32> -> vector<2x126xf32>
    %c0_38 = arith.constant 0 : index
    %c0_39 = arith.constant 0 : index
    %55 = vector.load %arg10[%c0_38, %c0_39] : memref<8x126xf32, #tpu.memory_space<vmem>>, vector<8x126xf32>
    %cst_40 = arith.constant dense<0.000000e+00> : vector<2x126xf32>
    %56 = tpu.matmul %33, %55, %cst_40 {dimension_numbers = #tpu.dot_dimension_numbers<[1], [0], [0], [1], [0, 0, 1, 1], [], []>} : vector<2x8xf32>, vector<8x126xf32>, vector<2x126xf32> -> vector<2x126xf32>
    %57 = arith.addf %54, %56 : vector<2x126xf32>
    %c0_41 = arith.constant 0 : index
    %c0_42 = arith.constant 0 : index
    %58 = vector.load %arg11[%c0_41, %c0_42] : memref<8x126xf32, #tpu.memory_space<vmem>>, vector<8x126xf32>
    %cst_43 = arith.constant dense<0.000000e+00> : vector<2x126xf32>
    %59 = tpu.matmul %35, %58, %cst_43 {dimension_numbers = #tpu.dot_dimension_numbers<[1], [0], [0], [1], [0, 0, 1, 1], [], []>} : vector<2x8xf32>, vector<8x126xf32>, vector<2x126xf32> -> vector<2x126xf32>
    %60 = arith.addf %57, %59 : vector<2x126xf32>
    %c0_44 = arith.constant 0 : index
    %c0_45 = arith.constant 0 : index
    %61 = vector.load %arg12[%c0_44, %c0_45] : memref<8x126xf32, #tpu.memory_space<vmem>>, vector<8x126xf32>
    %cst_46 = arith.constant dense<0.000000e+00> : vector<2x126xf32>
    %62 = tpu.matmul %31, %61, %cst_46 {dimension_numbers = #tpu.dot_dimension_numbers<[1], [0], [0], [1], [0, 0, 1, 1], [], []>} : vector<2x8xf32>, vector<8x126xf32>, vector<2x126xf32> -> vector<2x126xf32>
    %63 = arith.addf %60, %62 : vector<2x126xf32>
    %c0_47 = arith.constant 0 : index
    %c0_48 = arith.constant 0 : index
    %64 = vector.load %arg13[%c0_47, %c0_48] : memref<1x126xf32, #tpu.memory_space<vmem>>, vector<1x126xf32>
    %65 = vector.broadcast %64 : vector<1x126xf32> to vector<2x126xf32>
    %66 = arith.addf %63, %65 : vector<2x126xf32>
    %c0_49 = arith.constant 0 : index
    %c0_50 = arith.constant 0 : index
    %67 = vector.load %arg23[%c0_49, %c0_50] : memref<2x126xf32, #tpu.memory_space<vmem>>, vector<2x126xf32>
    tpu.vector_store %arg23[%c0_49, %c0_50], %66 {strides = array<i32>} : memref<2x126xf32, #tpu.memory_space<vmem>>, vector<2x126xf32>,
    %c0_51 = arith.constant 0 : index
    %c0_52 = arith.constant 0 : index
    %68 = vector.load %arg14[%c0_51, %c0_52] : memref<32x10xf32, #tpu.memory_space<vmem>>, vector<32x10xf32>
    %cst_53 = arith.constant dense<0.000000e+00> : vector<2x10xf32>
    %69 = tpu.matmul %41, %68, %cst_53 {dimension_numbers = #tpu.dot_dimension_numbers<[1], [0], [0], [1], [0, 0, 1, 1], [], []>} : vector<2x32xf32>, vector<32x10xf32>, vector<2x10xf32> -> vector<2x10xf32>
    %c0_54 = arith.constant 0 : index
    %c0_55 = arith.constant 0 : index
    %70 = vector.load %arg15[%c0_54, %c0_55] : memref<1x10xf32, #tpu.memory_space<vmem>>, vector<1x10xf32>
    %71 = vector.broadcast %70 : vector<1x10xf32> to vector<2x10xf32>
    %72 = arith.addf %69, %71 : vector<2x10xf32>
    %c0_56 = arith.constant 0 : index
    %c0_57 = arith.constant 0 : index
    %73 = vector.load %arg24[%c0_56, %c0_57] : memref<2x10xf32, #tpu.memory_space<vmem>>, vector<2x10xf32>
    tpu.vector_store %arg24[%c0_56, %c0_57], %72 {strides = array<i32>} : memref<2x10xf32, #tpu.memory_space<vmem>>, vector<2x10xf32>,
    %c0_58 = arith.constant 0 : index
    %c0_59 = arith.constant 0 : index
    %74 = vector.load %arg16[%c0_58, %c0_59] : memref<32x3xf32, #tpu.memory_space<vmem>>, vector<32x3xf32>
    %cst_60 = arith.constant dense<0.000000e+00> : vector<2x3xf32>
    %75 = tpu.matmul %42, %74, %cst_60 {dimension_numbers = #tpu.dot_dimension_numbers<[1], [0], [0], [1], [0, 0, 1, 1], [], []>} : vector<2x32xf32>, vector<32x3xf32>, vector<2x3xf32> -> vector<2x3xf32>
    %c0_61 = arith.constant 0 : index
    %c0_62 = arith.constant 0 : index
    %76 = vector.load %arg17[%c0_61, %c0_62] : memref<1x3xf32, #tpu.memory_space<vmem>>, vector<1x3xf32>
    %77 = vector.broadcast %76 : vector<1x3xf32> to vector<2x3xf32>
    %78 = arith.addf %75, %77 : vector<2x3xf32>
    %79 = vector.extract_strided_slice %78 {offsets = [0, 2], sizes = [2, 1], strides = [1, 1]} : vector<2x3xf32> to vector<2x1xf32>
    %cst_63 = arith.constant 0.000000e+00 : f32
    %80 = vector.broadcast %cst_63 : f32 to vector<2x1xf32>
    %81 = arith.subf %80, %79 : vector<2x1xf32>
    %82 = math.exp %81 : vector<2x1xf32>
    %cst_64 = arith.constant 1.000000e+00 : f32
    %83 = vector.broadcast %cst_64 : f32 to vector<2x1xf32>
    %84 = arith.addf %83, %82 : vector<2x1xf32>
    %cst_65 = arith.constant 1.000000e+00 : f32
    %85 = vector.broadcast %cst_65 : f32 to vector<2x1xf32>
    %86 = arith.divf %85, %84 : vector<2x1xf32>
    %87 = vector.extract_strided_slice %78 {offsets = [0, 0], sizes = [2, 2], strides = [1, 1]} : vector<2x3xf32> to vector<2x2xf32>
    %cst_66 = arith.constant 7.812500e+02 : f32
    %88 = vector.broadcast %cst_66 : f32 to vector<2x1xf32>
    %89 = arith.mulf %88, %86 : vector<2x1xf32>
    %90 = tpu.concatenate %87, %89 in 1 : vector<2x2xf32>, vector<2x1xf32> -> vector<2x3xf32>
    %c0_67 = arith.constant 0 : index
    %c0_68 = arith.constant 0 : index
    %91 = vector.load %arg25[%c0_67, %c0_68] : memref<2x3xf32, #tpu.memory_space<vmem>>, vector<2x3xf32>
    tpu.vector_store %arg25[%c0_67, %c0_68], %90 {strides = array<i32>} : memref<2x3xf32, #tpu.memory_space<vmem>>, vector<2x3xf32>,
    %c0_69 = arith.constant 0 : index
    %c0_70 = arith.constant 0 : index
    %92 = vector.load %arg18[%c0_69, %c0_70] : memref<32x12xf32, #tpu.memory_space<vmem>>, vector<32x12xf32>
    %cst_71 = arith.constant dense<0.000000e+00> : vector<2x12xf32>
    %93 = tpu.matmul %14, %92, %cst_71 {dimension_numbers = #tpu.dot_dimension_numbers<[1], [0], [0], [1], [0, 0, 1, 1], [], []>} : vector<2x32xf32>, vector<32x12xf32>, vector<2x12xf32> -> vector<2x12xf32>
    %c0_72 = arith.constant 0 : index
    %c0_73 = arith.constant 0 : index
    %94 = vector.load %arg19[%c0_72, %c0_73] : memref<8x12xf32, #tpu.memory_space<vmem>>, vector<8x12xf32>
    %cst_74 = arith.constant dense<0.000000e+00> : vector<2x12xf32>
    %95 = tpu.matmul %52, %94, %cst_74 {dimension_numbers = #tpu.dot_dimension_numbers<[1], [0], [0], [1], [0, 0, 1, 1], [], []>} : vector<2x8xf32>, vector<8x12xf32>, vector<2x12xf32> -> vector<2x12xf32>
    %96 = arith.addf %93, %95 : vector<2x12xf32>
    %c0_75 = arith.constant 0 : index
    %c0_76 = arith.constant 0 : index
    %97 = vector.load %arg20[%c0_75, %c0_76] : memref<1x12xf32, #tpu.memory_space<vmem>>, vector<1x12xf32>
    %98 = vector.broadcast %97 : vector<1x12xf32> to vector<2x12xf32>
    %99 = arith.addf %96, %98 : vector<2x12xf32>
    %cst_77 = arith.constant 0.000000e+00 : f32
    %100 = vector.broadcast %cst_77 : f32 to vector<2x12xf32>
    %101 = arith.subf %100, %99 : vector<2x12xf32>
    %102 = math.exp %101 : vector<2x12xf32>
    %cst_78 = arith.constant 1.000000e+00 : f32
    %103 = vector.broadcast %cst_78 : f32 to vector<2x12xf32>
    %104 = arith.addf %103, %102 : vector<2x12xf32>
    %cst_79 = arith.constant 1.000000e+00 : f32
    %105 = vector.broadcast %cst_79 : f32 to vector<2x12xf32>
    %106 = arith.divf %105, %104 : vector<2x12xf32>
    %c0_80 = arith.constant 0 : index
    %c0_81 = arith.constant 0 : index
    %107 = vector.load %arg26[%c0_80, %c0_81] : memref<2x12xf32, #tpu.memory_space<vmem>>, vector<2x12xf32>
    tpu.vector_store %arg26[%c0_80, %c0_81], %106 {strides = array<i32>} : memref<2x12xf32, #tpu.memory_space<vmem>>, vector<2x12xf32>,
    return
  }
}

module attributes {stable_mosaic.version = 11 : i64} {
  func.func @_hand_kernel(%arg0: memref<256x32xf32, #tpu.memory_space<vmem>>, %arg1: memref<12x256xf32, #tpu.memory_space<vmem>>, %arg2: memref<64x16xf32, #tpu.memory_space<vmem>>, %arg3: memref<32x64xf32, #tpu.memory_space<vmem>>, %arg4: memref<1x64xf32, #tpu.memory_space<vmem>>, %arg5: memref<32x256xf32, #tpu.memory_space<vmem>>, %arg6: memref<1x256xf32, #tpu.memory_space<vmem>>, %arg7: memref<8x256xf32, #tpu.memory_space<vmem>>, %arg8: memref<8x256xf32, #tpu.memory_space<vmem>>, %arg9: memref<8x256xf32, #tpu.memory_space<vmem>>, %arg10: memref<256x90xf32, #tpu.memory_space<vmem>>, %arg11: memref<8x90xf32, #tpu.memory_space<vmem>>, %arg12: memref<8x90xf32, #tpu.memory_space<vmem>>, %arg13: memref<8x90xf32, #tpu.memory_space<vmem>>, %arg14: memref<1x90xf32, #tpu.memory_space<vmem>>, %arg15: memref<4x24xf32, #tpu.memory_space<vmem>>, %arg16: memref<4x90xf32, #tpu.memory_space<vmem>>) attributes {dimension_semantics = [], scalar_prefetch = 0 : i64, scratch_operands = 0 : i64, tpu.core_type = #tpu.core_type<tc>} {
    %c0 = arith.constant 0 : index
    %c0_0 = arith.constant 0 : index
    %0 = vector.load %arg0[%c0, %c0_0] : memref<256x32xf32, #tpu.memory_space<vmem>>, vector<256x32xf32>
    %c0_1 = arith.constant 0 : index
    %c0_2 = arith.constant 0 : index
    %1 = vector.load %arg1[%c0_1, %c0_2] : memref<12x256xf32, #tpu.memory_space<vmem>>, vector<12x256xf32>
    %c0_3 = arith.constant 0 : index
    %c0_4 = arith.constant 0 : index
    %2 = vector.load %arg2[%c0_3, %c0_4] : memref<64x16xf32, #tpu.memory_space<vmem>>, vector<64x16xf32>
    %c0_5 = arith.constant 0 : index
    %c0_6 = arith.constant 0 : index
    %3 = vector.load %arg3[%c0_5, %c0_6] : memref<32x64xf32, #tpu.memory_space<vmem>>, vector<32x64xf32>
    %c0_7 = arith.constant 0 : index
    %c0_8 = arith.constant 0 : index
    %4 = vector.load %arg4[%c0_7, %c0_8] : memref<1x64xf32, #tpu.memory_space<vmem>>, vector<1x64xf32>
    %5 = vector.extract_strided_slice %1 {offsets = [0, 0], sizes = [4, 256], strides = [1, 1]} : vector<12x256xf32> to vector<4x256xf32>
    %cst = arith.constant dense<0.000000e+00> : vector<4x32xf32>
    %6 = tpu.matmul %5, %0, %cst {dimension_numbers = #tpu.dot_dimension_numbers<[1], [0], [0], [1], [0, 0, 1, 1], [], []>} : vector<4x256xf32>, vector<256x32xf32>, vector<4x32xf32> -> vector<4x32xf32>
    %cst_9 = arith.constant 1.562500e-02 : f32
    %7 = vector.broadcast %cst_9 : f32 to vector<4x32xf32>
    %8 = arith.mulf %6, %7 : vector<4x32xf32>
    %cst_10 = arith.constant dense<0.000000e+00> : vector<256x64xf32>
    %9 = tpu.matmul %0, %3, %cst_10 {dimension_numbers = #tpu.dot_dimension_numbers<[1], [0], [0], [1], [0, 0, 1, 1], [], []>} : vector<256x32xf32>, vector<32x64xf32>, vector<256x64xf32> -> vector<256x64xf32>
    %10 = vector.broadcast %4 : vector<1x64xf32> to vector<256x64xf32>
    %11 = arith.addf %9, %10 : vector<256x64xf32>
    %cst_11 = arith.constant dense<0xFF800000> : vector<256xf32>
    %12 = vector.multi_reduction <maximumf>, %11, %cst_11 [1] : vector<256x64xf32> to vector<256xf32>
    %13 = vector.shape_cast %12 : vector<256xf32> to vector<256x1xf32>
    %cst_12 = arith.constant dense<0xFF800000> : vector<1xf32>
    %14 = vector.multi_reduction <maximumf>, %13, %cst_12 [0] : vector<256x1xf32> to vector<1xf32>
    %15 = vector.shape_cast %14 : vector<1xf32> to vector<1x1xf32>
    %16 = vector.broadcast %15 : vector<1x1xf32> to vector<256x64xf32>
    %17 = arith.subf %11, %16 : vector<256x64xf32>
    %18 = math.exp %17 : vector<256x64xf32>
    %cst_13 = arith.constant dense<0.000000e+00> : vector<12x64xf32>
    %19 = tpu.matmul %1, %18, %cst_13 {dimension_numbers = #tpu.dot_dimension_numbers<[1], [0], [0], [1], [0, 0, 1, 1], [], []>} : vector<12x256xf32>, vector<256x64xf32>, vector<12x64xf32> -> vector<12x64xf32>
    %cst_14 = arith.constant dense<0.000000e+00> : vector<12x16xf32>
    %20 = tpu.matmul %19, %2, %cst_14 {dimension_numbers = #tpu.dot_dimension_numbers<[1], [0], [0], [1], [0, 0, 1, 1], [], []>} : vector<12x64xf32>, vector<64x16xf32>, vector<12x16xf32> -> vector<12x16xf32>
    %21 = vector.extract_strided_slice %20 {offsets = [0, 0], sizes = [4, 8], strides = [1, 1]} : vector<12x16xf32> to vector<4x8xf32>
    %cst_15 = arith.constant 1.000000e+00 : f32
    %22 = vector.broadcast %cst_15 : f32 to vector<4x8xf32>
    %23 = arith.divf %22, %21 : vector<4x8xf32>
    %24 = vector.extract_strided_slice %20 {offsets = [0, 8], sizes = [4, 8], strides = [1, 1]} : vector<12x16xf32> to vector<4x8xf32>
    %25 = arith.mulf %24, %23 : vector<4x8xf32>
    %26 = vector.extract_strided_slice %20 {offsets = [4, 0], sizes = [4, 8], strides = [1, 1]} : vector<12x16xf32> to vector<4x8xf32>
    %27 = arith.mulf %26, %23 : vector<4x8xf32>
    %28 = vector.extract_strided_slice %20 {offsets = [8, 0], sizes = [4, 8], strides = [1, 1]} : vector<12x16xf32> to vector<4x8xf32>
    %29 = arith.mulf %28, %23 : vector<4x8xf32>
    %c0_16 = arith.constant 0 : index
    %c0_17 = arith.constant 0 : index
    %30 = vector.load %arg5[%c0_16, %c0_17] : memref<32x256xf32, #tpu.memory_space<vmem>>, vector<32x256xf32>
    %cst_18 = arith.constant dense<0.000000e+00> : vector<4x256xf32>
    %31 = tpu.matmul %8, %30, %cst_18 {dimension_numbers = #tpu.dot_dimension_numbers<[1], [0], [0], [1], [0, 0, 1, 1], [], []>} : vector<4x32xf32>, vector<32x256xf32>, vector<4x256xf32> -> vector<4x256xf32>
    %c0_19 = arith.constant 0 : index
    %c0_20 = arith.constant 0 : index
    %32 = vector.load %arg6[%c0_19, %c0_20] : memref<1x256xf32, #tpu.memory_space<vmem>>, vector<1x256xf32>
    %33 = vector.broadcast %32 : vector<1x256xf32> to vector<4x256xf32>
    %34 = arith.addf %31, %33 : vector<4x256xf32>
    %c0_21 = arith.constant 0 : index
    %c0_22 = arith.constant 0 : index
    %35 = vector.load %arg7[%c0_21, %c0_22] : memref<8x256xf32, #tpu.memory_space<vmem>>, vector<8x256xf32>
    %cst_23 = arith.constant dense<0.000000e+00> : vector<4x256xf32>
    %36 = tpu.matmul %27, %35, %cst_23 {dimension_numbers = #tpu.dot_dimension_numbers<[1], [0], [0], [1], [0, 0, 1, 1], [], []>} : vector<4x8xf32>, vector<8x256xf32>, vector<4x256xf32> -> vector<4x256xf32>
    %37 = arith.addf %34, %36 : vector<4x256xf32>
    %c0_24 = arith.constant 0 : index
    %c0_25 = arith.constant 0 : index
    %38 = vector.load %arg8[%c0_24, %c0_25] : memref<8x256xf32, #tpu.memory_space<vmem>>, vector<8x256xf32>
    %cst_26 = arith.constant dense<0.000000e+00> : vector<4x256xf32>
    %39 = tpu.matmul %29, %38, %cst_26 {dimension_numbers = #tpu.dot_dimension_numbers<[1], [0], [0], [1], [0, 0, 1, 1], [], []>} : vector<4x8xf32>, vector<8x256xf32>, vector<4x256xf32> -> vector<4x256xf32>
    %40 = arith.addf %37, %39 : vector<4x256xf32>
    %c0_27 = arith.constant 0 : index
    %c0_28 = arith.constant 0 : index
    %41 = vector.load %arg9[%c0_27, %c0_28] : memref<8x256xf32, #tpu.memory_space<vmem>>, vector<8x256xf32>
    %cst_29 = arith.constant dense<0.000000e+00> : vector<4x256xf32>
    %42 = tpu.matmul %25, %41, %cst_29 {dimension_numbers = #tpu.dot_dimension_numbers<[1], [0], [0], [1], [0, 0, 1, 1], [], []>} : vector<4x8xf32>, vector<8x256xf32>, vector<4x256xf32> -> vector<4x256xf32>
    %43 = arith.addf %40, %42 : vector<4x256xf32>
    %44 = tpu.concatenate %27, %29, %25 in 1 : vector<4x8xf32>, vector<4x8xf32>, vector<4x8xf32> -> vector<4x24xf32>
    %c0_30 = arith.constant 0 : index
    %c0_31 = arith.constant 0 : index
    %45 = vector.load %arg15[%c0_30, %c0_31] : memref<4x24xf32, #tpu.memory_space<vmem>>, vector<4x24xf32>
    tpu.vector_store %arg15[%c0_30, %c0_31], %44 {strides = array<i32>} : memref<4x24xf32, #tpu.memory_space<vmem>>, vector<4x24xf32>,
    %c0_32 = arith.constant 0 : index
    %c0_33 = arith.constant 0 : index
    %46 = vector.load %arg10[%c0_32, %c0_33] : memref<256x90xf32, #tpu.memory_space<vmem>>, vector<256x90xf32>
    %cst_34 = arith.constant dense<0.000000e+00> : vector<4x90xf32>
    %47 = tpu.matmul %43, %46, %cst_34 {dimension_numbers = #tpu.dot_dimension_numbers<[1], [0], [0], [1], [0, 0, 1, 1], [], []>} : vector<4x256xf32>, vector<256x90xf32>, vector<4x90xf32> -> vector<4x90xf32>
    %c0_35 = arith.constant 0 : index
    %c0_36 = arith.constant 0 : index
    %48 = vector.load %arg11[%c0_35, %c0_36] : memref<8x90xf32, #tpu.memory_space<vmem>>, vector<8x90xf32>
    %cst_37 = arith.constant dense<0.000000e+00> : vector<4x90xf32>
    %49 = tpu.matmul %27, %48, %cst_37 {dimension_numbers = #tpu.dot_dimension_numbers<[1], [0], [0], [1], [0, 0, 1, 1], [], []>} : vector<4x8xf32>, vector<8x90xf32>, vector<4x90xf32> -> vector<4x90xf32>
    %50 = arith.addf %47, %49 : vector<4x90xf32>
    %c0_38 = arith.constant 0 : index
    %c0_39 = arith.constant 0 : index
    %51 = vector.load %arg12[%c0_38, %c0_39] : memref<8x90xf32, #tpu.memory_space<vmem>>, vector<8x90xf32>
    %cst_40 = arith.constant dense<0.000000e+00> : vector<4x90xf32>
    %52 = tpu.matmul %29, %51, %cst_40 {dimension_numbers = #tpu.dot_dimension_numbers<[1], [0], [0], [1], [0, 0, 1, 1], [], []>} : vector<4x8xf32>, vector<8x90xf32>, vector<4x90xf32> -> vector<4x90xf32>
    %53 = arith.addf %50, %52 : vector<4x90xf32>
    %c0_41 = arith.constant 0 : index
    %c0_42 = arith.constant 0 : index
    %54 = vector.load %arg13[%c0_41, %c0_42] : memref<8x90xf32, #tpu.memory_space<vmem>>, vector<8x90xf32>
    %cst_43 = arith.constant dense<0.000000e+00> : vector<4x90xf32>
    %55 = tpu.matmul %25, %54, %cst_43 {dimension_numbers = #tpu.dot_dimension_numbers<[1], [0], [0], [1], [0, 0, 1, 1], [], []>} : vector<4x8xf32>, vector<8x90xf32>, vector<4x90xf32> -> vector<4x90xf32>
    %56 = arith.addf %53, %55 : vector<4x90xf32>
    %c0_44 = arith.constant 0 : index
    %c0_45 = arith.constant 0 : index
    %57 = vector.load %arg14[%c0_44, %c0_45] : memref<1x90xf32, #tpu.memory_space<vmem>>, vector<1x90xf32>
    %58 = vector.broadcast %57 : vector<1x90xf32> to vector<4x90xf32>
    %59 = arith.addf %56, %58 : vector<4x90xf32>
    %c0_46 = arith.constant 0 : index
    %c0_47 = arith.constant 0 : index
    %60 = vector.load %arg16[%c0_46, %c0_47] : memref<4x90xf32, #tpu.memory_space<vmem>>, vector<4x90xf32>
    tpu.vector_store %arg16[%c0_46, %c0_47], %59 {strides = array<i32>} : memref<4x90xf32, #tpu.memory_space<vmem>>, vector<4x90xf32>,
    return
  }
}

module attributes {stable_mosaic.version = 11 : i64} {
  func.func @_face_kernel(%arg0: memref<128x32xf32, #tpu.memory_space<vmem>>, %arg1: memref<6x128xf32, #tpu.memory_space<vmem>>, %arg2: memref<64x16xf32, #tpu.memory_space<vmem>>, %arg3: memref<32x64xf32, #tpu.memory_space<vmem>>, %arg4: memref<1x64xf32, #tpu.memory_space<vmem>>, %arg5: memref<32x256xf32, #tpu.memory_space<vmem>>, %arg6: memref<1x256xf32, #tpu.memory_space<vmem>>, %arg7: memref<8x256xf32, #tpu.memory_space<vmem>>, %arg8: memref<8x256xf32, #tpu.memory_space<vmem>>, %arg9: memref<8x256xf32, #tpu.memory_space<vmem>>, %arg10: memref<256x16xf32, #tpu.memory_space<vmem>>, %arg11: memref<8x16xf32, #tpu.memory_space<vmem>>, %arg12: memref<8x16xf32, #tpu.memory_space<vmem>>, %arg13: memref<8x16xf32, #tpu.memory_space<vmem>>, %arg14: memref<32x16xf32, #tpu.memory_space<vmem>>, %arg15: memref<1x16xf32, #tpu.memory_space<vmem>>, %arg16: memref<2x16xf32, #tpu.memory_space<vmem>>) attributes {dimension_semantics = [], scalar_prefetch = 0 : i64, scratch_operands = 0 : i64, tpu.core_type = #tpu.core_type<tc>} {
    %c0 = arith.constant 0 : index
    %c0_0 = arith.constant 0 : index
    %0 = vector.load %arg0[%c0, %c0_0] : memref<128x32xf32, #tpu.memory_space<vmem>>, vector<128x32xf32>
    %c0_1 = arith.constant 0 : index
    %c0_2 = arith.constant 0 : index
    %1 = vector.load %arg1[%c0_1, %c0_2] : memref<6x128xf32, #tpu.memory_space<vmem>>, vector<6x128xf32>
    %c0_3 = arith.constant 0 : index
    %c0_4 = arith.constant 0 : index
    %2 = vector.load %arg2[%c0_3, %c0_4] : memref<64x16xf32, #tpu.memory_space<vmem>>, vector<64x16xf32>
    %c0_5 = arith.constant 0 : index
    %c0_6 = arith.constant 0 : index
    %3 = vector.load %arg3[%c0_5, %c0_6] : memref<32x64xf32, #tpu.memory_space<vmem>>, vector<32x64xf32>
    %c0_7 = arith.constant 0 : index
    %c0_8 = arith.constant 0 : index
    %4 = vector.load %arg4[%c0_7, %c0_8] : memref<1x64xf32, #tpu.memory_space<vmem>>, vector<1x64xf32>
    %5 = vector.extract_strided_slice %1 {offsets = [0, 0], sizes = [2, 128], strides = [1, 1]} : vector<6x128xf32> to vector<2x128xf32>
    %cst = arith.constant dense<0.000000e+00> : vector<2x32xf32>
    %6 = tpu.matmul %5, %0, %cst {dimension_numbers = #tpu.dot_dimension_numbers<[1], [0], [0], [1], [0, 0, 1, 1], [], []>} : vector<2x128xf32>, vector<128x32xf32>, vector<2x32xf32> -> vector<2x32xf32>
    %cst_9 = arith.constant 1.562500e-02 : f32
    %7 = vector.broadcast %cst_9 : f32 to vector<2x32xf32>
    %8 = arith.mulf %6, %7 : vector<2x32xf32>
    %cst_10 = arith.constant dense<0.000000e+00> : vector<128x64xf32>
    %9 = tpu.matmul %0, %3, %cst_10 {dimension_numbers = #tpu.dot_dimension_numbers<[1], [0], [0], [1], [0, 0, 1, 1], [], []>} : vector<128x32xf32>, vector<32x64xf32>, vector<128x64xf32> -> vector<128x64xf32>
    %10 = vector.broadcast %4 : vector<1x64xf32> to vector<128x64xf32>
    %11 = arith.addf %9, %10 : vector<128x64xf32>
    %cst_11 = arith.constant dense<0xFF800000> : vector<128xf32>
    %12 = vector.multi_reduction <maximumf>, %11, %cst_11 [1] : vector<128x64xf32> to vector<128xf32>
    %13 = vector.shape_cast %12 : vector<128xf32> to vector<128x1xf32>
    %cst_12 = arith.constant dense<0xFF800000> : vector<1xf32>
    %14 = vector.multi_reduction <maximumf>, %13, %cst_12 [0] : vector<128x1xf32> to vector<1xf32>
    %15 = vector.shape_cast %14 : vector<1xf32> to vector<1x1xf32>
    %16 = vector.broadcast %15 : vector<1x1xf32> to vector<128x64xf32>
    %17 = arith.subf %11, %16 : vector<128x64xf32>
    %18 = math.exp %17 : vector<128x64xf32>
    %cst_13 = arith.constant dense<0.000000e+00> : vector<6x64xf32>
    %19 = tpu.matmul %1, %18, %cst_13 {dimension_numbers = #tpu.dot_dimension_numbers<[1], [0], [0], [1], [0, 0, 1, 1], [], []>} : vector<6x128xf32>, vector<128x64xf32>, vector<6x64xf32> -> vector<6x64xf32>
    %cst_14 = arith.constant dense<0.000000e+00> : vector<6x16xf32>
    %20 = tpu.matmul %19, %2, %cst_14 {dimension_numbers = #tpu.dot_dimension_numbers<[1], [0], [0], [1], [0, 0, 1, 1], [], []>} : vector<6x64xf32>, vector<64x16xf32>, vector<6x16xf32> -> vector<6x16xf32>
    %21 = vector.extract_strided_slice %20 {offsets = [0, 0], sizes = [2, 8], strides = [1, 1]} : vector<6x16xf32> to vector<2x8xf32>
    %cst_15 = arith.constant 1.000000e+00 : f32
    %22 = vector.broadcast %cst_15 : f32 to vector<2x8xf32>
    %23 = arith.divf %22, %21 : vector<2x8xf32>
    %24 = vector.extract_strided_slice %20 {offsets = [0, 8], sizes = [2, 8], strides = [1, 1]} : vector<6x16xf32> to vector<2x8xf32>
    %25 = arith.mulf %24, %23 : vector<2x8xf32>
    %26 = vector.extract_strided_slice %20 {offsets = [2, 0], sizes = [2, 8], strides = [1, 1]} : vector<6x16xf32> to vector<2x8xf32>
    %27 = arith.mulf %26, %23 : vector<2x8xf32>
    %28 = vector.extract_strided_slice %20 {offsets = [4, 0], sizes = [2, 8], strides = [1, 1]} : vector<6x16xf32> to vector<2x8xf32>
    %29 = arith.mulf %28, %23 : vector<2x8xf32>
    %c0_16 = arith.constant 0 : index
    %c0_17 = arith.constant 0 : index
    %30 = vector.load %arg5[%c0_16, %c0_17] : memref<32x256xf32, #tpu.memory_space<vmem>>, vector<32x256xf32>
    %cst_18 = arith.constant dense<0.000000e+00> : vector<2x256xf32>
    %31 = tpu.matmul %8, %30, %cst_18 {dimension_numbers = #tpu.dot_dimension_numbers<[1], [0], [0], [1], [0, 0, 1, 1], [], []>} : vector<2x32xf32>, vector<32x256xf32>, vector<2x256xf32> -> vector<2x256xf32>
    %c0_19 = arith.constant 0 : index
    %c0_20 = arith.constant 0 : index
    %32 = vector.load %arg6[%c0_19, %c0_20] : memref<1x256xf32, #tpu.memory_space<vmem>>, vector<1x256xf32>
    %33 = vector.broadcast %32 : vector<1x256xf32> to vector<2x256xf32>
    %34 = arith.addf %31, %33 : vector<2x256xf32>
    %c0_21 = arith.constant 0 : index
    %c0_22 = arith.constant 0 : index
    %35 = vector.load %arg7[%c0_21, %c0_22] : memref<8x256xf32, #tpu.memory_space<vmem>>, vector<8x256xf32>
    %cst_23 = arith.constant dense<0.000000e+00> : vector<2x256xf32>
    %36 = tpu.matmul %27, %35, %cst_23 {dimension_numbers = #tpu.dot_dimension_numbers<[1], [0], [0], [1], [0, 0, 1, 1], [], []>} : vector<2x8xf32>, vector<8x256xf32>, vector<2x256xf32> -> vector<2x256xf32>
    %37 = arith.addf %34, %36 : vector<2x256xf32>
    %c0_24 = arith.constant 0 : index
    %c0_25 = arith.constant 0 : index
    %38 = vector.load %arg8[%c0_24, %c0_25] : memref<8x256xf32, #tpu.memory_space<vmem>>, vector<8x256xf32>
    %cst_26 = arith.constant dense<0.000000e+00> : vector<2x256xf32>
    %39 = tpu.matmul %29, %38, %cst_26 {dimension_numbers = #tpu.dot_dimension_numbers<[1], [0], [0], [1], [0, 0, 1, 1], [], []>} : vector<2x8xf32>, vector<8x256xf32>, vector<2x256xf32> -> vector<2x256xf32>
    %40 = arith.addf %37, %39 : vector<2x256xf32>
    %c0_27 = arith.constant 0 : index
    %c0_28 = arith.constant 0 : index
    %41 = vector.load %arg9[%c0_27, %c0_28] : memref<8x256xf32, #tpu.memory_space<vmem>>, vector<8x256xf32>
    %cst_29 = arith.constant dense<0.000000e+00> : vector<2x256xf32>
    %42 = tpu.matmul %25, %41, %cst_29 {dimension_numbers = #tpu.dot_dimension_numbers<[1], [0], [0], [1], [0, 0, 1, 1], [], []>} : vector<2x8xf32>, vector<8x256xf32>, vector<2x256xf32> -> vector<2x256xf32>
    %43 = arith.addf %40, %42 : vector<2x256xf32>
    %c0_30 = arith.constant 0 : index
    %c0_31 = arith.constant 0 : index
    %44 = vector.load %arg10[%c0_30, %c0_31] : memref<256x16xf32, #tpu.memory_space<vmem>>, vector<256x16xf32>
    %cst_32 = arith.constant dense<0.000000e+00> : vector<2x16xf32>
    %45 = tpu.matmul %43, %44, %cst_32 {dimension_numbers = #tpu.dot_dimension_numbers<[1], [0], [0], [1], [0, 0, 1, 1], [], []>} : vector<2x256xf32>, vector<256x16xf32>, vector<2x16xf32> -> vector<2x16xf32>
    %c0_33 = arith.constant 0 : index
    %c0_34 = arith.constant 0 : index
    %46 = vector.load %arg11[%c0_33, %c0_34] : memref<8x16xf32, #tpu.memory_space<vmem>>, vector<8x16xf32>
    %cst_35 = arith.constant dense<0.000000e+00> : vector<2x16xf32>
    %47 = tpu.matmul %27, %46, %cst_35 {dimension_numbers = #tpu.dot_dimension_numbers<[1], [0], [0], [1], [0, 0, 1, 1], [], []>} : vector<2x8xf32>, vector<8x16xf32>, vector<2x16xf32> -> vector<2x16xf32>
    %48 = arith.addf %45, %47 : vector<2x16xf32>
    %c0_36 = arith.constant 0 : index
    %c0_37 = arith.constant 0 : index
    %49 = vector.load %arg12[%c0_36, %c0_37] : memref<8x16xf32, #tpu.memory_space<vmem>>, vector<8x16xf32>
    %cst_38 = arith.constant dense<0.000000e+00> : vector<2x16xf32>
    %50 = tpu.matmul %29, %49, %cst_38 {dimension_numbers = #tpu.dot_dimension_numbers<[1], [0], [0], [1], [0, 0, 1, 1], [], []>} : vector<2x8xf32>, vector<8x16xf32>, vector<2x16xf32> -> vector<2x16xf32>
    %51 = arith.addf %48, %50 : vector<2x16xf32>
    %c0_39 = arith.constant 0 : index
    %c0_40 = arith.constant 0 : index
    %52 = vector.load %arg13[%c0_39, %c0_40] : memref<8x16xf32, #tpu.memory_space<vmem>>, vector<8x16xf32>
    %cst_41 = arith.constant dense<0.000000e+00> : vector<2x16xf32>
    %53 = tpu.matmul %25, %52, %cst_41 {dimension_numbers = #tpu.dot_dimension_numbers<[1], [0], [0], [1], [0, 0, 1, 1], [], []>} : vector<2x8xf32>, vector<8x16xf32>, vector<2x16xf32> -> vector<2x16xf32>
    %54 = arith.addf %51, %53 : vector<2x16xf32>
    %c0_42 = arith.constant 0 : index
    %c0_43 = arith.constant 0 : index
    %55 = vector.load %arg14[%c0_42, %c0_43] : memref<32x16xf32, #tpu.memory_space<vmem>>, vector<32x16xf32>
    %cst_44 = arith.constant dense<0.000000e+00> : vector<2x16xf32>
    %56 = tpu.matmul %8, %55, %cst_44 {dimension_numbers = #tpu.dot_dimension_numbers<[1], [0], [0], [1], [0, 0, 1, 1], [], []>} : vector<2x32xf32>, vector<32x16xf32>, vector<2x16xf32> -> vector<2x16xf32>
    %57 = arith.addf %54, %56 : vector<2x16xf32>
    %c0_45 = arith.constant 0 : index
    %c0_46 = arith.constant 0 : index
    %58 = vector.load %arg15[%c0_45, %c0_46] : memref<1x16xf32, #tpu.memory_space<vmem>>, vector<1x16xf32>
    %59 = vector.broadcast %58 : vector<1x16xf32> to vector<2x16xf32>
    %60 = arith.addf %57, %59 : vector<2x16xf32>
    %c0_47 = arith.constant 0 : index
    %c0_48 = arith.constant 0 : index
    %61 = vector.load %arg16[%c0_47, %c0_48] : memref<2x16xf32, #tpu.memory_space<vmem>>, vector<2x16xf32>
    tpu.vector_store %arg16[%c0_47, %c0_48], %60 {strides = array<i32>} : memref<2x16xf32, #tpu.memory_space<vmem>>, vector<2x16xf32>,
    return
  }
}

module attributes {stable_mosaic.version = 11 : i64} {
  func.func @_rot6d_kernel(%arg0: memref<3x105xf32, #tpu.memory_space<vmem>>, %arg1: memref<3x105xf32, #tpu.memory_space<vmem>>, %arg2: memref<4x105xf32, #tpu.memory_space<vmem>>) attributes {dimension_semantics = [], scalar_prefetch = 0 : i64, scratch_operands = 0 : i64, tpu.core_type = #tpu.core_type<tc>} {
    %c0 = arith.constant 0 : index
    %c0_0 = arith.constant 0 : index
    %0 = vector.load %arg0[%c0, %c0_0] : memref<3x105xf32, #tpu.memory_space<vmem>>, vector<3x105xf32>
    %c0_1 = arith.constant 0 : index
    %c0_2 = arith.constant 0 : index
    %1 = vector.load %arg1[%c0_1, %c0_2] : memref<3x105xf32, #tpu.memory_space<vmem>>, vector<3x105xf32>
    %2 = arith.mulf %0, %0 : vector<3x105xf32>
    %cst = arith.constant dense<0.000000e+00> : vector<105xf32>
    %3 = vector.multi_reduction <add>, %2, %cst [0] : vector<3x105xf32> to vector<105xf32>
    %4 = vector.shape_cast %3 : vector<105xf32> to vector<1x105xf32>
    %cst_3 = arith.constant 9.99999993E-9 : f32
    %5 = vector.broadcast %cst_3 : f32 to vector<1x105xf32>
    %6 = arith.addf %4, %5 : vector<1x105xf32>
    %7 = math.rsqrt %6 : vector<1x105xf32>
    %8 = vector.broadcast %7 : vector<1x105xf32> to vector<3x105xf32>
    %9 = arith.mulf %0, %8 : vector<3x105xf32>
    %10 = arith.mulf %9, %1 : vector<3x105xf32>
    %cst_4 = arith.constant dense<0.000000e+00> : vector<105xf32>
    %11 = vector.multi_reduction <add>, %10, %cst_4 [0] : vector<3x105xf32> to vector<105xf32>
    %12 = vector.shape_cast %11 : vector<105xf32> to vector<1x105xf32>
    %13 = vector.broadcast %12 : vector<1x105xf32> to vector<3x105xf32>
    %14 = arith.mulf %13, %9 : vector<3x105xf32>
    %15 = arith.subf %1, %14 : vector<3x105xf32>
    %16 = arith.mulf %15, %15 : vector<3x105xf32>
    %cst_5 = arith.constant dense<0.000000e+00> : vector<105xf32>
    %17 = vector.multi_reduction <add>, %16, %cst_5 [0] : vector<3x105xf32> to vector<105xf32>
    %18 = vector.shape_cast %17 : vector<105xf32> to vector<1x105xf32>
    %cst_6 = arith.constant 9.99999993E-9 : f32
    %19 = vector.broadcast %cst_6 : f32 to vector<1x105xf32>
    %20 = arith.addf %18, %19 : vector<1x105xf32>
    %21 = math.rsqrt %20 : vector<1x105xf32>
    %22 = vector.broadcast %21 : vector<1x105xf32> to vector<3x105xf32>
    %23 = arith.mulf %15, %22 : vector<3x105xf32>
    %24 = vector.extract_strided_slice %9 {offsets = [0, 0], sizes = [1, 105], strides = [1, 1]} : vector<3x105xf32> to vector<1x105xf32>
    %25 = vector.extract_strided_slice %9 {offsets = [1, 0], sizes = [1, 105], strides = [1, 1]} : vector<3x105xf32> to vector<1x105xf32>
    %26 = vector.extract_strided_slice %9 {offsets = [2, 0], sizes = [1, 105], strides = [1, 1]} : vector<3x105xf32> to vector<1x105xf32>
    %27 = vector.extract_strided_slice %23 {offsets = [0, 0], sizes = [1, 105], strides = [1, 1]} : vector<3x105xf32> to vector<1x105xf32>
    %28 = vector.extract_strided_slice %23 {offsets = [1, 0], sizes = [1, 105], strides = [1, 1]} : vector<3x105xf32> to vector<1x105xf32>
    %29 = vector.extract_strided_slice %23 {offsets = [2, 0], sizes = [1, 105], strides = [1, 1]} : vector<3x105xf32> to vector<1x105xf32>
    %30 = arith.mulf %25, %29 : vector<1x105xf32>
    %31 = arith.mulf %26, %28 : vector<1x105xf32>
    %32 = arith.subf %30, %31 : vector<1x105xf32>
    %33 = arith.mulf %26, %27 : vector<1x105xf32>
    %34 = arith.mulf %24, %29 : vector<1x105xf32>
    %35 = arith.subf %33, %34 : vector<1x105xf32>
    %36 = arith.mulf %24, %28 : vector<1x105xf32>
    %37 = arith.mulf %25, %27 : vector<1x105xf32>
    %38 = arith.subf %36, %37 : vector<1x105xf32>
    %39 = arith.addf %24, %28 : vector<1x105xf32>
    %40 = arith.addf %39, %38 : vector<1x105xf32>
    %41 = arith.subf %29, %35 : vector<1x105xf32>
    %42 = arith.subf %32, %26 : vector<1x105xf32>
    %43 = arith.subf %25, %27 : vector<1x105xf32>
    %44 = tpu.concatenate %40, %41, %42, %43 in 0 : vector<1x105xf32>, vector<1x105xf32>, vector<1x105xf32>, vector<1x105xf32> -> vector<4x105xf32>
    %c0_7 = arith.constant 0 : index
    %c0_8 = arith.constant 0 : index
    %45 = vector.load %arg2[%c0_7, %c0_8] : memref<4x105xf32, #tpu.memory_space<vmem>>, vector<4x105xf32>
    tpu.vector_store %arg2[%c0_7, %c0_8], %44 {strides = array<i32>} : memref<4x105xf32, #tpu.memory_space<vmem>>, vector<4x105xf32>,
    return
  }
}

</mosaic_0001>

<llo_original>
// kernel: _lambda_.5
$region0: #{_lambda_.5}
  #allocation0 [shape = 'u32[]', space=smem, size = 0x4, offset = 0x4, fixed_abs, tag = 'smem constant byte address 0x4 - core index']
  #allocation1 [shape = 'u32[144,128]{1,0:T(1,128)}', space=vmem, size = 0x12000, scoped, tag = 'internal scratch']
  %s0 = inlined_call_operand.vmem [shape: f32[256,32], index: 0, kind: input, shape index: {}]
  %s1 = inlined_call_operand.vmem [shape: f32[12,256], index: 1, kind: input, shape index: {}]
  %s2 = inlined_call_operand.vmem [shape: f32[64,16], index: 2, kind: input, shape index: {}]
  %s3 = inlined_call_operand.vmem [shape: f32[32,64], index: 3, kind: input, shape index: {}]
  %s4 = inlined_call_operand.vmem [shape: f32[1,64], index: 4, kind: input, shape index: {}]
  %s5 = inlined_call_operand.vmem [shape: f32[32,256], index: 5, kind: input, shape index: {}]
  %s6 = inlined_call_operand.vmem [shape: f32[1,256], index: 6, kind: input, shape index: {}]
  %s7 = inlined_call_operand.vmem [shape: f32[8,256], index: 7, kind: input, shape index: {}]
  %s8 = inlined_call_operand.vmem [shape: f32[8,256], index: 8, kind: input, shape index: {}]
  %s9 = inlined_call_operand.vmem [shape: f32[8,256], index: 9, kind: input, shape index: {}]
  %s10 = inlined_call_operand.vmem [shape: f32[256,90], index: 10, kind: input, shape index: {}]
  %s11 = inlined_call_operand.vmem [shape: f32[8,90], index: 11, kind: input, shape index: {}]
  %s12 = inlined_call_operand.vmem [shape: f32[8,90], index: 12, kind: input, shape index: {}]
  %s13 = inlined_call_operand.vmem [shape: f32[8,90], index: 13, kind: input, shape index: {}]
  %s14 = inlined_call_operand.vmem [shape: f32[1,90], index: 14, kind: input, shape index: {}]
  %s15 = inlined_call_operand.vmem [shape: f32[4,24], index: 15, kind: output, shape index: {0}]
  %s16 = inlined_call_operand.vmem [shape: f32[4,90], index: 16, kind: output, shape index: {1}]
  %17 = xla_tuple %s15, %s16
  %s18 = sld [smem:[#allocation0]]
  $region78: #{_lambda_.5} parent=0
    _
  %s20 = ssub.s32 1, %s18
  %s21 = scalar_select 0, %s20, %s18
  // Predicated region
  $region2: #{_lambda_.5} parent=0 // pred_check
    _
  $region3: #{_lambda_.5} parent=0 // pred_check_branch
    %23 = sbr.rel (0) target = $region5
  $region4: #{_lambda_.5} parent=0 // pred_region
    _
  $region5: #{_lambda_.5} parent=0 // pred_fallthru
    _
  // Predicated region
  $region6: #{_lambda_.5} parent=0 // pred_check
    _
  $region7: #{_lambda_.5} parent=0 // pred_check_branch
    %25 = sbr.rel (0) target = $region9
  $region8: #{_lambda_.5} parent=0 // pred_region
    _
  $region9: #{_lambda_.5} parent=0 // pred_fallthru
    _
  // Predicated region
  $region10: #{_lambda_.5} parent=0 // pred_check
    _
  $region11: #{_lambda_.5} parent=0 // pred_check_branch
    %27 = sbr.rel (0) target = $region13
  $region12: #{_lambda_.5} parent=0 // pred_region
    _
  $region13: #{_lambda_.5} parent=0 // pred_fallthru
    _
  // Predicated region
  $region14: #{_lambda_.5} parent=0 // pred_check
    _
  $region15: #{_lambda_.5} parent=0 // pred_check_branch
    %29 = sbr.rel (0) target = $region17
  $region16: #{_lambda_.5} parent=0 // pred_region
    _
  $region17: #{_lambda_.5} parent=0 // pred_fallthru
    _
  // Predicated region
  $region18: #{_lambda_.5} parent=0 // pred_check
    _
  $region19: #{_lambda_.5} parent=0 // pred_check_branch
    %31 = sbr.rel (0) target = $region21
  $region20: #{_lambda_.5} parent=0 // pred_region
    _
  $region21: #{_lambda_.5} parent=0 // pred_fallthru
    _
  // Predicated region
  $region22: #{_lambda_.5} parent=0 // pred_check
    _
  $region23: #{_lambda_.5} parent=0 // pred_check_branch
    %33 = sbr.rel (0) target = $region25
  $region24: #{_lambda_.5} parent=0 // pred_region
    _
  $region25: #{_lambda_.5} parent=0 // pred_fallthru
    _
  // Predicated region
  $region26: #{_lambda_.5} parent=0 // pred_check
    _
  $region27: #{_lambda_.5} parent=0 // pred_check_branch
    %35 = sbr.rel (0) target = $region29
  $region28: #{_lambda_.5} parent=0 // pred_region
    _
  $region29: #{_lambda_.5} parent=0 // pred_fallthru
    _
  // Predicated region
  $region30: #{_lambda_.5} parent=0 // pred_check
    _
  $region31: #{_lambda_.5} parent=0 // pred_check_branch
    %37 = sbr.rel (0) target = $region33
  $region32: #{_lambda_.5} parent=0 // pred_region
    _
  $region33: #{_lambda_.5} parent=0 // pred_fallthru
    _
  // Predicated region
  $region34: #{_lambda_.5} parent=0 // pred_check
    _
  $region35: #{_lambda_.5} parent=0 // pred_check_branch
    %39 = sbr.rel (0) target = $region37
  $region36: #{_lambda_.5} parent=0 // pred_region
    _
  $region37: #{_lambda_.5} parent=0 // pred_fallthru
    _
  // Predicated region
  $region38: #{_lambda_.5} parent=0 // pred_check
    _
  $region39: #{_lambda_.5} parent=0 // pred_check_branch
    %41 = sbr.rel (0) target = $region41
  $region40: #{_lambda_.5} parent=0 // pred_region
    _
  $region41: #{_lambda_.5} parent=0 // pred_fallthru
    _
  // Predicated region
  $region42: #{_lambda_.5} parent=0 // pred_check
    _
  $region43: #{_lambda_.5} parent=0 // pred_check_branch
    %43 = sbr.rel (0) target = $region45
  $region44: #{_lambda_.5} parent=0 // pred_region
    _
  $region45: #{_lambda_.5} parent=0 // pred_fallthru
    _
  // Predicated region
  $region46: #{_lambda_.5} parent=0 // pred_check
    _
  $region47: #{_lambda_.5} parent=0 // pred_check_branch
    %45 = sbr.rel (0) target = $region49
  $region48: #{_lambda_.5} parent=0 // pred_region
    _
  $region49: #{_lambda_.5} parent=0 // pred_fallthru
    _
  // Predicated region
  $region50: #{_lambda_.5} parent=0 // pred_check
    _
  $region51: #{_lambda_.5} parent=0 // pred_check_branch
    %47 = sbr.rel (0) target = $region53
  $region52: #{_lambda_.5} parent=0 // pred_region
    _
  $region53: #{_lambda_.5} parent=0 // pred_fallthru
    _
  // Predicated region
  $region54: #{_lambda_.5} parent=0 // pred_check
    _
  $region55: #{_lambda_.5} parent=0 // pred_check_branch
    %49 = sbr.rel (0) target = $region57
  $region56: #{_lambda_.5} parent=0 // pred_region
    _
  $region57: #{_lambda_.5} parent=0 // pred_fallthru
    _
  // Predicated region
  $region58: #{_lambda_.5} parent=0 // pred_check
    _
  $region59: #{_lambda_.5} parent=0 // pred_check_branch
    %51 = sbr.rel (0) target = $region61
  $region60: #{_lambda_.5} parent=0 // pred_region
    _
  $region61: #{_lambda_.5} parent=0 // pred_fallthru
    _
  %v52 = vld [vmem:[%s0] sm:$0xff]
  %v53 = vld [vmem:[%s0 + $0x8] sm:$0xff]
  %v54 = vld [vmem:[%s0 + $0x10] sm:$0xff]
  %v55 = vld [vmem:[%s0 + $0x18] sm:$0xff]
  %v56 = vld [vmem:[%s0 + $0x20] sm:$0xff]
  %v57 = vld [vmem:[%s0 + $0x28] sm:$0xff]
  %v58 = vld [vmem:[%s0 + $0x30] sm:$0xff]
  %v59 = vld [vmem:[%s0 + $0x38] sm:$0xff]
  %v60 = vld [vmem:[%s0 + $0x40] sm:$0xff]
  %v61 = vld [vmem:[%s0 + $0x48] sm:$0xff]
  %v62 = vld [vmem:[%s0 + $0x50] sm:$0xff]
  %v63 = vld [vmem:[%s0 + $0x58] sm:$0xff]
  %v64 = vld [vmem:[%s0 + $0x60] sm:$0xff]
  %v65 = vld [vmem:[%s0 + $0x68] sm:$0xff]
  %v66 = vld [vmem:[%s0 + $0x70] sm:$0xff]
  %v67 = vld [vmem:[%s0 + $0x78] sm:$0xff]
  %v68 = vld [vmem:[%s0 + $0x80] sm:$0xff]
  %v69 = vld [vmem:[%s0 + $0x88] sm:$0xff]
  %v70 = vld [vmem:[%s0 + $0x90] sm:$0xff]
  %v71 = vld [vmem:[%s0 + $0x98] sm:$0xff]
  %v72 = vld [vmem:[%s0 + $0xa0] sm:$0xff]
  %v73 = vld [vmem:[%s0 + $0xa8] sm:$0xff]
  %v74 = vld [vmem:[%s0 + $0xb0] sm:$0xff]
  %v75 = vld [vmem:[%s0 + $0xb8] sm:$0xff]
  %v76 = vld [vmem:[%s0 + $0xc0] sm:$0xff]
  %v77 = vld [vmem:[%s0 + $0xc8] sm:$0xff]
  %v78 = vld [vmem:[%s0 + $0xd0] sm:$0xff]
  %v79 = vld [vmem:[%s0 + $0xd8] sm:$0xff]
  %v80 = vld [vmem:[%s0 + $0xe0] sm:$0xff]
  %v81 = vld [vmem:[%s0 + $0xe8] sm:$0xff]
  %v82 = vld [vmem:[%s0 + $0xf0] sm:$0xff]
  %v83 = vld [vmem:[%s0 + $0xf8] sm:$0xff]
  %v84 = vld [vmem:[%s1] sm:$0xff]
  %v85 = vld [vmem:[%s1 + $0x8] sm:$0xff]
  %v86 = vld [vmem:[%s1 + $0x10] sm:$0xf]
  %v87 = vld [vmem:[%s1 + $0x18] sm:$0xf]
  %v88 = vld [vmem:[%s2] sm:$0xff]
  %v89 = vld [vmem:[%s2 + $0x8] sm:$0xff]
  %v90 = vld [vmem:[%s2 + $0x10] sm:$0xff]
  %v91 = vld [vmem:[%s2 + $0x18] sm:$0xff]
  %v92 = vld [vmem:[%s2 + $0x20] sm:$0xff]
  %v93 = vld [vmem:[%s2 + $0x28] sm:$0xff]
  %v94 = vld [vmem:[%s2 + $0x30] sm:$0xff]
  %v95 = vld [vmem:[%s2 + $0x38] sm:$0xff]
  %v96 = vld [vmem:[%s3] sm:$0xff]
  %v97 = vld [vmem:[%s3 + $0x8] sm:$0xff]
  %v98 = vld [vmem:[%s3 + $0x10] sm:$0xff]
  %v99 = vld [vmem:[%s3 + $0x18] sm:$0xff]
  %v100 = vld [vmem:[%s4] sm:$0x1]
  %101 = vmatprep.subr.mxu0 0.0
  %102 = vmatpush1.msra.mxu0 %v67
  %103 = vmatprep.subr.mxu0 0.0
  %104 = vmatpush1.msra.mxu0 %v66
  %105 = vmatprep.subr.mxu0 0.0
  %106 = vmatpush1.msra.mxu0 %v65
  %107 = vmatprep.subr.mxu0 0.0
  %108 = vmatpush1.msra.mxu0 %v64
  %109 = vmatprep.subr.mxu0 0.0
  %110 = vmatpush1.msra.mxu0 %v63
  %111 = vmatprep.subr.mxu0 0.0
  %112 = vmatpush1.msra.mxu0 %v62
  %113 = vmatprep.subr.mxu0 0.0
  %114 = vmatpush1.msra.mxu0 %v61
  %115 = vmatprep.subr.mxu0 0.0
  %116 = vmatpush1.msra.mxu0 %v60
  %117 = vmatprep.subr.mxu0 0.0
  %118 = vmatpush1.msra.mxu0 %v59
  %119 = vmatprep.subr.mxu0 0.0
  %120 = vmatpush1.msra.mxu0 %v58
  %121 = vmatprep.subr.mxu0 0.0
  %122 = vmatpush1.msra.mxu0 %v57
  %123 = vmatprep.subr.mxu0 0.0
  %124 = vmatpush1.msra.mxu0 %v56
  %125 = vmatprep.subr.mxu0 0.0
  %126 = vmatpush1.msra.mxu0 %v55
  %127 = vmatprep.subr.mxu0 0.0
  %128 = vmatpush1.msra.mxu0 %v54
  %129 = vmatprep.subr.mxu0 0.0
  %130 = vmatpush1.msra.mxu0 %v53
  %131 = vmatprep.subr.mxu0 0.0
  %132 = vmatpush1.msra.mxu0 %v52
  %133 = vmatprep.subr.mxu0 0.0
  %134 = vmatpush2.msra.mxu0 %v83
  %135 = vmatprep.subr.mxu0 0.0
  %136 = vmatpush2.msra.mxu0 %v82
  %137 = vmatprep.subr.mxu0 0.0
  %138 = vmatpush2.msra.mxu0 %v81
  %139 = vmatprep.subr.mxu0 0.0
  %140 = vmatpush2.msra.mxu0 %v80
  %141 = vmatprep.subr.mxu0 0.0
  %142 = vmatpush2.msra.mxu0 %v79
  %143 = vmatprep.subr.mxu0 0.0
  %144 = vmatpush2.msra.mxu0 %v78
  %145 = vmatprep.subr.mxu0 0.0
  %146 = vmatpush2.msra.mxu0 %v77
  %147 = vmatprep.subr.mxu0 0.0
  %148 = vmatpush2.msra.mxu0 %v76
  %149 = vmatprep.subr.mxu0 0.0
  %150 = vmatpush2.msra.mxu0 %v75
  %151 = vmatprep.subr.mxu0 0.0
  %152 = vmatpush2.msra.mxu0 %v74
  %153 = vmatprep.subr.mxu0 0.0
  %154 = vmatpush2.msra.mxu0 %v73
  %155 = vmatprep.subr.mxu0 0.0
  %156 = vmatpush2.msra.mxu0 %v72
  %157 = vmatprep.subr.mxu0 0.0
  %158 = vmatpush2.msra.mxu0 %v71
  %159 = vmatprep.subr.mxu0 0.0
  %160 = vmatpush2.msra.mxu0 %v70
  %161 = vmatprep.subr.mxu0 0.0
  %162 = vmatpush2.msra.mxu0 %v69
  %163 = vmatprep.subr.mxu0 0.0
  %164 = vmatpush2.msra.mxu0 %v68
  %165 = vmatprep.mubr.f32.mxu0 %v85
  %166 = vmatmul.mubr.f32.gmra.mxu0 %v84
  %v167 = vpop.f32.mrf.mxu0
  %v168 = vadd.f32 0.0, %v167
  %v169 = vpop.f32.mrf.mxu0
  %170 = vdwg.mxu0
  %v171 = vmul.f32 %v168, 0.015625
  %v173 = vlaneseq
  %v174 = vshrl.u32 %v173, 7
  %v175 = vsub.s32 0, %v174
  %v176 = vrot.slane %v100, %v175
  %vm178 = vcmask 261120
  %v180 = vsel %vm178, %v52, 0
  %v183 = vsel %vm178, %v53, 0
  %v186 = vsel %vm178, %v54, 0
  %v189 = vsel %vm178, %v55, 0
  %v192 = vsel %vm178, %v56, 0
  %v195 = vsel %vm178, %v57, 0
  %v198 = vsel %vm178, %v58, 0
  %v201 = vsel %vm178, %v59, 0
  %v204 = vsel %vm178, %v60, 0
  %v207 = vsel %vm178, %v61, 0
  %v210 = vsel %vm178, %v62, 0
  %v213 = vsel %vm178, %v63, 0
  %v216 = vsel %vm178, %v64, 0
  %v219 = vsel %vm178, %v65, 0
  %v222 = vsel %vm178, %v66, 0
  %v225 = vsel %vm178, %v67, 0
  %v228 = vsel %vm178, %v68, 0
  %v231 = vsel %vm178, %v69, 0
  %v234 = vsel %vm178, %v70, 0
  %v237 = vsel %vm178, %v71, 0
  %v240 = vsel %vm178, %v72, 0
  %v243 = vsel %vm178, %v73, 0
  %v246 = vsel %vm178, %v74, 0
  %v249 = vsel %vm178, %v75, 0
  %v252 = vsel %vm178, %v76, 0
  %v255 = vsel %vm178, %v77, 0
  %v258 = vsel %vm178, %v78, 0
  %v261 = vsel %vm178, %v79, 0
  %v264 = vsel %vm178, %v80, 0
  %v267 = vsel %vm178, %v81, 0
  %v270 = vsel %vm178, %v82, 0
  %v273 = vsel %vm178, %v83, 0
  %275 = vmatprep.subr.mxu0 0.0
  %276 = vmatpush1.msra.mxu0 0.0
  %277 = vmatprep.subr.mxu0 0.0
  %278 = vmatpush1.msra.mxu0 0.0
  %279 = vmatprep.subr.mxu0 0.0
  %280 = vmatpush1.msra.mxu0 0.0
  %281 = vmatprep.subr.mxu0 0.0
  %282 = vmatpush1.msra.mxu0 0.0
  %283 = vmatprep.subr.mxu0 0.0
  %284 = vmatpush1.msra.mxu0 0.0
  %285 = vmatprep.subr.mxu0 0.0
  %286 = vmatpush1.msra.mxu0 0.0
  %287 = vmatprep.subr.mxu0 0.0
  %288 = vmatpush1.msra.mxu0 0.0
  %289 = vmatprep.subr.mxu0 0.0
  %290 = vmatpush1.msra.mxu0 0.0
  %291 = vmatprep.subr.mxu0 0.0
  %292 = vmatpush1.msra.mxu0 0.0
  %293 = vmatprep.subr.mxu0 0.0
  %294 = vmatpush1.msra.mxu0 0.0
  %295 = vmatprep.subr.mxu0 0.0
  %296 = vmatpush1.msra.mxu0 0.0
  %297 = vmatprep.subr.mxu0 0.0
  %298 = vmatpush1.msra.mxu0 0.0
  %299 = vmatprep.subr.mxu0 0.0
  %300 = vmatpush1.msra.mxu0 %v99
  %301 = vmatprep.subr.mxu0 0.0
  %302 = vmatpush1.msra.mxu0 %v98
  %303 = vmatprep.subr.mxu0 0.0
  %304 = vmatpush1.msra.mxu0 %v97
  %305 = vmatprep.subr.mxu0 0.0
  %306 = vmatpush1.msra.mxu0 %v96
  %307 = vmatprep.subr.mxu0 0.0
  %308 = vmatpush2.msra.mxu0 0.0
  %309 = vmatprep.subr.mxu0 0.0
  %310 = vmatpush2.msra.mxu0 0.0
  %311 = vmatprep.subr.mxu0 0.0
  %312 = vmatpush2.msra.mxu0 0.0
  %313 = vmatprep.subr.mxu0 0.0
  %314 = vmatpush2.msra.mxu0 0.0
  %315 = vmatprep.subr.mxu0 0.0
  %316 = vmatpush2.msra.mxu0 0.0
  %317 = vmatprep.subr.mxu0 0.0
  %318 = vmatpush2.msra.mxu0 0.0
  %319 = vmatprep.subr.mxu0 0.0
  %320 = vmatpush2.msra.mxu0 0.0
  %321 = vmatprep.subr.mxu0 0.0
  %322 = vmatpush2.msra.mxu0 0.0
  %323 = vmatprep.subr.mxu0 0.0
  %324 = vmatpush2.msra.mxu0 0.0
  %325 = vmatprep.subr.mxu0 0.0
  %326 = vmatpush2.msra.mxu0 0.0
  %327 = vmatprep.subr.mxu0 0.0
  %328 = vmatpush2.msra.mxu0 0.0
  %329 = vmatprep.subr.mxu0 0.0
  %330 = vmatpush2.msra.mxu0 0.0
  %331 = vmatprep.subr.mxu0 0.0
  %332 = vmatpush2.msra.mxu0 0.0
  %333 = vmatprep.subr.mxu0 0.0
  %334 = vmatpush2.msra.mxu0 0.0
  %335 = vmatprep.subr.mxu0 0.0
  %336 = vmatpush2.msra.mxu0 0.0
  %337 = vmatprep.subr.mxu0 0.0
  %338 = vmatpush2.msra.mxu0 0.0
  %339 = vmatprep.mubr.f32.mxu0 0.0
  %340 = vmatmul.mubr.f32.gmra.mxu0 %v180
  %v341 = vpop.f32.mrf.mxu0
  %v342 = vadd.f32 %v176, %v341
  %v343 = vpop.f32.mrf.mxu0
  %344 = vmatprep.mubr.f32.mxu0 0.0
  %345 = vmatmul.mubr.f32.gmra.mxu0 %v183
  %v346 = vpop.f32.mrf.mxu0
  %v347 = vadd.f32 %v176, %v346
  %v348 = vpop.f32.mrf.mxu0
  %349 = vmatprep.mubr.f32.mxu0 0.0
  %350 = vmatmul.mubr.f32.gmra.mxu0 %v186
  %v351 = vpop.f32.mrf.mxu0
  %v352 = vadd.f32 %v176, %v351
  %v353 = vpop.f32.mrf.mxu0
  %354 = vmatprep.mubr.f32.mxu0 0.0
  %355 = vmatmul.mubr.f32.gmra.mxu0 %v189
  %v356 = vpop.f32.mrf.mxu0
  %v357 = vadd.f32 %v176, %v356
  %v358 = vpop.f32.mrf.mxu0
  %359 = vmatprep.mubr.f32.mxu0 0.0
  %360 = vmatmul.mubr.f32.gmra.mxu0 %v192
  %v361 = vpop.f32.mrf.mxu0
  %v362 = vadd.f32 %v176, %v361
  %v363 = vpop.f32.mrf.mxu0
  %364 = vmatprep.mubr.f32.mxu0 0.0
  %365 = vmatmul.mubr.f32.gmra.mxu0 %v195
  %v366 = vpop.f32.mrf.mxu0
  %v367 = vadd.f32 %v176, %v366
  %v368 = vpop.f32.mrf.mxu0
  %369 = vmatprep.mubr.f32.mxu0 0.0
  %370 = vmatmul.mubr.f32.gmra.mxu0 %v198
  %v371 = vpop.f32.mrf.mxu0
  %v372 = vadd.f32 %v176, %v371
  %v373 = vpop.f32.mrf.mxu0
  %374 = vmatprep.mubr.f32.mxu0 0.0
  %375 = vmatmul.mubr.f32.gmra.mxu0 %v201
  %v376 = vpop.f32.mrf.mxu0
  %v377 = vadd.f32 %v176, %v376
  %v378 = vpop.f32.mrf.mxu0
  %379 = vmatprep.mubr.f32.mxu0 0.0
  %380 = vmatmul.mubr.f32.gmra.mxu0 %v204
  %v381 = vpop.f32.mrf.mxu0
  %v382 = vadd.f32 %v176, %v381
  %v383 = vpop.f32.mrf.mxu0
  %384 = vmatprep.mubr.f32.mxu0 0.0
  %385 = vmatmul.mubr.f32.gmra.mxu0 %v207
  %v386 = vpop.f32.mrf.mxu0
  %v387 = vadd.f32 %v176, %v386
  %v388 = vpop.f32.mrf.mxu0
  %389 = vmatprep.mubr.f32.mxu0 0.0
  %390 = vmatmul.mubr.f32.gmra.mxu0 %v210
  %v391 = vpop.f32.mrf.mxu0
  %v392 = vadd.f32 %v176, %v391
  %v393 = vpop.f32.mrf.mxu0
  %394 = vmatprep.mubr.f32.mxu0 0.0
  %395 = vmatmul.mubr.f32.gmra.mxu0 %v213
  %v396 = vpop.f32.mrf.mxu0
  %v397 = vadd.f32 %v176, %v396
  %v398 = vpop.f32.mrf.mxu0
  %399 = vmatprep.mubr.f32.mxu0 0.0
  %400 = vmatmul.mubr.f32.gmra.mxu0 %v216
  %v401 = vpop.f32.mrf.mxu0
  %v402 = vadd.f32 %v176, %v401
  %v403 = vpop.f32.mrf.mxu0
  %404 = vmatprep.mubr.f32.mxu0 0.0
  %405 = vmatmul.mubr.f32.gmra.mxu0 %v219
  %v406 = vpop.f32.mrf.mxu0
  %v407 = vadd.f32 %v176, %v406
  %v408 = vpop.f32.mrf.mxu0
  %409 = vmatprep.mubr.f32.mxu0 0.0
  %410 = vmatmul.mubr.f32.gmra.mxu0 %v222
  %v411 = vpop.f32.mrf.mxu0
  %v412 = vadd.f32 %v176, %v411
  %v413 = vpop.f32.mrf.mxu0
  %414 = vmatprep.mubr.f32.mxu0 0.0
  %415 = vmatmul.mubr.f32.gmra.mxu0 %v225
  %v416 = vpop.f32.mrf.mxu0
  %v417 = vadd.f32 %v176, %v416
  %v418 = vpop.f32.mrf.mxu0
  %419 = vmatprep.mubr.f32.mxu0 0.0
  %420 = vmatmul.mubr.f32.gmra.mxu0 %v228
  %v421 = vpop.f32.mrf.mxu0
  %v422 = vadd.f32 %v176, %v421
  %v423 = vpop.f32.mrf.mxu0
  %424 = vmatprep.mubr.f32.mxu0 0.0
  %425 = vmatmul.mubr.f32.gmra.mxu0 %v231
  %v426 = vpop.f32.mrf.mxu0
  %v427 = vadd.f32 %v176, %v426
  %v428 = vpop.f32.mrf.mxu0
  %429 = vmatprep.mubr.f32.mxu0 0.0
  %430 = vmatmul.mubr.f32.gmra.mxu0 %v234
  %v431 = vpop.f32.mrf.mxu0
  %v432 = vadd.f32 %v176, %v431
  %v433 = vpop.f32.mrf.mxu0
  %434 = vmatprep.mubr.f32.mxu0 0.0
  %435 = vmatmul.mubr.f32.gmra.mxu0 %v237
  %v436 = vpop.f32.mrf.mxu0
  %v437 = vadd.f32 %v176, %v436
  %v438 = vpop.f32.mrf.mxu0
  %439 = vmatprep.mubr.f32.mxu0 0.0
  %440 = vmatmul.mubr.f32.gmra.mxu0 %v240
  %v441 = vpop.f32.mrf.mxu0
  %v442 = vadd.f32 %v176, %v441
  %v443 = vpop.f32.mrf.mxu0
  %444 = vmatprep.mubr.f32.mxu0 0.0
  %445 = vmatmul.mubr.f32.gmra.mxu0 %v243
  %v446 = vpop.f32.mrf.mxu0
  %v447 = vadd.f32 %v176, %v446
  %v448 = vpop.f32.mrf.mxu0
  %449 = vmatprep.mubr.f32.mxu0 0.0
  %450 = vmatmul.mubr.f32.gmra.mxu0 %v246
  %v451 = vpop.f32.mrf.mxu0
  %v452 = vadd.f32 %v176, %v451
  %v453 = vpop.f32.mrf.mxu0
  %454 = vmatprep.mubr.f32.mxu0 0.0
  %455 = vmatmul.mubr.f32.gmra.mxu0 %v249
  %v456 = vpop.f32.mrf.mxu0
  %v457 = vadd.f32 %v176, %v456
  %v458 = vpop.f32.mrf.mxu0
  %459 = vmatprep.mubr.f32.mxu0 0.0
  %460 = vmatmul.mubr.f32.gmra.mxu0 %v252
  %v461 = vpop.f32.mrf.mxu0
  %v462 = vadd.f32 %v176, %v461
  %v463 = vpop.f32.mrf.mxu0
  %464 = vmatprep.mubr.f32.mxu0 0.0
  %465 = vmatmul.mubr.f32.gmra.mxu0 %v255
  %v466 = vpop.f32.mrf.mxu0
  %v467 = vadd.f32 %v176, %v466
  %v468 = vpop.f32.mrf.mxu0
  %469 = vmatprep.mubr.f32.mxu0 0.0
  %470 = vmatmul.mubr.f32.gmra.mxu0 %v258
  %v471 = vpop.f32.mrf.mxu0
  %v472 = vadd.f32 %v176, %v471
  %v473 = vpop.f32.mrf.mxu0
  %474 = vmatprep.mubr.f32.mxu0 0.0
  %475 = vmatmul.mubr.f32.gmra.mxu0 %v261
  %v476 = vpop.f32.mrf.mxu0
  %v477 = vadd.f32 %v176, %v476
  %v478 = vpop.f32.mrf.mxu0
  %479 = vmatprep.mubr.f32.mxu0 0.0
  %480 = vmatmul.mubr.f32.gmra.mxu0 %v264
  %v481 = vpop.f32.mrf.mxu0
  %v482 = vadd.f32 %v176, %v481
  %v483 = vpop.f32.mrf.mxu0
  %484 = vmatprep.mubr.f32.mxu0 0.0
  %485 = vmatmul.mubr.f32.gmra.mxu0 %v267
  %v486 = vpop.f32.mrf.mxu0
  %v487 = vadd.f32 %v176, %v486
  %v488 = vpop.f32.mrf.mxu0
  %489 = vmatprep.mubr.f32.mxu0 0.0
  %490 = vmatmul.mubr.f32.gmra.mxu0 %v270
  %v491 = vpop.f32.mrf.mxu0
  %v492 = vadd.f32 %v176, %v491
  %v493 = vpop.f32.mrf.mxu0
  %494 = vmatprep.mubr.f32.mxu0 0.0
  %495 = vmatmul.mubr.f32.gmra.mxu0 %v273
  %v496 = vpop.f32.mrf.mxu0
  %v497 = vadd.f32 %v176, %v496
  %v498 = vpop.f32.mrf.mxu0
  %499 = vdwg.mxu0
  %vm500 = vcmask 523264
  %v501 = vsel %vm500, %v342, -inf
  %502 = vmax.xlane.f32.xlu0 %v501
  %v503 = vpop.xlane.xlu0 %502
  %v504 = vsel %vm500, %v347, -inf
  %505 = vmax.xlane.f32.xlu0 %v504
  %v506 = vpop.xlane.xlu0 %505
  %v507 = vsel %vm500, %v352, -inf
  %508 = vmax.xlane.f32.xlu0 %v507
  %v509 = vpop.xlane.xlu0 %508
  %v510 = vsel %vm500, %v357, -inf
  %511 = vmax.xlane.f32.xlu0 %v510
  %v512 = vpop.xlane.xlu0 %511
  %v513 = vsel %vm500, %v362, -inf
  %514 = vmax.xlane.f32.xlu0 %v513
  %v515 = vpop.xlane.xlu0 %514
  %v516 = vsel %vm500, %v367, -inf
  %517 = vmax.xlane.f32.xlu0 %v516
  %v518 = vpop.xlane.xlu0 %517
  %v519 = vsel %vm500, %v372, -inf
  %520 = vmax.xlane.f32.xlu0 %v519
  %v521 = vpop.xlane.xlu0 %520
  %v522 = vsel %vm500, %v377, -inf
  %523 = vmax.xlane.f32.xlu0 %v522
  %v524 = vpop.xlane.xlu0 %523
  %v525 = vsel %vm500, %v382, -inf
  %526 = vmax.xlane.f32.xlu0 %v525
  %v527 = vpop.xlane.xlu0 %526
  %v528 = vsel %vm500, %v387, -inf
  %529 = vmax.xlane.f32.xlu0 %v528
  %v530 = vpop.xlane.xlu0 %529
  %v531 = vsel %vm500, %v392, -inf
  %532 = vmax.xlane.f32.xlu0 %v531
  %v533 = vpop.xlane.xlu0 %532
  %v534 = vsel %vm500, %v397, -inf
  %535 = vmax.xlane.f32.xlu0 %v534
  %v536 = vpop.xlane.xlu0 %535
  %v537 = vsel %vm500, %v402, -inf
  %538 = vmax.xlane.f32.xlu0 %v537
  %v539 = vpop.xlane.xlu0 %538
  %v540 = vsel %vm500, %v407, -inf
  %541 = vmax.xlane.f32.xlu0 %v540
  %v542 = vpop.xlane.xlu0 %541
  %v543 = vsel %vm500, %v412, -inf
  %544 = vmax.xlane.f32.xlu0 %v543
  %v545 = vpop.xlane.xlu0 %544
  %v546 = vsel %vm500, %v417, -inf
  %547 = vmax.xlane.f32.xlu0 %v546
  %v548 = vpop.xlane.xlu0 %547
  %v549 = vsel %vm500, %v422, -inf
  %550 = vmax.xlane.f32.xlu0 %v549
  %v551 = vpop.xlane.xlu0 %550
  %v552 = vsel %vm500, %v427, -inf
  %553 = vmax.xlane.f32.xlu0 %v552
  %v554 = vpop.xlane.xlu0 %553
  %v555 = vsel %vm500, %v432, -inf
  %556 = vmax.xlane.f32.xlu0 %v555
  %v557 = vpop.xlane.xlu0 %556
  %v558 = vsel %vm500, %v437, -inf
  %559 = vmax.xlane.f32.xlu0 %v558
  %v560 = vpop.xlane.xlu0 %559
  %v561 = vsel %vm500, %v442, -inf
  %562 = vmax.xlane.f32.xlu0 %v561
  %v563 = vpop.xlane.xlu0 %562
  %v564 = vsel %vm500, %v447, -inf
  %565 = vmax.xlane.f32.xlu0 %v564
  %v566 = vpop.xlane.xlu0 %565
  %v567 = vsel %vm500, %v452, -inf
  %568 = vmax.xlane.f32.xlu0 %v567
  %v569 = vpop.xlane.xlu0 %568
  %v570 = vsel %vm500, %v457, -inf
  %571 = vmax.xlane.f32.xlu0 %v570
  %v572 = vpop.xlane.xlu0 %571
  %v573 = vsel %vm500, %v462, -inf
  %574 = vmax.xlane.f32.xlu0 %v573
  %v575 = vpop.xlane.xlu0 %574
  %v576 = vsel %vm500, %v467, -inf
  %577 = vmax.xlane.f32.xlu0 %v576
  %v578 = vpop.xlane.xlu0 %577
  %v579 = vsel %vm500, %v472, -inf
  %580 = vmax.xlane.f32.xlu0 %v579
  %v581 = vpop.xlane.xlu0 %580
  %v582 = vsel %vm500, %v477, -inf
  %583 = vmax.xlane.f32.xlu0 %v582
  %v584 = vpop.xlane.xlu0 %583
  %v585 = vsel %vm500, %v482, -inf
  %586 = vmax.xlane.f32.xlu0 %v585
  %v587 = vpop.xlane.xlu0 %586
  %v588 = vsel %vm500, %v487, -inf
  %589 = vmax.xlane.f32.xlu0 %v588
  %v590 = vpop.xlane.xlu0 %589
  %v591 = vsel %vm500, %v492, -inf
  %592 = vmax.xlane.f32.xlu0 %v591
  %v593 = vpop.xlane.xlu0 %592
  %v594 = vsel %vm500, %v497, -inf
  %595 = vmax.xlane.f32.xlu0 %v594
  %v596 = vpop.xlane.xlu0 %595
  %v597 = vmax.f32 %v503, %v515
  %v598 = vmax.f32 %v506, %v518
  %v599 = vmax.f32 %v509, %v521
  %v600 = vmax.f32 %v512, %v524
  %v601 = vmax.f32 %v597, %v527
  %v602 = vmax.f32 %v598, %v530
  %v603 = vmax.f32 %v599, %v533
  %v604 = vmax.f32 %v600, %v536
  %v605 = vmax.f32 %v601, %v539
  %v606 = vmax.f32 %v602, %v542
  %v607 = vmax.f32 %v603, %v545
  %v608 = vmax.f32 %v604, %v548
  %v609 = vmax.f32 %v605, %v551
  %v610 = vmax.f32 %v606, %v554
  %v611 = vmax.f32 %v607, %v557
  %v612 = vmax.f32 %v608, %v560
  %v613 = vmax.f32 %v609, %v563
  %v614 = vmax.f32 %v610, %v566
  %v615 = vmax.f32 %v611, %v569
  %v616 = vmax.f32 %v612, %v572
  %v617 = vmax.f32 %v613, %v575
  %v618 = vmax.f32 %v614, %v578
  %v619 = vmax.f32 %v615, %v581
  %v620 = vmax.f32 %v616, %v584
  %v621 = vmax.f32 %v617, %v587
  %v622 = vmax.f32 %v618, %v590
  %v623 = vmax.f32 %v619, %v593
  %v624 = vmax.f32 %v620, %v596
  %v625 = vmax.f32 %v621, %v622
  %v626 = vmax.f32 %v623, %v624
  %v627 = vmax.f32 %v625, %v626
  %v628 = vrot.slane %v627, 4
  %v629 = vmax.f32 %v627, %v628
  %v630 = vrot.slane %v629, 2
  %v631 = vmax.f32 %v629, %v630
  %v632 = vrot.slane %v631, 1
  %v633 = vmax.f32 %v631, %v632
  %v634 = vsub.f32 %v342, %v633
  %v635 = vsub.f32 %v347, %v633
  %v636 = vsub.f32 %v352, %v633
  %v637 = vsub.f32 %v357, %v633
  %v638 = vsub.f32 %v362, %v633
  %v639 = vsub.f32 %v367, %v633
  %v640 = vsub.f32 %v372, %v633
  %v641 = vsub.f32 %v377, %v633
  %v642 = vsub.f32 %v382, %v633
  %v643 = vsub.f32 %v387, %v633
  %v644 = vsub.f32 %v392, %v633
  %v645 = vsub.f32 %v397, %v633
  %v646 = vsub.f32 %v402, %v633
  %v647 = vsub.f32 %v407, %v633
  %v648 = vsub.f32 %v412, %v633
  %v649 = vsub.f32 %v417, %v633
  %v650 = vsub.f32 %v422, %v633
  %v651 = vsub.f32 %v427, %v633
  %v652 = vsub.f32 %v432, %v633
  %v653 = vsub.f32 %v437, %v633
  %v654 = vsub.f32 %v442, %v633
  %v655 = vsub.f32 %v447, %v633
  %v656 = vsub.f32 %v452, %v633
  %v657 = vsub.f32 %v457, %v633
  %v658 = vsub.f32 %v462, %v633
  %v659 = vsub.f32 %v467, %v633
  %v660 = vsub.f32 %v472, %v633
  %v661 = vsub.f32 %v477, %v633
  %v662 = vsub.f32 %v482, %v633
  %v663 = vsub.f32 %v487, %v633
  %v664 = vsub.f32 %v492, %v633
  %v665 = vsub.f32 %v497, %v633
  %v666 = vmul.f32 %v634, 1.442695
  %v667 = vpow.pop %v666
  %v668 = vmul.f32 %v635, 1.442695
  %v669 = vpow.pop %v668
  %v670 = vmul.f32 %v636, 1.442695
  %v671 = vpow.pop %v670
  %v672 = vmul.f32 %v637, 1.442695
  %v673 = vpow.pop %v672
  %v674 = vmul.f32 %v638, 1.442695
  %v675 = vpow.pop %v674
  %v676 = vmul.f32 %v639, 1.442695
  %v677 = vpow.pop %v676
  %v678 = vmul.f32 %v640, 1.442695
  %v679 = vpow.pop %v678
  %v680 = vmul.f32 %v641, 1.442695
  %v681 = vpow.pop %v680
  %v682 = vmul.f32 %v642, 1.442695
  %v683 = vpow.pop %v682
  %v684 = vmul.f32 %v643, 1.442695
  %v685 = vpow.pop %v684
  %v686 = vmul.f32 %v644, 1.442695
  %v687 = vpow.pop %v686
  %v688 = vmul.f32 %v645, 1.442695
  %v689 = vpow.pop %v688
  %v690 = vmul.f32 %v646, 1.442695
  %v691 = vpow.pop %v690
  %v692 = vmul.f32 %v647, 1.442695
  %v693 = vpow.pop %v692
  %v694 = vmul.f32 %v648, 1.442695
  %v695 = vpow.pop %v694
  %v696 = vmul.f32 %v649, 1.442695
  %v697 = vpow.pop %v696
  %v698 = vmul.f32 %v650, 1.442695
  %v699 = vpow.pop %v698
  %v700 = vmul.f32 %v651, 1.442695
  %v701 = vpow.pop %v700
  %v702 = vmul.f32 %v652, 1.442695
  %v703 = vpow.pop %v702
  %v704 = vmul.f32 %v653, 1.442695
  %v705 = vpow.pop %v704
  %v706 = vmul.f32 %v654, 1.442695
  %v707 = vpow.pop %v706
  %v708 = vmul.f32 %v655, 1.442695
  %v709 = vpow.pop %v708
  %v710 = vmul.f32 %v656, 1.442695
  %v711 = vpow.pop %v710
  %v712 = vmul.f32 %v657, 1.442695
  %v713 = vpow.pop %v712
  %v714 = vmul.f32 %v658, 1.442695
  %v715 = vpow.pop %v714
  %v716 = vmul.f32 %v659, 1.442695
  %v717 = vpow.pop %v716
  %v718 = vmul.f32 %v660, 1.442695
  %v719 = vpow.pop %v718
  %v720 = vmul.f32 %v661, 1.442695
  %v721 = vpow.pop %v720
  %v722 = vmul.f32 %v662, 1.442695
  %v723 = vpow.pop %v722
  %v724 = vmul.f32 %v663, 1.442695
  %v725 = vpow.pop %v724
  %v726 = vmul.f32 %v664, 1.442695
  %v727 = vpow.pop %v726
  %v728 = vmul.f32 %v665, 1.442695
  %v729 = vpow.pop %v728
  %730 = vmatprep.subr.mxu0 0.0
  %731 = vmatpush1.msra.mxu0 %v697
  %732 = vmatprep.subr.mxu0 0.0
  %733 = vmatpush1.msra.mxu0 %v695
  %734 = vmatprep.subr.mxu0 0.0
  %735 = vmatpush1.msra.mxu0 %v693
  %736 = vmatprep.subr.mxu0 0.0
  %737 = vmatpush1.msra.mxu0 %v691
  %738 = vmatprep.subr.mxu0 0.0
  %739 = vmatpush1.msra.mxu0 %v689
  %740 = vmatprep.subr.mxu0 0.0
  %741 = vmatpush1.msra.mxu0 %v687
  %742 = vmatprep.subr.mxu0 0.0
  %743 = vmatpush1.msra.mxu0 %v685
  %744 = vmatprep.subr.mxu0 0.0
  %745 = vmatpush1.msra.mxu0 %v683
  %746 = vmatprep.subr.mxu0 0.0
  %747 = vmatpush1.msra.mxu0 %v681
  %748 = vmatprep.subr.mxu0 0.0
  %749 = vmatpush1.msra.mxu0 %v679
  %750 = vmatprep.subr.mxu0 0.0
  %751 = vmatpush1.msra.mxu0 %v677
  %752 = vmatprep.subr.mxu0 0.0
  %753 = vmatpush1.msra.mxu0 %v675
  %754 = vmatprep.subr.mxu0 0.0
  %755 = vmatpush1.msra.mxu0 %v673
  %756 = vmatprep.subr.mxu0 0.0
  %757 = vmatpush1.msra.mxu0 %v671
  %758 = vmatprep.subr.mxu0 0.0
  %759 = vmatpush1.msra.mxu0 %v669
  %760 = vmatprep.subr.mxu0 0.0
  %761 = vmatpush1.msra.mxu0 %v667
  %762 = vmatprep.subr.mxu0 0.0
  %763 = vmatpush2.msra.mxu0 %v729
  %764 = vmatprep.subr.mxu0 0.0
  %765 = vmatpush2.msra.mxu0 %v727
  %766 = vmatprep.subr.mxu0 0.0
  %767 = vmatpush2.msra.mxu0 %v725
  %768 = vmatprep.subr.mxu0 0.0
  %769 = vmatpush2.msra.mxu0 %v723
  %770 = vmatprep.subr.mxu0 0.0
  %771 = vmatpush2.msra.mxu0 %v721
  %772 = vmatprep.subr.mxu0 0.0
  %773 = vmatpush2.msra.mxu0 %v719
  %774 = vmatprep.subr.mxu0 0.0
  %775 = vmatpush2.msra.mxu0 %v717
  %776 = vmatprep.subr.mxu0 0.0
  %777 = vmatpush2.msra.mxu0 %v715
  %778 = vmatprep.subr.mxu0 0.0
  %779 = vmatpush2.msra.mxu0 %v713
  %780 = vmatprep.subr.mxu0 0.0
  %781 = vmatpush2.msra.mxu0 %v711
  %782 = vmatprep.subr.mxu0 0.0
  %783 = vmatpush2.msra.mxu0 %v709
  %784 = vmatprep.subr.mxu0 0.0
  %785 = vmatpush2.msra.mxu0 %v707
  %786 = vmatprep.subr.mxu0 0.0
  %787 = vmatpush2.msra.mxu0 %v705
  %788 = vmatprep.subr.mxu0 0.0
  %789 = vmatpush2.msra.mxu0 %v703
  %790 = vmatprep.subr.mxu0 0.0
  %791 = vmatpush2.msra.mxu0 %v701
  %792 = vmatprep.subr.mxu0 0.0
  %793 = vmatpush2.msra.mxu0 %v699
  %794 = vmatprep.mubr.f32.mxu0 %v85
  %795 = vmatmul.mubr.f32.gmra.mxu0 %v84
  %v796 = vpop.f32.mrf.mxu0
  %v797 = vadd.f32 0.0, %v796
  %v798 = vpop.f32.mrf.mxu0
  %799 = vmatprep.mubr.f32.mxu0 %v87
  %800 = vmatmul.mubr.f32.gmra.mxu0 %v86
  %v801 = vpop.f32.mrf.mxu0
  %v802 = vadd.f32 0.0, %v801
  %v803 = vpop.f32.mrf.mxu0
  %804 = vdwg.mxu0
  %v806 = vsel %vm500, %v797, 0
  %v809 = vsel %vm500, %v802, 0
  %811 = vmatprep.subr.mxu0 0.0
  %812 = vmatpush1.msra.mxu0 0.0
  %813 = vmatprep.subr.mxu0 0.0
  %814 = vmatpush1.msra.mxu0 0.0
  %815 = vmatprep.subr.mxu0 0.0
  %816 = vmatpush1.msra.mxu0 0.0
  %817 = vmatprep.subr.mxu0 0.0
  %818 = vmatpush1.msra.mxu0 0.0
  %819 = vmatprep.subr.mxu0 0.0
  %820 = vmatpush1.msra.mxu0 0.0
  %821 = vmatprep.subr.mxu0 0.0
  %822 = vmatpush1.msra.mxu0 0.0
  %823 = vmatprep.subr.mxu0 0.0
  %824 = vmatpush1.msra.mxu0 0.0
  %825 = vmatprep.subr.mxu0 0.0
  %826 = vmatpush1.msra.mxu0 0.0
  %827 = vmatprep.subr.mxu0 0.0
  %828 = vmatpush1.msra.mxu0 %v95
  %829 = vmatprep.subr.mxu0 0.0
  %830 = vmatpush1.msra.mxu0 %v94
  %831 = vmatprep.subr.mxu0 0.0
  %832 = vmatpush1.msra.mxu0 %v93
  %833 = vmatprep.subr.mxu0 0.0
  %834 = vmatpush1.msra.mxu0 %v92
  %835 = vmatprep.subr.mxu0 0.0
  %836 = vmatpush1.msra.mxu0 %v91
  %837 = vmatprep.subr.mxu0 0.0
  %838 = vmatpush1.msra.mxu0 %v90
  %839 = vmatprep.subr.mxu0 0.0
  %840 = vmatpush1.msra.mxu0 %v89
  %841 = vmatprep.subr.mxu0 0.0
  %842 = vmatpush1.msra.mxu0 %v88
  %843 = vmatprep.subr.mxu0 0.0
  %844 = vmatpush2.msra.mxu0 0.0
  %845 = vmatprep.subr.mxu0 0.0
  %846 = vmatpush2.msra.mxu0 0.0
  %847 = vmatprep.subr.mxu0 0.0
  %848 = vmatpush2.msra.mxu0 0.0
  %849 = vmatprep.subr.mxu0 0.0
  %850 = vmatpush2.msra.mxu0 0.0
  %851 = vmatprep.subr.mxu0 0.0
  %852 = vmatpush2.msra.mxu0 0.0
  %853 = vmatprep.subr.mxu0 0.0
  %854 = vmatpush2.msra.mxu0 0.0
  %855 = vmatprep.subr.mxu0 0.0
  %856 = vmatpush2.msra.mxu0 0.0
  %857 = vmatprep.subr.mxu0 0.0
  %858 = vmatpush2.msra.mxu0 0.0
  %859 = vmatprep.subr.mxu0 0.0
  %860 = vmatpush2.msra.mxu0 0.0
  %861 = vmatprep.subr.mxu0 0.0
  %862 = vmatpush2.msra.mxu0 0.0
  %863 = vmatprep.subr.mxu0 0.0
  %864 = vmatpush2.msra.mxu0 0.0
  %865 = vmatprep.subr.mxu0 0.0
  %866 = vmatpush2.msra.mxu0 0.0
  %867 = vmatprep.subr.mxu0 0.0
  %868 = vmatpush2.msra.mxu0 0.0
  %869 = vmatprep.subr.mxu0 0.0
  %870 = vmatpush2.msra.mxu0 0.0
  %871 = vmatprep.subr.mxu0 0.0
  %872 = vmatpush2.msra.mxu0 0.0
  %873 = vmatprep.subr.mxu0 0.0
  %874 = vmatpush2.msra.mxu0 0.0
  %875 = vmatprep.mubr.f32.mxu0 0.0
  %876 = vmatmul.mubr.f32.gmra.mxu0 %v806
  %v877 = vpop.f32.mrf.mxu0
  %v878 = vadd.f32 0.0, %v877
  %v879 = vpop.f32.mrf.mxu0
  %880 = vmatprep.mubr.f32.mxu0 0.0
  %881 = vmatmul.mubr.f32.gmra.mxu0 %v809
  %v882 = vpop.f32.mrf.mxu0
  %v883 = vadd.f32 0.0, %v882
  %v884 = vpop.f32.mrf.mxu0
  %885 = vdwg.mxu0
  %v886 = vrcp.pop %v878
  %v887 = vmul.f32 1.0, %v886
  %889 = vrot.lane.b32.xlu0 %v887, 8
  %v890 = vpop.permute.xlu0 %889
  %v892 = vmul.f32 %v878, %v890
  %v893 = vrot.slane %v887, 4
  %v895 = vmul.f32 %v878, %v893
  %v896 = vmul.f32 %v883, %v887
  %v897 = vld [vmem:[%s5] sm:$0xff]
  %v898 = vld [vmem:[%s5 + $0x8] sm:$0xff]
  %v899 = vld [vmem:[%s5 + $0x10] sm:$0xff]
  %v900 = vld [vmem:[%s5 + $0x18] sm:$0xff]
  %v901 = vld [vmem:[%s5 + $0x20] sm:$0xff]
  %v902 = vld [vmem:[%s5 + $0x28] sm:$0xff]
  %v903 = vld [vmem:[%s5 + $0x30] sm:$0xff]
  %v904 = vld [vmem:[%s5 + $0x38] sm:$0xff]
  %v905 = vld [vmem:[%s6] sm:$0x3]
  %v907 = vlaneseq
  %v908 = vshrl.u32 %v907, 7
  %v909 = vsub.s32 0, %v908
  %v910 = vrot.slane %v905, %v909
  %v911 = vlaneseq
  %v912 = vshrl.u32 %v911, 7
  %v913 = vsub.s32 1, %v912
  %v914 = vrot.slane %v905, %v913
  %v918 = vsel %vm178, %v171, 0
  %920 = vmatprep.subr.mxu0 0.0
  %921 = vmatpush1.msra.mxu0 0.0
  %922 = vmatprep.subr.mxu0 0.0
  %923 = vmatpush1.msra.mxu0 0.0
  %924 = vmatprep.subr.mxu0 0.0
  %925 = vmatpush1.msra.mxu0 0.0
  %926 = vmatprep.subr.mxu0 0.0
  %927 = vmatpush1.msra.mxu0 0.0
  %928 = vmatprep.subr.mxu0 0.0
  %929 = vmatpush1.msra.mxu0 0.0
  %930 = vmatprep.subr.mxu0 0.0
  %931 = vmatpush1.msra.mxu0 0.0
  %932 = vmatprep.subr.mxu0 0.0
  %933 = vmatpush1.msra.mxu0 0.0
  %934 = vmatprep.subr.mxu0 0.0
  %935 = vmatpush1.msra.mxu0 0.0
  %936 = vmatprep.subr.mxu0 0.0
  %937 = vmatpush1.msra.mxu0 0.0
  %938 = vmatprep.subr.mxu0 0.0
  %939 = vmatpush1.msra.mxu0 0.0
  %940 = vmatprep.subr.mxu0 0.0
  %941 = vmatpush1.msra.mxu0 0.0
  %942 = vmatprep.subr.mxu0 0.0
  %943 = vmatpush1.msra.mxu0 0.0
  %944 = vmatprep.subr.mxu0 %v904
  %945 = vmatpush1.msra.mxu0 %v903
  %946 = vmatprep.subr.mxu0 %v902
  %947 = vmatpush1.msra.mxu0 %v901
  %948 = vmatprep.subr.mxu0 %v900
  %949 = vmatpush1.msra.mxu0 %v899
  %950 = vmatprep.subr.mxu0 %v898
  %951 = vmatpush1.msra.mxu0 %v897
  %952 = vmatprep.subr.mxu0 0.0
  %953 = vmatpush2.msra.mxu0 0.0
  %954 = vmatprep.subr.mxu0 0.0
  %955 = vmatpush2.msra.mxu0 0.0
  %956 = vmatprep.subr.mxu0 0.0
  %957 = vmatpush2.msra.mxu0 0.0
  %958 = vmatprep.subr.mxu0 0.0
  %959 = vmatpush2.msra.mxu0 0.0
  %960 = vmatprep.subr.mxu0 0.0
  %961 = vmatpush2.msra.mxu0 0.0
  %962 = vmatprep.subr.mxu0 0.0
  %963 = vmatpush2.msra.mxu0 0.0
  %964 = vmatprep.subr.mxu0 0.0
  %965 = vmatpush2.msra.mxu0 0.0
  %966 = vmatprep.subr.mxu0 0.0
  %967 = vmatpush2.msra.mxu0 0.0
  %968 = vmatprep.subr.mxu0 0.0
  %969 = vmatpush2.msra.mxu0 0.0
  %970 = vmatprep.subr.mxu0 0.0
  %971 = vmatpush2.msra.mxu0 0.0
  %972 = vmatprep.subr.mxu0 0.0
  %973 = vmatpush2.msra.mxu0 0.0
  %974 = vmatprep.subr.mxu0 0.0
  %975 = vmatpush2.msra.mxu0 0.0
  %976 = vmatprep.subr.mxu0 0.0
  %977 = vmatpush2.msra.mxu0 0.0
  %978 = vmatprep.subr.mxu0 0.0
  %979 = vmatpush2.msra.mxu0 0.0
  %980 = vmatprep.subr.mxu0 0.0
  %981 = vmatpush2.msra.mxu0 0.0
  %982 = vmatprep.subr.mxu0 0.0
  %983 = vmatpush2.msra.mxu0 0.0
  %984 = vmatprep.mubr.f32.mxu0 0.0
  %985 = vmatmul.mubr.f32.gmra.mxu0 %v918
  %v986 = vpop.f32.mrf.mxu0
  %v987 = vadd.f32 %v910, %v986
  %v988 = vpop.f32.mrf.mxu0
  %v989 = vadd.f32 %v914, %v988
  %990 = vdwg.mxu0
  %v991 = vld [vmem:[%s7] sm:$0xff]
  %v992 = vld [vmem:[%s7 + $0x8] sm:$0xff]
  %v994 = vrot.slane %v895, 4
  %vm995 = vcmask 64512
  %v996 = vsel %vm995, %v994, 0
  %998 = vmatprep.subr.mxu0 0.0
  %999 = vmatpush1.msra.mxu0 0.0
  %1000 = vmatprep.subr.mxu0 0.0
  %1001 = vmatpush1.msra.mxu0 0.0
  %1002 = vmatprep.subr.mxu0 0.0
  %1003 = vmatpush1.msra.mxu0 0.0
  %1004 = vmatprep.subr.mxu0 0.0
  %1005 = vmatpush1.msra.mxu0 0.0
  %1006 = vmatprep.subr.mxu0 0.0
  %1007 = vmatpush1.msra.mxu0 0.0
  %1008 = vmatprep.subr.mxu0 0.0
  %1009 = vmatpush1.msra.mxu0 0.0
  %1010 = vmatprep.subr.mxu0 0.0
  %1011 = vmatpush1.msra.mxu0 0.0
  %1012 = vmatprep.subr.mxu0 0.0
  %1013 = vmatpush1.msra.mxu0 0.0
  %1014 = vmatprep.subr.mxu0 0.0
  %1015 = vmatpush1.msra.mxu0 0.0
  %1016 = vmatprep.subr.mxu0 0.0
  %1017 = vmatpush1.msra.mxu0 0.0
  %1018 = vmatprep.subr.mxu0 0.0
  %1019 = vmatpush1.msra.mxu0 0.0
  %1020 = vmatprep.subr.mxu0 0.0
  %1021 = vmatpush1.msra.mxu0 0.0
  %1022 = vmatprep.subr.mxu0 0.0
  %1023 = vmatpush1.msra.mxu0 0.0
  %1024 = vmatprep.subr.mxu0 0.0
  %1025 = vmatpush1.msra.mxu0 0.0
  %1026 = vmatprep.subr.mxu0 0.0
  %1027 = vmatpush1.msra.mxu0 0.0
  %1028 = vmatprep.subr.mxu0 %v992
  %1029 = vmatpush1.msra.mxu0 %v991
  %1030 = vmatprep.subr.mxu0 0.0
  %1031 = vmatpush2.msra.mxu0 0.0
  %1032 = vmatprep.subr.mxu0 0.0
  %1033 = vmatpush2.msra.mxu0 0.0
  %1034 = vmatprep.subr.mxu0 0.0
  %1035 = vmatpush2.msra.mxu0 0.0
  %1036 = vmatprep.subr.mxu0 0.0
  %1037 = vmatpush2.msra.mxu0 0.0
  %1038 = vmatprep.subr.mxu0 0.0
  %1039 = vmatpush2.msra.mxu0 0.0
  %1040 = vmatprep.subr.mxu0 0.0
  %1041 = vmatpush2.msra.mxu0 0.0
  %1042 = vmatprep.subr.mxu0 0.0
  %1043 = vmatpush2.msra.mxu0 0.0
  %1044 = vmatprep.subr.mxu0 0.0
  %1045 = vmatpush2.msra.mxu0 0.0
  %1046 = vmatprep.subr.mxu0 0.0
  %1047 = vmatpush2.msra.mxu0 0.0
  %1048 = vmatprep.subr.mxu0 0.0
  %1049 = vmatpush2.msra.mxu0 0.0
  %1050 = vmatprep.subr.mxu0 0.0
  %1051 = vmatpush2.msra.mxu0 0.0
  %1052 = vmatprep.subr.mxu0 0.0
  %1053 = vmatpush2.msra.mxu0 0.0
  %1054 = vmatprep.subr.mxu0 0.0
  %1055 = vmatpush2.msra.mxu0 0.0
  %1056 = vmatprep.subr.mxu0 0.0
  %1057 = vmatpush2.msra.mxu0 0.0
  %1058 = vmatprep.subr.mxu0 0.0
  %1059 = vmatpush2.msra.mxu0 0.0
  %1060 = vmatprep.subr.mxu0 0.0
  %1061 = vmatpush2.msra.mxu0 0.0
  %1062 = vmatprep.mubr.f32.mxu0 0.0
  %1063 = vmatmul.mubr.f32.gmra.mxu0 %v996
  %v1064 = vpop.f32.mrf.mxu0
  %v1065 = vadd.f32 0.0, %v1064
  %v1066 = vpop.f32.mrf.mxu0
  %v1067 = vadd.f32 0.0, %v1066
  %1068 = vdwg.mxu0
  %v1069 = vadd.f32 %v987, %v1065
  %v1070 = vadd.f32 %v989, %v1067
  %v1071 = vld [vmem:[%s8] sm:$0xff]
  %v1072 = vld [vmem:[%s8 + $0x8] sm:$0xff]
  %v1074 = vsel %vm995, %v896, 0
  %1076 = vmatprep.subr.mxu0 0.0
  %1077 = vmatpush1.msra.mxu0 0.0
  %1078 = vmatprep.subr.mxu0 0.0
  %1079 = vmatpush1.msra.mxu0 0.0
  %1080 = vmatprep.subr.mxu0 0.0
  %1081 = vmatpush1.msra.mxu0 0.0
  %1082 = vmatprep.subr.mxu0 0.0
  %1083 = vmatpush1.msra.mxu0 0.0
  %1084 = vmatprep.subr.mxu0 0.0
  %1085 = vmatpush1.msra.mxu0 0.0
  %1086 = vmatprep.subr.mxu0 0.0
  %1087 = vmatpush1.msra.mxu0 0.0
  %1088 = vmatprep.subr.mxu0 0.0
  %1089 = vmatpush1.msra.mxu0 0.0
  %1090 = vmatprep.subr.mxu0 0.0
  %1091 = vmatpush1.msra.mxu0 0.0
  %1092 = vmatprep.subr.mxu0 0.0
  %1093 = vmatpush1.msra.mxu0 0.0
  %1094 = vmatprep.subr.mxu0 0.0
  %1095 = vmatpush1.msra.mxu0 0.0
  %1096 = vmatprep.subr.mxu0 0.0
  %1097 = vmatpush1.msra.mxu0 0.0
  %1098 = vmatprep.subr.mxu0 0.0
  %1099 = vmatpush1.msra.mxu0 0.0
  %1100 = vmatprep.subr.mxu0 0.0
  %1101 = vmatpush1.msra.mxu0 0.0
  %1102 = vmatprep.subr.mxu0 0.0
  %1103 = vmatpush1.msra.mxu0 0.0
  %1104 = vmatprep.subr.mxu0 0.0
  %1105 = vmatpush1.msra.mxu0 0.0
  %1106 = vmatprep.subr.mxu0 %v1072
  %1107 = vmatpush1.msra.mxu0 %v1071
  %1108 = vmatprep.subr.mxu0 0.0
  %1109 = vmatpush2.msra.mxu0 0.0
  %1110 = vmatprep.subr.mxu0 0.0
  %1111 = vmatpush2.msra.mxu0 0.0
  %1112 = vmatprep.subr.mxu0 0.0
  %1113 = vmatpush2.msra.mxu0 0.0
  %1114 = vmatprep.subr.mxu0 0.0
  %1115 = vmatpush2.msra.mxu0 0.0
  %1116 = vmatprep.subr.mxu0 0.0
  %1117 = vmatpush2.msra.mxu0 0.0
  %1118 = vmatprep.subr.mxu0 0.0
  %1119 = vmatpush2.msra.mxu0 0.0
  %1120 = vmatprep.subr.mxu0 0.0
  %1121 = vmatpush2.msra.mxu0 0.0
  %1122 = vmatprep.subr.mxu0 0.0
  %1123 = vmatpush2.msra.mxu0 0.0
  %1124 = vmatprep.subr.mxu0 0.0
  %1125 = vmatpush2.msra.mxu0 0.0
  %1126 = vmatprep.subr.mxu0 0.0
  %1127 = vmatpush2.msra.mxu0 0.0
  %1128 = vmatprep.subr.mxu0 0.0
  %1129 = vmatpush2.msra.mxu0 0.0
  %1130 = vmatprep.subr.mxu0 0.0
  %1131 = vmatpush2.msra.mxu0 0.0
  %1132 = vmatprep.subr.mxu0 0.0
  %1133 = vmatpush2.msra.mxu0 0.0
  %1134 = vmatprep.subr.mxu0 0.0
  %1135 = vmatpush2.msra.mxu0 0.0
  %1136 = vmatprep.subr.mxu0 0.0
  %1137 = vmatpush2.msra.mxu0 0.0
  %1138 = vmatprep.subr.mxu0 0.0
  %1139 = vmatpush2.msra.mxu0 0.0
  %1140 = vmatprep.mubr.f32.mxu0 0.0
  %1141 = vmatmul.mubr.f32.gmra.mxu0 %v1074
  %v1142 = vpop.f32.mrf.mxu0
  %v1143 = vadd.f32 0.0, %v1142
  %v1144 = vpop.f32.mrf.mxu0
  %v1145 = vadd.f32 0.0, %v1144
  %1146 = vdwg.mxu0
  %v1147 = vadd.f32 %v1069, %v1143
  %v1148 = vadd.f32 %v1070, %v1145
  %v1149 = vld [vmem:[%s9] sm:$0xff]
  %v1150 = vld [vmem:[%s9 + $0x8] sm:$0xff]
  %1152 = vrot.lane.b32.xlu0 %v892, 120
  %v1153 = vpop.permute.xlu0 %1152
  %v1154 = vsel %vm995, %v1153, 0
  %1156 = vmatprep.subr.mxu0 0.0
  %1157 = vmatpush1.msra.mxu0 0.0
  %1158 = vmatprep.subr.mxu0 0.0
  %1159 = vmatpush1.msra.mxu0 0.0
  %1160 = vmatprep.subr.mxu0 0.0
  %1161 = vmatpush1.msra.mxu0 0.0
  %1162 = vmatprep.subr.mxu0 0.0
  %1163 = vmatpush1.msra.mxu0 0.0
  %1164 = vmatprep.subr.mxu0 0.0
  %1165 = vmatpush1.msra.mxu0 0.0
  %1166 = vmatprep.subr.mxu0 0.0
  %1167 = vmatpush1.msra.mxu0 0.0
  %1168 = vmatprep.subr.mxu0 0.0
  %1169 = vmatpush1.msra.mxu0 0.0
  %1170 = vmatprep.subr.mxu0 0.0
  %1171 = vmatpush1.msra.mxu0 0.0
  %1172 = vmatprep.subr.mxu0 0.0
  %1173 = vmatpush1.msra.mxu0 0.0
  %1174 = vmatprep.subr.mxu0 0.0
  %1175 = vmatpush1.msra.mxu0 0.0
  %1176 = vmatprep.subr.mxu0 0.0
  %1177 = vmatpush1.msra.mxu0 0.0
  %1178 = vmatprep.subr.mxu0 0.0
  %1179 = vmatpush1.msra.mxu0 0.0
  %1180 = vmatprep.subr.mxu0 0.0
  %1181 = vmatpush1.msra.mxu0 0.0
  %1182 = vmatprep.subr.mxu0 0.0
  %1183 = vmatpush1.msra.mxu0 0.0
  %1184 = vmatprep.subr.mxu0 0.0
  %1185 = vmatpush1.msra.mxu0 0.0
  %1186 = vmatprep.subr.mxu0 %v1150
  %1187 = vmatpush1.msra.mxu0 %v1149
  %1188 = vmatprep.subr.mxu0 0.0
  %1189 = vmatpush2.msra.mxu0 0.0
  %1190 = vmatprep.subr.mxu0 0.0
  %1191 = vmatpush2.msra.mxu0 0.0
  %1192 = vmatprep.subr.mxu0 0.0
  %1193 = vmatpush2.msra.mxu0 0.0
  %1194 = vmatprep.subr.mxu0 0.0
  %1195 = vmatpush2.msra.mxu0 0.0
  %1196 = vmatprep.subr.mxu0 0.0
  %1197 = vmatpush2.msra.mxu0 0.0
  %1198 = vmatprep.subr.mxu0 0.0
  %1199 = vmatpush2.msra.mxu0 0.0
  %1200 = vmatprep.subr.mxu0 0.0
  %1201 = vmatpush2.msra.mxu0 0.0
  %1202 = vmatprep.subr.mxu0 0.0
  %1203 = vmatpush2.msra.mxu0 0.0
  %1204 = vmatprep.subr.mxu0 0.0
  %1205 = vmatpush2.msra.mxu0 0.0
  %1206 = vmatprep.subr.mxu0 0.0
  %1207 = vmatpush2.msra.mxu0 0.0
  %1208 = vmatprep.subr.mxu0 0.0
  %1209 = vmatpush2.msra.mxu0 0.0
  %1210 = vmatprep.subr.mxu0 0.0
  %1211 = vmatpush2.msra.mxu0 0.0
  %1212 = vmatprep.subr.mxu0 0.0
  %1213 = vmatpush2.msra.mxu0 0.0
  %1214 = vmatprep.subr.mxu0 0.0
  %1215 = vmatpush2.msra.mxu0 0.0
  %1216 = vmatprep.subr.mxu0 0.0
  %1217 = vmatpush2.msra.mxu0 0.0
  %1218 = vmatprep.subr.mxu0 0.0
  %1219 = vmatpush2.msra.mxu0 0.0
  %1220 = vmatprep.mubr.f32.mxu0 0.0
  %1221 = vmatmul.mubr.f32.gmra.mxu0 %v1154
  %v1222 = vpop.f32.mrf.mxu0
  %v1223 = vadd.f32 0.0, %v1222
  %v1224 = vpop.f32.mrf.mxu0
  %v1225 = vadd.f32 0.0, %v1224
  %1226 = vdwg.mxu0
  %v1227 = vadd.f32 %v1147, %v1223
  %v1228 = vadd.f32 %v1148, %v1225
  %v1229 = vrot.slane %v896, 4
  %1230 = vrot.lane.b32.xlu0 %v1229, 8
  %v1231 = vpop.permute.xlu0 %1230
  %v1233 = vrot.slane %v892, 4
  %1234 = vrot.lane.b32.xlu0 %v1233, 8
  %v1235 = vpop.permute.xlu0 %1234
  %v1237 = vsel %vm995, %v895, %v1231
  %vm1238 = vcmask 130048
  %v1239 = vsel %vm1238, %v1237, %v1235
  %vm1240 = vcmask 195588
  %1241 = vst.msk [vmem:[%s15 - $0x4] sm:$0xf0] %vm1240, %v1239
  %v1242 = vld [vmem:[%s10] sm:$0xff]
  %v1243 = vld [vmem:[%s10 + $0x8] sm:$0xff]
  %v1244 = vld [vmem:[%s10 + $0x10] sm:$0xff]
  %v1245 = vld [vmem:[%s10 + $0x18] sm:$0xff]
  %v1246 = vld [vmem:[%s10 + $0x20] sm:$0xff]
  %v1247 = vld [vmem:[%s10 + $0x28] sm:$0xff]
  %v1248 = vld [vmem:[%s10 + $0x30] sm:$0xff]
  %v1249 = vld [vmem:[%s10 + $0x38] sm:$0xff]
  %v1250 = vld [vmem:[%s10 + $0x40] sm:$0xff]
  %v1251 = vld [vmem:[%s10 + $0x48] sm:$0xff]
  %v1252 = vld [vmem:[%s10 + $0x50] sm:$0xff]
  %v1253 = vld [vmem:[%s10 + $0x58] sm:$0xff]
  %v1254 = vld [vmem:[%s10 + $0x60] sm:$0xff]
  %v1255 = vld [vmem:[%s10 + $0x68] sm:$0xff]
  %v1256 = vld [vmem:[%s10 + $0x70] sm:$0xff]
  %v1257 = vld [vmem:[%s10 + $0x78] sm:$0xff]
  %v1258 = vld [vmem:[%s10 + $0x80] sm:$0xff]
  %v1259 = vld [vmem:[%s10 + $0x88] sm:$0xff]
  %v1260 = vld [vmem:[%s10 + $0x90] sm:$0xff]
  %v1261 = vld [vmem:[%s10 + $0x98] sm:$0xff]
  %v1262 = vld [vmem:[%s10 + $0xa0] sm:$0xff]
  %v1263 = vld [vmem:[%s10 + $0xa8] sm:$0xff]
  %v1264 = vld [vmem:[%s10 + $0xb0] sm:$0xff]
  %v1265 = vld [vmem:[%s10 + $0xb8] sm:$0xff]
  %v1266 = vld [vmem:[%s10 + $0xc0] sm:$0xff]
  %v1267 = vld [vmem:[%s10 + $0xc8] sm:$0xff]
  %v1268 = vld [vmem:[%s10 + $0xd0] sm:$0xff]
  %v1269 = vld [vmem:[%s10 + $0xd8] sm:$0xff]
  %v1270 = vld [vmem:[%s10 + $0xe0] sm:$0xff]
  %v1271 = vld [vmem:[%s10 + $0xe8] sm:$0xff]
  %v1272 = vld [vmem:[%s10 + $0xf0] sm:$0xff]
  %v1273 = vld [vmem:[%s10 + $0xf8] sm:$0xff]
  %v1274 = vld [vmem:[%s11] sm:$0xff]
  %1275 = vmatprep.subr.mxu0 0.0
  %1276 = vmatpush1.msra.mxu0 0.0
  %1277 = vmatprep.subr.mxu0 0.0
  %1278 = vmatpush1.msra.mxu0 0.0
  %1279 = vmatprep.subr.mxu0 0.0
  %1280 = vmatpush1.msra.mxu0 0.0
  %1281 = vmatprep.subr.mxu0 0.0
  %1282 = vmatpush1.msra.mxu0 0.0
  %1283 = vmatprep.subr.mxu0 0.0
  %1284 = vmatpush1.msra.mxu0 0.0
  %1285 = vmatprep.subr.mxu0 0.0
  %1286 = vmatpush1.msra.mxu0 0.0
  %1287 = vmatprep.subr.mxu0 0.0
  %1288 = vmatpush1.msra.mxu0 0.0
  %1289 = vmatprep.subr.mxu0 0.0
  %1290 = vmatpush1.msra.mxu0 0.0
  %1291 = vmatprep.subr.mxu0 0.0
  %1292 = vmatpush1.msra.mxu0 0.0
  %1293 = vmatprep.subr.mxu0 0.0
  %1294 = vmatpush1.msra.mxu0 0.0
  %1295 = vmatprep.subr.mxu0 0.0
  %1296 = vmatpush1.msra.mxu0 0.0
  %1297 = vmatprep.subr.mxu0 0.0
  %1298 = vmatpush1.msra.mxu0 0.0
  %1299 = vmatprep.subr.mxu0 0.0
  %1300 = vmatpush1.msra.mxu0 0.0
  %1301 = vmatprep.subr.mxu0 0.0
  %1302 = vmatpush1.msra.mxu0 0.0
  %1303 = vmatprep.subr.mxu0 0.0
  %1304 = vmatpush1.msra.mxu0 0.0
  %1305 = vmatprep.subr.mxu0 0.0
  %1306 = vmatpush1.msra.mxu0 %v1274
  %1307 = vmatprep.subr.mxu0 0.0
  %1308 = vmatpush2.msra.mxu0 0.0
  %1309 = vmatprep.subr.mxu0 0.0
  %1310 = vmatpush2.msra.mxu0 0.0
  %1311 = vmatprep.subr.mxu0 0.0
  %1312 = vmatpush2.msra.mxu0 0.0
  %1313 = vmatprep.subr.mxu0 0.0
  %1314 = vmatpush2.msra.mxu0 0.0
  %1315 = vmatprep.subr.mxu0 0.0
  %1316 = vmatpush2.msra.mxu0 0.0
  %1317 = vmatprep.subr.mxu0 0.0
  %1318 = vmatpush2.msra.mxu0 0.0
  %1319 = vmatprep.subr.mxu0 0.0
  %1320 = vmatpush2.msra.mxu0 0.0
  %1321 = vmatprep.subr.mxu0 0.0
  %1322 = vmatpush2.msra.mxu0 0.0
  %1323 = vmatprep.subr.mxu0 0.0
  %1324 = vmatpush2.msra.mxu0 0.0
  %1325 = vmatprep.subr.mxu0 0.0
  %1326 = vmatpush2.msra.mxu0 0.0
  %1327 = vmatprep.subr.mxu0 0.0
  %1328 = vmatpush2.msra.mxu0 0.0
  %1329 = vmatprep.subr.mxu0 0.0
  %1330 = vmatpush2.msra.mxu0 0.0
  %1331 = vmatprep.subr.mxu0 0.0
  %1332 = vmatpush2.msra.mxu0 0.0
  %1333 = vmatprep.subr.mxu0 0.0
  %1334 = vmatpush2.msra.mxu0 0.0
  %1335 = vmatprep.subr.mxu0 0.0
  %1336 = vmatpush2.msra.mxu0 0.0
  %1337 = vmatprep.subr.mxu0 0.0
  %1338 = vmatpush2.msra.mxu0 0.0
  %1339 = vmatprep.mubr.f32.mxu0 0.0
  %1340 = vmatmul.mubr.f32.gmra.mxu0 %v996
  %v1341 = vpop.f32.mrf.mxu0
  %v1342 = vadd.f32 0.0, %v1341
  %v1343 = vpop.f32.mrf.mxu0
  %1344 = vdwg.mxu0
  %1345 = vmatprep.subr.mxu0 0.0
  %1346 = vmatpush1.msra.mxu0 %v1257
  %1347 = vmatprep.subr.mxu0 0.0
  %1348 = vmatpush1.msra.mxu0 %v1256
  %1349 = vmatprep.subr.mxu0 0.0
  %1350 = vmatpush1.msra.mxu0 %v1255
  %1351 = vmatprep.subr.mxu0 0.0
  %1352 = vmatpush1.msra.mxu0 %v1254
  %1353 = vmatprep.subr.mxu0 0.0
  %1354 = vmatpush1.msra.mxu0 %v1253
  %1355 = vmatprep.subr.mxu0 0.0
  %1356 = vmatpush1.msra.mxu0 %v1252
  %1357 = vmatprep.subr.mxu0 0.0
  %1358 = vmatpush1.msra.mxu0 %v1251
  %1359 = vmatprep.subr.mxu0 0.0
  %1360 = vmatpush1.msra.mxu0 %v1250
  %1361 = vmatprep.subr.mxu0 0.0
  %1362 = vmatpush1.msra.mxu0 %v1249
  %1363 = vmatprep.subr.mxu0 0.0
  %1364 = vmatpush1.msra.mxu0 %v1248
  %1365 = vmatprep.subr.mxu0 0.0
  %1366 = vmatpush1.msra.mxu0 %v1247
  %1367 = vmatprep.subr.mxu0 0.0
  %1368 = vmatpush1.msra.mxu0 %v1246
  %1369 = vmatprep.subr.mxu0 0.0
  %1370 = vmatpush1.msra.mxu0 %v1245
  %1371 = vmatprep.subr.mxu0 0.0
  %1372 = vmatpush1.msra.mxu0 %v1244
  %1373 = vmatprep.subr.mxu0 0.0
  %1374 = vmatpush1.msra.mxu0 %v1243
  %1375 = vmatprep.subr.mxu0 0.0
  %1376 = vmatpush1.msra.mxu0 %v1242
  %1377 = vmatprep.subr.mxu0 0.0
  %1378 = vmatpush2.msra.mxu0 %v1273
  %1379 = vmatprep.subr.mxu0 0.0
  %1380 = vmatpush2.msra.mxu0 %v1272
  %1381 = vmatprep.subr.mxu0 0.0
  %1382 = vmatpush2.msra.mxu0 %v1271
  %1383 = vmatprep.subr.mxu0 0.0
  %1384 = vmatpush2.msra.mxu0 %v1270
  %1385 = vmatprep.subr.mxu0 0.0
  %1386 = vmatpush2.msra.mxu0 %v1269
  %1387 = vmatprep.subr.mxu0 0.0
  %1388 = vmatpush2.msra.mxu0 %v1268
  %1389 = vmatprep.subr.mxu0 0.0
  %1390 = vmatpush2.msra.mxu0 %v1267
  %1391 = vmatprep.subr.mxu0 0.0
  %1392 = vmatpush2.msra.mxu0 %v1266
  %1393 = vmatprep.subr.mxu0 0.0
  %1394 = vmatpush2.msra.mxu0 %v1265
  %1395 = vmatprep.subr.mxu0 0.0
  %1396 = vmatpush2.msra.mxu0 %v1264
  %1397 = vmatprep.subr.mxu0 0.0
  %1398 = vmatpush2.msra.mxu0 %v1263
  %1399 = vmatprep.subr.mxu0 0.0
  %1400 = vmatpush2.msra.mxu0 %v1262
  %1401 = vmatprep.subr.mxu0 0.0
  %1402 = vmatpush2.msra.mxu0 %v1261
  %1403 = vmatprep.subr.mxu0 0.0
  %1404 = vmatpush2.msra.mxu0 %v1260
  %1405 = vmatprep.subr.mxu0 0.0
  %1406 = vmatpush2.msra.mxu0 %v1259
  %1407 = vmatprep.subr.mxu0 0.0
  %1408 = vmatpush2.msra.mxu0 %v1258
  %1409 = vmatprep.mubr.f32.mxu0 %v1228
  %1410 = vmatmul.mubr.f32.gmra.mxu0 %v1227
  %v1411 = vpop.f32.mrf.mxu0
  %v1412 = vadd.f32 %v1342, %v1411
  %v1413 = vpop.f32.mrf.mxu0
  %1414 = vdwg.mxu0
  %v1415 = vld [vmem:[%s12] sm:$0xff]
  %1416 = vmatprep.subr.mxu0 0.0
  %1417 = vmatpush1.msra.mxu0 0.0
  %1418 = vmatprep.subr.mxu0 0.0
  %1419 = vmatpush1.msra.mxu0 0.0
  %1420 = vmatprep.subr.mxu0 0.0
  %1421 = vmatpush1.msra.mxu0 0.0
  %1422 = vmatprep.subr.mxu0 0.0
  %1423 = vmatpush1.msra.mxu0 0.0
  %1424 = vmatprep.subr.mxu0 0.0
  %1425 = vmatpush1.msra.mxu0 0.0
  %1426 = vmatprep.subr.mxu0 0.0
  %1427 = vmatpush1.msra.mxu0 0.0
  %1428 = vmatprep.subr.mxu0 0.0
  %1429 = vmatpush1.msra.mxu0 0.0
  %1430 = vmatprep.subr.mxu0 0.0
  %1431 = vmatpush1.msra.mxu0 0.0
  %1432 = vmatprep.subr.mxu0 0.0
  %1433 = vmatpush1.msra.mxu0 0.0
  %1434 = vmatprep.subr.mxu0 0.0
  %1435 = vmatpush1.msra.mxu0 0.0
  %1436 = vmatprep.subr.mxu0 0.0
  %1437 = vmatpush1.msra.mxu0 0.0
  %1438 = vmatprep.subr.mxu0 0.0
  %1439 = vmatpush1.msra.mxu0 0.0
  %1440 = vmatprep.subr.mxu0 0.0
  %1441 = vmatpush1.msra.mxu0 0.0
  %1442 = vmatprep.subr.mxu0 0.0
  %1443 = vmatpush1.msra.mxu0 0.0
  %1444 = vmatprep.subr.mxu0 0.0
  %1445 = vmatpush1.msra.mxu0 0.0
  %1446 = vmatprep.subr.mxu0 0.0
  %1447 = vmatpush1.msra.mxu0 %v1415
  %1448 = vmatprep.subr.mxu0 0.0
  %1449 = vmatpush2.msra.mxu0 0.0
  %1450 = vmatprep.subr.mxu0 0.0
  %1451 = vmatpush2.msra.mxu0 0.0
  %1452 = vmatprep.subr.mxu0 0.0
  %1453 = vmatpush2.msra.mxu0 0.0
  %1454 = vmatprep.subr.mxu0 0.0
  %1455 = vmatpush2.msra.mxu0 0.0
  %1456 = vmatprep.subr.mxu0 0.0
  %1457 = vmatpush2.msra.mxu0 0.0
  %1458 = vmatprep.subr.mxu0 0.0
  %1459 = vmatpush2.msra.mxu0 0.0
  %1460 = vmatprep.subr.mxu0 0.0
  %1461 = vmatpush2.msra.mxu0 0.0
  %1462 = vmatprep.subr.mxu0 0.0
  %1463 = vmatpush2.msra.mxu0 0.0
  %1464 = vmatprep.subr.mxu0 0.0
  %1465 = vmatpush2.msra.mxu0 0.0
  %1466 = vmatprep.subr.mxu0 0.0
  %1467 = vmatpush2.msra.mxu0 0.0
  %1468 = vmatprep.subr.mxu0 0.0
  %1469 = vmatpush2.msra.mxu0 0.0
  %1470 = vmatprep.subr.mxu0 0.0
  %1471 = vmatpush2.msra.mxu0 0.0
  %1472 = vmatprep.subr.mxu0 0.0
  %1473 = vmatpush2.msra.mxu0 0.0
  %1474 = vmatprep.subr.mxu0 0.0
  %1475 = vmatpush2.msra.mxu0 0.0
  %1476 = vmatprep.subr.mxu0 0.0
  %1477 = vmatpush2.msra.mxu0 0.0
  %1478 = vmatprep.subr.mxu0 0.0
  %1479 = vmatpush2.msra.mxu0 0.0
  %1480 = vmatprep.mubr.f32.mxu0 0.0
  %1481 = vmatmul.mubr.f32.gmra.mxu0 %v1074
  %v1482 = vpop.f32.mrf.mxu0
  %v1483 = vadd.f32 0.0, %v1482
  %v1484 = vpop.f32.mrf.mxu0
  %1485 = vdwg.mxu0
  %v1486 = vadd.f32 %v1412, %v1483
  %v1487 = vld [vmem:[%s13] sm:$0xff]
  %1488 = vmatprep.subr.mxu0 0.0
  %1489 = vmatpush1.msra.mxu0 0.0
  %1490 = vmatprep.subr.mxu0 0.0
  %1491 = vmatpush1.msra.mxu0 0.0
  %1492 = vmatprep.subr.mxu0 0.0
  %1493 = vmatpush1.msra.mxu0 0.0
  %1494 = vmatprep.subr.mxu0 0.0
  %1495 = vmatpush1.msra.mxu0 0.0
  %1496 = vmatprep.subr.mxu0 0.0
  %1497 = vmatpush1.msra.mxu0 0.0
  %1498 = vmatprep.subr.mxu0 0.0
  %1499 = vmatpush1.msra.mxu0 0.0
  %1500 = vmatprep.subr.mxu0 0.0
  %1501 = vmatpush1.msra.mxu0 0.0
  %1502 = vmatprep.subr.mxu0 0.0
  %1503 = vmatpush1.msra.mxu0 0.0
  %1504 = vmatprep.subr.mxu0 0.0
  %1505 = vmatpush1.msra.mxu0 0.0
  %1506 = vmatprep.subr.mxu0 0.0
  %1507 = vmatpush1.msra.mxu0 0.0
  %1508 = vmatprep.subr.mxu0 0.0
  %1509 = vmatpush1.msra.mxu0 0.0
  %1510 = vmatprep.subr.mxu0 0.0
  %1511 = vmatpush1.msra.mxu0 0.0
  %1512 = vmatprep.subr.mxu0 0.0
  %1513 = vmatpush1.msra.mxu0 0.0
  %1514 = vmatprep.subr.mxu0 0.0
  %1515 = vmatpush1.msra.mxu0 0.0
  %1516 = vmatprep.subr.mxu0 0.0
  %1517 = vmatpush1.msra.mxu0 0.0
  %1518 = vmatprep.subr.mxu0 0.0
  %1519 = vmatpush1.msra.mxu0 %v1487
  %1520 = vmatprep.subr.mxu0 0.0
  %1521 = vmatpush2.msra.mxu0 0.0
  %1522 = vmatprep.subr.mxu0 0.0
  %1523 = vmatpush2.msra.mxu0 0.0
  %1524 = vmatprep.subr.mxu0 0.0
  %1525 = vmatpush2.msra.mxu0 0.0
  %1526 = vmatprep.subr.mxu0 0.0
  %1527 = vmatpush2.msra.mxu0 0.0
  %1528 = vmatprep.subr.mxu0 0.0
  %1529 = vmatpush2.msra.mxu0 0.0
  %1530 = vmatprep.subr.mxu0 0.0
  %1531 = vmatpush2.msra.mxu0 0.0
  %1532 = vmatprep.subr.mxu0 0.0
  %1533 = vmatpush2.msra.mxu0 0.0
  %1534 = vmatprep.subr.mxu0 0.0
  %1535 = vmatpush2.msra.mxu0 0.0
  %1536 = vmatprep.subr.mxu0 0.0
  %1537 = vmatpush2.msra.mxu0 0.0
  %1538 = vmatprep.subr.mxu0 0.0
  %1539 = vmatpush2.msra.mxu0 0.0
  %1540 = vmatprep.subr.mxu0 0.0
  %1541 = vmatpush2.msra.mxu0 0.0
  %1542 = vmatprep.subr.mxu0 0.0
  %1543 = vmatpush2.msra.mxu0 0.0
  %1544 = vmatprep.subr.mxu0 0.0
  %1545 = vmatpush2.msra.mxu0 0.0
  %1546 = vmatprep.subr.mxu0 0.0
  %1547 = vmatpush2.msra.mxu0 0.0
  %1548 = vmatprep.subr.mxu0 0.0
  %1549 = vmatpush2.msra.mxu0 0.0
  %1550 = vmatprep.subr.mxu0 0.0
  %1551 = vmatpush2.msra.mxu0 0.0
  %1552 = vmatprep.mubr.f32.mxu0 0.0
  %1553 = vmatmul.mubr.f32.gmra.mxu0 %v1154
  %v1554 = vpop.f32.mrf.mxu0
  %v1555 = vadd.f32 0.0, %v1554
  %v1556 = vpop.f32.mrf.mxu0
  %1557 = vdwg.mxu0
  %v1558 = vadd.f32 %v1486, %v1555
  %v1559 = vld [vmem:[%s14] sm:$0x1]
  %v1561 = vlaneseq
  %v1562 = vshrl.u32 %v1561, 7
  %v1563 = vsub.s32 0, %v1562
  %v1564 = vrot.slane %v1559, %v1563
  %v1566 = vadd.f32 %v1558, %v1564
  %vm1567 = vcmask 732160
  %1568 = vst.msk [vmem:[%s16] sm:$0xf] %vm1567, %v1566
  // Predicated region
  $region62: #{_lambda_.5} parent=0 // pred_check
    _
  $region63: #{_lambda_.5} parent=0 // pred_check_branch
    %1570 = sbr.rel (0) target = $region65
  $region64: #{_lambda_.5} parent=0 // pred_region
    _
  $region65: #{_lambda_.5} parent=0 // pred_fallthru
    _
  // Predicated region
  $region66: #{_lambda_.5} parent=0 // pred_check
    _
  $region67: #{_lambda_.5} parent=0 // pred_check_branch
    %1572 = sbr.rel (0) target = $region69
  $region68: #{_lambda_.5} parent=0 // pred_region
    _
  $region69: #{_lambda_.5} parent=0 // pred_fallthru
    _
  // Predicated region
  $region70: #{_lambda_.5} parent=0 // pred_check
    _
  $region71: #{_lambda_.5} parent=0 // pred_check_branch
    %1574 = sbr.rel (0) target = $region73
  $region72: #{_lambda_.5} parent=0 // pred_region
    _
  $region73: #{_lambda_.5} parent=0 // pred_fallthru
    _
  // Predicated region
  $region74: #{_lambda_.5} parent=0 // pred_check
    _
  $region75: #{_lambda_.5} parent=0 // pred_check_branch
    %1576 = sbr.rel (0) target = $region77
  $region76: #{_lambda_.5} parent=0 // pred_region
    _
  $region77: #{_lambda_.5} parent=0 // pred_fallthru
    _

// kernel: _lambda_.4
$region0: #{_lambda_.4}
  #allocation0 [shape = 'u32[]', space=smem, size = 0x4, offset = 0x4, fixed_abs, tag = 'smem constant byte address 0x4 - core index']
  #allocation1 [shape = 'u32[144,128]{1,0:T(1,128)}', space=vmem, size = 0x12000, scoped, tag = 'internal scratch']
  %s0 = inlined_call_operand.vmem [shape: f32[128,12], index: 0, kind: input, shape index: {}]
  %s1 = inlined_call_operand.vmem [shape: f32[6,128], index: 1, kind: input, shape index: {}]
  %s2 = inlined_call_operand.vmem [shape: f32[64,16], index: 2, kind: input, shape index: {}]
  %s3 = inlined_call_operand.vmem [shape: f32[12,32], index: 3, kind: input, shape index: {}]
  %s4 = inlined_call_operand.vmem [shape: f32[1,32], index: 4, kind: input, shape index: {}]
  %s5 = inlined_call_operand.vmem [shape: f32[32,448], index: 5, kind: input, shape index: {}]
  %s6 = inlined_call_operand.vmem [shape: f32[1,448], index: 6, kind: input, shape index: {}]
  %s7 = inlined_call_operand.vmem [shape: f32[32,64], index: 7, kind: input, shape index: {}]
  %s8 = inlined_call_operand.vmem [shape: f32[1,64], index: 8, kind: input, shape index: {}]
  %s9 = inlined_call_operand.vmem [shape: f32[256,126], index: 9, kind: input, shape index: {}]
  %s10 = inlined_call_operand.vmem [shape: f32[8,126], index: 10, kind: input, shape index: {}]
  %s11 = inlined_call_operand.vmem [shape: f32[8,126], index: 11, kind: input, shape index: {}]
  %s12 = inlined_call_operand.vmem [shape: f32[8,126], index: 12, kind: input, shape index: {}]
  %s13 = inlined_call_operand.vmem [shape: f32[1,126], index: 13, kind: input, shape index: {}]
  %s14 = inlined_call_operand.vmem [shape: f32[32,10], index: 14, kind: input, shape index: {}]
  %s15 = inlined_call_operand.vmem [shape: f32[1,10], index: 15, kind: input, shape index: {}]
  %s16 = inlined_call_operand.vmem [shape: f32[32,3], index: 16, kind: input, shape index: {}]
  %s17 = inlined_call_operand.vmem [shape: f32[1,3], index: 17, kind: input, shape index: {}]
  %s18 = inlined_call_operand.vmem [shape: f32[32,12], index: 18, kind: input, shape index: {}]
  %s19 = inlined_call_operand.vmem [shape: f32[8,12], index: 19, kind: input, shape index: {}]
  %s20 = inlined_call_operand.vmem [shape: f32[1,12], index: 20, kind: input, shape index: {}]
  %s21 = inlined_call_operand.vmem [shape: f32[128,32], index: 21, kind: output, shape index: {0}]
  %s22 = inlined_call_operand.vmem [shape: f32[2,24], index: 22, kind: output, shape index: {1}]
  %s23 = inlined_call_operand.vmem [shape: f32[2,126], index: 23, kind: output, shape index: {2}]
  %s24 = inlined_call_operand.hbm [shape: f32[2,10], index: 24, kind: output, shape index: {3}]
  %s25 = inlined_call_operand.hbm [shape: f32[2,3], index: 25, kind: output, shape index: {4}]
  %s26 = inlined_call_operand.vmem [shape: f32[2,12], index: 26, kind: output, shape index: {5}]
  %27 = xla_tuple %s21, %s22, %s23, %s24, %s25, %s26
  %s28 = sld [smem:[#allocation0]]
  $region134: #{_lambda_.4} parent=0
    _
  %s30 = ssub.s32 1, %s28
  %s31 = scalar_select 0, %s30, %s28
  $region1: #{_lambda_.4} parent=0
    #allocation2 [shape = 'u8[1024]{0}', space=vmem, size = 0x400, scoped, tag = 'output window, operand 3, single buffered']
    #allocation3 [shape = 's32[1]{0}', space=sflag, size = 0x4, scoped, tag = 'scoped memory for _lambda_.4']
    #allocation4 [shape = 'u8[1024]{0}', space=vmem, size = 0x400, scoped, tag = 'output window, operand 4, single buffered']
    #allocation5 [shape = 's32[1]{0}', space=sflag, size = 0x4, scoped, tag = 'scoped memory for _lambda_.4']
    %32 = vsyncpa [#allocation3], 0
    %33 = vsyncpa [#allocation5], 0
    // Predicated region
    $region2: #{_lambda_.4} parent=1 // pred_check
      _
    $region3: #{_lambda_.4} parent=1 // pred_check_branch
      %35 = sbr.rel (0) target = $region5
    $region4: #{_lambda_.4} parent=1 // pred_region
      _
    $region5: #{_lambda_.4} parent=1 // pred_fallthru
      _
    // Predicated region
    $region6: #{_lambda_.4} parent=1 // pred_check
      _
    $region7: #{_lambda_.4} parent=1 // pred_check_branch
      %37 = sbr.rel (0) target = $region9
    $region8: #{_lambda_.4} parent=1 // pred_region
      _
    $region9: #{_lambda_.4} parent=1 // pred_fallthru
      _
    // Predicated region
    $region10: #{_lambda_.4} parent=1 // pred_check
      _
    $region11: #{_lambda_.4} parent=1 // pred_check_branch
      %39 = sbr.rel (0) target = $region13
    $region12: #{_lambda_.4} parent=1 // pred_region
      _
    $region13: #{_lambda_.4} parent=1 // pred_fallthru
      _
    // Predicated region
    $region14: #{_lambda_.4} parent=1 // pred_check
      _
    $region15: #{_lambda_.4} parent=1 // pred_check_branch
      %41 = sbr.rel (0) target = $region17
    $region16: #{_lambda_.4} parent=1 // pred_region
      _
    $region17: #{_lambda_.4} parent=1 // pred_fallthru
      _
    // Predicated region
    $region18: #{_lambda_.4} parent=1 // pred_check
      _
    $region19: #{_lambda_.4} parent=1 // pred_check_branch
      %43 = sbr.rel (0) target = $region21
    $region20: #{_lambda_.4} parent=1 // pred_region
      _
    $region21: #{_lambda_.4} parent=1 // pred_fallthru
      _
    // Predicated region
    $region22: #{_lambda_.4} parent=1 // pred_check
      _
    $region23: #{_lambda_.4} parent=1 // pred_check_branch
      %45 = sbr.rel (0) target = $region25
    $region24: #{_lambda_.4} parent=1 // pred_region
      _
    $region25: #{_lambda_.4} parent=1 // pred_fallthru
      _
    // Predicated region
    $region26: #{_lambda_.4} parent=1 // pred_check
      _
    $region27: #{_lambda_.4} parent=1 // pred_check_branch
      %47 = sbr.rel (0) target = $region29
    $region28: #{_lambda_.4} parent=1 // pred_region
      _
    $region29: #{_lambda_.4} parent=1 // pred_fallthru
      _
    // Predicated region
    $region30: #{_lambda_.4} parent=1 // pred_check
      _
    $region31: #{_lambda_.4} parent=1 // pred_check_branch
      %49 = sbr.rel (0) target = $region33
    $region32: #{_lambda_.4} parent=1 // pred_region
      _
    $region33: #{_lambda_.4} parent=1 // pred_fallthru
      _
    // Predicated region
    $region34: #{_lambda_.4} parent=1 // pred_check
      _
    $region35: #{_lambda_.4} parent=1 // pred_check_branch
      %51 = sbr.rel (0) target = $region37
    $region36: #{_lambda_.4} parent=1 // pred_region
      _
    $region37: #{_lambda_.4} parent=1 // pred_fallthru
      _
    // Predicated region
    $region38: #{_lambda_.4} parent=1 // pred_check
      _
    $region39: #{_lambda_.4} parent=1 // pred_check_branch
      %53 = sbr.rel (0) target = $region41
    $region40: #{_lambda_.4} parent=1 // pred_region
      _
    $region41: #{_lambda_.4} parent=1 // pred_fallthru
      _
    // Predicated region
    $region42: #{_lambda_.4} parent=1 // pred_check
      _
    $region43: #{_lambda_.4} parent=1 // pred_check_branch
      %55 = sbr.rel (0) target = $region45
    $region44: #{_lambda_.4} parent=1 // pred_region
      _
    $region45: #{_lambda_.4} parent=1 // pred_fallthru
      _
    // Predicated region
    $region46: #{_lambda_.4} parent=1 // pred_check
      _
    $region47: #{_lambda_.4} parent=1 // pred_check_branch
      %57 = sbr.rel (0) target = $region49
    $region48: #{_lambda_.4} parent=1 // pred_region
      _
    $region49: #{_lambda_.4} parent=1 // pred_fallthru
      _
    // Predicated region
    $region50: #{_lambda_.4} parent=1 // pred_check
      _
    $region51: #{_lambda_.4} parent=1 // pred_check_branch
      %59 = sbr.rel (0) target = $region53
    $region52: #{_lambda_.4} parent=1 // pred_region
      _
    $region53: #{_lambda_.4} parent=1 // pred_fallthru
      _
    // Predicated region
    $region54: #{_lambda_.4} parent=1 // pred_check
      _
    $region55: #{_lambda_.4} parent=1 // pred_check_branch
      %61 = sbr.rel (0) target = $region57
    $region56: #{_lambda_.4} parent=1 // pred_region
      _
    $region57: #{_lambda_.4} parent=1 // pred_fallthru
      _
    // Predicated region
    $region58: #{_lambda_.4} parent=1 // pred_check
      _
    $region59: #{_lambda_.4} parent=1 // pred_check_branch
      %63 = sbr.rel (0) target = $region61
    $region60: #{_lambda_.4} parent=1 // pred_region
      _
    $region61: #{_lambda_.4} parent=1 // pred_fallthru
      _
    // Predicated region
    $region62: #{_lambda_.4} parent=1 // pred_check
      _
    $region63: #{_lambda_.4} parent=1 // pred_check_branch
      %65 = sbr.rel (0) target = $region65
    $region64: #{_lambda_.4} parent=1 // pred_region
      _
    $region65: #{_lambda_.4} parent=1 // pred_fallthru
      _
    // Predicated region
    $region66: #{_lambda_.4} parent=1 // pred_check
      _
    $region67: #{_lambda_.4} parent=1 // pred_check_branch
      %67 = sbr.rel (0) target = $region69
    $region68: #{_lambda_.4} parent=1 // pred_region
      _
    $region69: #{_lambda_.4} parent=1 // pred_fallthru
      _
    // Predicated region
    $region70: #{_lambda_.4} parent=1 // pred_check
      _
    $region71: #{_lambda_.4} parent=1 // pred_check_branch
      %69 = sbr.rel (0) target = $region73
    $region72: #{_lambda_.4} parent=1 // pred_region
      _
    $region73: #{_lambda_.4} parent=1 // pred_fallthru
      _
    // Predicated region
    $region74: #{_lambda_.4} parent=1 // pred_check
      _
    $region75: #{_lambda_.4} parent=1 // pred_check_branch
      %71 = sbr.rel (0) target = $region77
    $region76: #{_lambda_.4} parent=1 // pred_region
      _
    $region77: #{_lambda_.4} parent=1 // pred_fallthru
      _
    // Predicated region
    $region78: #{_lambda_.4} parent=1 // pred_check
      _
    $region79: #{_lambda_.4} parent=1 // pred_check_branch
      %73 = sbr.rel (0) target = $region81
    $region80: #{_lambda_.4} parent=1 // pred_region
      _
    $region81: #{_lambda_.4} parent=1 // pred_fallthru
      _
    // Predicated region
    $region82: #{_lambda_.4} parent=1 // pred_check
      _
    $region83: #{_lambda_.4} parent=1 // pred_check_branch
      %75 = sbr.rel (0) target = $region85
    $region84: #{_lambda_.4} parent=1 // pred_region
      _
    $region85: #{_lambda_.4} parent=1 // pred_fallthru
      _
    %v76 = vld [vmem:[%s0] sm:$0xff]
    %v77 = vld [vmem:[%s0 + $0x8] sm:$0xff]
    %v78 = vld [vmem:[%s0 + $0x10] sm:$0xff]
    %v79 = vld [vmem:[%s0 + $0x18] sm:$0xff]
    %v80 = vld [vmem:[%s0 + $0x20] sm:$0xff]
    %v81 = vld [vmem:[%s0 + $0x28] sm:$0xff]
    %v82 = vld [vmem:[%s0 + $0x30] sm:$0xff]
    %v83 = vld [vmem:[%s0 + $0x38] sm:$0xff]
    %v84 = vld [vmem:[%s0 + $0x40] sm:$0xff]
    %v85 = vld [vmem:[%s0 + $0x48] sm:$0xff]
    %v86 = vld [vmem:[%s0 + $0x50] sm:$0xff]
    %v87 = vld [vmem:[%s0 + $0x58] sm:$0xff]
    %v88 = vld [vmem:[%s0 + $0x60] sm:$0xff]
    %v89 = vld [vmem:[%s0 + $0x68] sm:$0xff]
    %v90 = vld [vmem:[%s0 + $0x70] sm:$0xff]
    %v91 = vld [vmem:[%s0 + $0x78] sm:$0xff]
    %v92 = vld [vmem:[%s3] sm:$0xff]
    %v93 = vld [vmem:[%s3 + $0x8] sm:$0xf]
    %v94 = vld [vmem:[%s4] sm:$0x1]
    %v96 = vlaneseq
    %v97 = vshrl.u32 %v96, 7
    %v98 = vsub.s32 0, %v97
    %v99 = vrot.slane %v94, %v98
    %vm101 = vcmask 97280
    %v103 = vsel %vm101, %v76, 0
    %v106 = vsel %vm101, %v77, 0
    %v109 = vsel %vm101, %v78, 0
    %v112 = vsel %vm101, %v79, 0
    %v115 = vsel %vm101, %v80, 0
    %v118 = vsel %vm101, %v81, 0
    %v121 = vsel %vm101, %v82, 0
    %v124 = vsel %vm101, %v83, 0
    %v127 = vsel %vm101, %v84, 0
    %v130 = vsel %vm101, %v85, 0
    %v133 = vsel %vm101, %v86, 0
    %v136 = vsel %vm101, %v87, 0
    %v139 = vsel %vm101, %v88, 0
    %v142 = vsel %vm101, %v89, 0
    %v145 = vsel %vm101, %v90, 0
    %v148 = vsel %vm101, %v91, 0
    %vm150 = vcmask 1043456
    %v152 = vsel %vm150, %v93, 0
    %154 = vmatprep.subr.mxu0 0.0
    %155 = vmatpush1.msra.mxu0 0.0
    %156 = vmatprep.subr.mxu0 0.0
    %157 = vmatpush1.msra.mxu0 0.0
    %158 = vmatprep.subr.mxu0 0.0
    %159 = vmatpush1.msra.mxu0 0.0
    %160 = vmatprep.subr.mxu0 0.0
    %161 = vmatpush1.msra.mxu0 0.0
    %162 = vmatprep.subr.mxu0 0.0
    %163 = vmatpush1.msra.mxu0 0.0
    %164 = vmatprep.subr.mxu0 0.0
    %165 = vmatpush1.msra.mxu0 0.0
    %166 = vmatprep.subr.mxu0 0.0
    %167 = vmatpush1.msra.mxu0 0.0
    %168 = vmatprep.subr.mxu0 0.0
    %169 = vmatpush1.msra.mxu0 0.0
    %170 = vmatprep.subr.mxu0 0.0
    %171 = vmatpush1.msra.mxu0 0.0
    %172 = vmatprep.subr.mxu0 0.0
    %173 = vmatpush1.msra.mxu0 0.0
    %174 = vmatprep.subr.mxu0 0.0
    %175 = vmatpush1.msra.mxu0 0.0
    %176 = vmatprep.subr.mxu0 0.0
    %177 = vmatpush1.msra.mxu0 0.0
    %178 = vmatprep.subr.mxu0 0.0
    %179 = vmatpush1.msra.mxu0 0.0
    %180 = vmatprep.subr.mxu0 0.0
    %181 = vmatpush1.msra.mxu0 0.0
    %182 = vmatprep.subr.mxu0 0.0
    %183 = vmatpush1.msra.mxu0 %v152
    %184 = vmatprep.subr.mxu0 0.0
    %185 = vmatpush1.msra.mxu0 %v92
    %186 = vmatprep.subr.mxu0 0.0
    %187 = vmatpush2.msra.mxu0 0.0
    %188 = vmatprep.subr.mxu0 0.0
    %189 = vmatpush2.msra.mxu0 0.0
    %190 = vmatprep.subr.mxu0 0.0
    %191 = vmatpush2.msra.mxu0 0.0
    %192 = vmatprep.subr.mxu0 0.0
    %193 = vmatpush2.msra.mxu0 0.0
    %194 = vmatprep.subr.mxu0 0.0
    %195 = vmatpush2.msra.mxu0 0.0
    %196 = vmatprep.subr.mxu0 0.0
    %197 = vmatpush2.msra.mxu0 0.0
    %198 = vmatprep.subr.mxu0 0.0
    %199 = vmatpush2.msra.mxu0 0.0
    %200 = vmatprep.subr.mxu0 0.0
    %201 = vmatpush2.msra.mxu0 0.0
    %202 = vmatprep.subr.mxu0 0.0
    %203 = vmatpush2.msra.mxu0 0.0
    %204 = vmatprep.subr.mxu0 0.0
    %205 = vmatpush2.msra.mxu0 0.0
    %206 = vmatprep.subr.mxu0 0.0
    %207 = vmatpush2.msra.mxu0 0.0
    %208 = vmatprep.subr.mxu0 0.0
    %209 = vmatpush2.msra.mxu0 0.0
    %210 = vmatprep.subr.mxu0 0.0
    %211 = vmatpush2.msra.mxu0 0.0
    %212 = vmatprep.subr.mxu0 0.0
    %213 = vmatpush2.msra.mxu0 0.0
    %214 = vmatprep.subr.mxu0 0.0
    %215 = vmatpush2.msra.mxu0 0.0
    %216 = vmatprep.subr.mxu0 0.0
    %217 = vmatpush2.msra.mxu0 0.0
    %218 = vmatprep.mubr.f32.mxu0 0.0
    %219 = vmatmul.mubr.f32.gmra.mxu0 %v103
    %v220 = vpop.f32.mrf.mxu0
    %v221 = vadd.f32 %v99, %v220
    %v222 = vpop.f32.mrf.mxu0
    %223 = vmatprep.mubr.f32.mxu0 0.0
    %224 = vmatmul.mubr.f32.gmra.mxu0 %v106
    %v225 = vpop.f32.mrf.mxu0
    %v226 = vadd.f32 %v99, %v225
    %v227 = vpop.f32.mrf.mxu0
    %228 = vmatprep.mubr.f32.mxu0 0.0
    %229 = vmatmul.mubr.f32.gmra.mxu0 %v109
    %v230 = vpop.f32.mrf.mxu0
    %v231 = vadd.f32 %v99, %v230
    %v232 = vpop.f32.mrf.mxu0
    %233 = vmatprep.mubr.f32.mxu0 0.0
    %234 = vmatmul.mubr.f32.gmra.mxu0 %v112
    %v235 = vpop.f32.mrf.mxu0
    %v236 = vadd.f32 %v99, %v235
    %v237 = vpop.f32.mrf.mxu0
    %238 = vmatprep.mubr.f32.mxu0 0.0
    %239 = vmatmul.mubr.f32.gmra.mxu0 %v115
    %v240 = vpop.f32.mrf.mxu0
    %v241 = vadd.f32 %v99, %v240
    %v242 = vpop.f32.mrf.mxu0
    %243 = vmatprep.mubr.f32.mxu0 0.0
    %244 = vmatmul.mubr.f32.gmra.mxu0 %v118
    %v245 = vpop.f32.mrf.mxu0
    %v246 = vadd.f32 %v99, %v245
    %v247 = vpop.f32.mrf.mxu0
    %248 = vmatprep.mubr.f32.mxu0 0.0
    %249 = vmatmul.mubr.f32.gmra.mxu0 %v121
    %v250 = vpop.f32.mrf.mxu0
    %v251 = vadd.f32 %v99, %v250
    %v252 = vpop.f32.mrf.mxu0
    %253 = vmatprep.mubr.f32.mxu0 0.0
    %254 = vmatmul.mubr.f32.gmra.mxu0 %v124
    %v255 = vpop.f32.mrf.mxu0
    %v256 = vadd.f32 %v99, %v255
    %v257 = vpop.f32.mrf.mxu0
    %258 = vmatprep.mubr.f32.mxu0 0.0
    %259 = vmatmul.mubr.f32.gmra.mxu0 %v127
    %v260 = vpop.f32.mrf.mxu0
    %v261 = vadd.f32 %v99, %v260
    %v262 = vpop.f32.mrf.mxu0
    %263 = vmatprep.mubr.f32.mxu0 0.0
    %264 = vmatmul.mubr.f32.gmra.mxu0 %v130
    %v265 = vpop.f32.mrf.mxu0
    %v266 = vadd.f32 %v99, %v265
    %v267 = vpop.f32.mrf.mxu0
    %268 = vmatprep.mubr.f32.mxu0 0.0
    %269 = vmatmul.mubr.f32.gmra.mxu0 %v133
    %v270 = vpop.f32.mrf.mxu0
    %v271 = vadd.f32 %v99, %v270
    %v272 = vpop.f32.mrf.mxu0
    %273 = vmatprep.mubr.f32.mxu0 0.0
    %274 = vmatmul.mubr.f32.gmra.mxu0 %v136
    %v275 = vpop.f32.mrf.mxu0
    %v276 = vadd.f32 %v99, %v275
    %v277 = vpop.f32.mrf.mxu0
    %278 = vmatprep.mubr.f32.mxu0 0.0
    %279 = vmatmul.mubr.f32.gmra.mxu0 %v139
    %v280 = vpop.f32.mrf.mxu0
    %v281 = vadd.f32 %v99, %v280
    %v282 = vpop.f32.mrf.mxu0
    %283 = vmatprep.mubr.f32.mxu0 0.0
    %284 = vmatmul.mubr.f32.gmra.mxu0 %v142
    %v285 = vpop.f32.mrf.mxu0
    %v286 = vadd.f32 %v99, %v285
    %v287 = vpop.f32.mrf.mxu0
    %288 = vmatprep.mubr.f32.mxu0 0.0
    %289 = vmatmul.mubr.f32.gmra.mxu0 %v145
    %v290 = vpop.f32.mrf.mxu0
    %v291 = vadd.f32 %v99, %v290
    %v292 = vpop.f32.mrf.mxu0
    %293 = vmatprep.mubr.f32.mxu0 0.0
    %294 = vmatmul.mubr.f32.gmra.mxu0 %v148
    %v295 = vpop.f32.mrf.mxu0
    %v296 = vadd.f32 %v99, %v295
    %v297 = vpop.f32.mrf.mxu0
    %298 = vdwg.mxu0
    %vm299 = vcmask 261120
    %300 = vst.msk [vmem:[%s21] sm:$0xff] %vm299, %v221
    %301 = vst.msk [vmem:[%s21 + $0x8] sm:$0xff] %vm299, %v226
    %302 = vst.msk [vmem:[%s21 + $0x10] sm:$0xff] %vm299, %v231
    %303 = vst.msk [vmem:[%s21 + $0x18] sm:$0xff] %vm299, %v236
    %304 = vst.msk [vmem:[%s21 + $0x20] sm:$0xff] %vm299, %v241
    %305 = vst.msk [vmem:[%s21 + $0x28] sm:$0xff] %vm299, %v246
    %306 = vst.msk [vmem:[%s21 + $0x30] sm:$0xff] %vm299, %v251
    %307 = vst.msk [vmem:[%s21 + $0x38] sm:$0xff] %vm299, %v256
    %308 = vst.msk [vmem:[%s21 + $0x40] sm:$0xff] %vm299, %v261
    %309 = vst.msk [vmem:[%s21 + $0x48] sm:$0xff] %vm299, %v266
    %310 = vst.msk [vmem:[%s21 + $0x50] sm:$0xff] %vm299, %v271
    %311 = vst.msk [vmem:[%s21 + $0x58] sm:$0xff] %vm299, %v276
    %312 = vst.msk [vmem:[%s21 + $0x60] sm:$0xff] %vm299, %v281
    %313 = vst.msk [vmem:[%s21 + $0x68] sm:$0xff] %vm299, %v286
    %314 = vst.msk [vmem:[%s21 + $0x70] sm:$0xff] %vm299, %v291
    %315 = vst.msk [vmem:[%s21 + $0x78] sm:$0xff] %vm299, %v296
    %v316 = vld [vmem:[%s1] sm:$0x3f]
    %v317 = vld [vmem:[%s2] sm:$0xff]
    %v318 = vld [vmem:[%s2 + $0x8] sm:$0xff]
    %v319 = vld [vmem:[%s2 + $0x10] sm:$0xff]
    %v320 = vld [vmem:[%s2 + $0x18] sm:$0xff]
    %v321 = vld [vmem:[%s2 + $0x20] sm:$0xff]
    %v322 = vld [vmem:[%s2 + $0x28] sm:$0xff]
    %v323 = vld [vmem:[%s2 + $0x30] sm:$0xff]
    %v324 = vld [vmem:[%s2 + $0x38] sm:$0xff]
    %v325 = vld [vmem:[%s7] sm:$0xff]
    %v326 = vld [vmem:[%s7 + $0x8] sm:$0xff]
    %v327 = vld [vmem:[%s7 + $0x10] sm:$0xff]
    %v328 = vld [vmem:[%s7 + $0x18] sm:$0xff]
    %v329 = vld [vmem:[%s8] sm:$0x1]
    %330 = vmatprep.subr.mxu0 0.0
    %331 = vmatpush1.msra.mxu0 %v296
    %332 = vmatprep.subr.mxu0 0.0
    %333 = vmatpush1.msra.mxu0 %v291
    %334 = vmatprep.subr.mxu0 0.0
    %335 = vmatpush1.msra.mxu0 %v286
    %336 = vmatprep.subr.mxu0 0.0
    %337 = vmatpush1.msra.mxu0 %v281
    %338 = vmatprep.subr.mxu0 0.0
    %339 = vmatpush1.msra.mxu0 %v276
    %340 = vmatprep.subr.mxu0 0.0
    %341 = vmatpush1.msra.mxu0 %v271
    %342 = vmatprep.subr.mxu0 0.0
    %343 = vmatpush1.msra.mxu0 %v266
    %344 = vmatprep.subr.mxu0 0.0
    %345 = vmatpush1.msra.mxu0 %v261
    %346 = vmatprep.subr.mxu0 0.0
    %347 = vmatpush1.msra.mxu0 %v256
    %348 = vmatprep.subr.mxu0 0.0
    %349 = vmatpush1.msra.mxu0 %v251
    %350 = vmatprep.subr.mxu0 0.0
    %351 = vmatpush1.msra.mxu0 %v246
    %352 = vmatprep.subr.mxu0 0.0
    %353 = vmatpush1.msra.mxu0 %v241
    %354 = vmatprep.subr.mxu0 0.0
    %355 = vmatpush1.msra.mxu0 %v236
    %356 = vmatprep.subr.mxu0 0.0
    %357 = vmatpush1.msra.mxu0 %v231
    %358 = vmatprep.subr.mxu0 0.0
    %359 = vmatpush1.msra.mxu0 %v226
    %360 = vmatprep.subr.mxu0 0.0
    %361 = vmatpush1.msra.mxu0 %v221
    %362 = vmatprep.subr.mxu0 0.0
    %363 = vmatpush2.msra.mxu0 0.0
    %364 = vmatprep.subr.mxu0 0.0
    %365 = vmatpush2.msra.mxu0 0.0
    %366 = vmatprep.subr.mxu0 0.0
    %367 = vmatpush2.msra.mxu0 0.0
    %368 = vmatprep.subr.mxu0 0.0
    %369 = vmatpush2.msra.mxu0 0.0
    %370 = vmatprep.subr.mxu0 0.0
    %371 = vmatpush2.msra.mxu0 0.0
    %372 = vmatprep.subr.mxu0 0.0
    %373 = vmatpush2.msra.mxu0 0.0
    %374 = vmatprep.subr.mxu0 0.0
    %375 = vmatpush2.msra.mxu0 0.0
    %376 = vmatprep.subr.mxu0 0.0
    %377 = vmatpush2.msra.mxu0 0.0
    %378 = vmatprep.subr.mxu0 0.0
    %379 = vmatpush2.msra.mxu0 0.0
    %380 = vmatprep.subr.mxu0 0.0
    %381 = vmatpush2.msra.mxu0 0.0
    %382 = vmatprep.subr.mxu0 0.0
    %383 = vmatpush2.msra.mxu0 0.0
    %384 = vmatprep.subr.mxu0 0.0
    %385 = vmatpush2.msra.mxu0 0.0
    %386 = vmatprep.subr.mxu0 0.0
    %387 = vmatpush2.msra.mxu0 0.0
    %388 = vmatprep.subr.mxu0 0.0
    %389 = vmatpush2.msra.mxu0 0.0
    %390 = vmatprep.subr.mxu0 0.0
    %391 = vmatpush2.msra.mxu0 0.0
    %392 = vmatprep.subr.mxu0 0.0
    %393 = vmatpush2.msra.mxu0 0.0
    %394 = vmatprep.mubr.f32.mxu0 0.0
    %395 = vmatmul.mubr.f32.gmra.mxu0 %v316
    %v396 = vpop.f32.mrf.mxu0
    %v397 = vadd.f32 0.0, %v396
    %v398 = vpop.f32.mrf.mxu0
    %399 = vdwg.mxu0
    %v400 = vmul.f32 %v397, 0.015625
    %v402 = vlaneseq
    %v403 = vshrl.u32 %v402, 7
    %v404 = vsub.s32 0, %v403
    %v405 = vrot.slane %v329, %v404
    %v408 = vsel %vm299, %v221, 0
    %v411 = vsel %vm299, %v226, 0
    %v414 = vsel %vm299, %v231, 0
    %v417 = vsel %vm299, %v236, 0
    %v420 = vsel %vm299, %v241, 0
    %v423 = vsel %vm299, %v246, 0
    %v426 = vsel %vm299, %v251, 0
    %v429 = vsel %vm299, %v256, 0
    %v432 = vsel %vm299, %v261, 0
    %v435 = vsel %vm299, %v266, 0
    %v438 = vsel %vm299, %v271, 0
    %v441 = vsel %vm299, %v276, 0
    %v444 = vsel %vm299, %v281, 0
    %v447 = vsel %vm299, %v286, 0
    %v450 = vsel %vm299, %v291, 0
    %v453 = vsel %vm299, %v296, 0
    %455 = vmatprep.subr.mxu0 0.0
    %456 = vmatpush1.msra.mxu0 0.0
    %457 = vmatprep.subr.mxu0 0.0
    %458 = vmatpush1.msra.mxu0 0.0
    %459 = vmatprep.subr.mxu0 0.0
    %460 = vmatpush1.msra.mxu0 0.0
    %461 = vmatprep.subr.mxu0 0.0
    %462 = vmatpush1.msra.mxu0 0.0
    %463 = vmatprep.subr.mxu0 0.0
    %464 = vmatpush1.msra.mxu0 0.0
    %465 = vmatprep.subr.mxu0 0.0
    %466 = vmatpush1.msra.mxu0 0.0
    %467 = vmatprep.subr.mxu0 0.0
    %468 = vmatpush1.msra.mxu0 0.0
    %469 = vmatprep.subr.mxu0 0.0
    %470 = vmatpush1.msra.mxu0 0.0
    %471 = vmatprep.subr.mxu0 0.0
    %472 = vmatpush1.msra.mxu0 0.0
    %473 = vmatprep.subr.mxu0 0.0
    %474 = vmatpush1.msra.mxu0 0.0
    %475 = vmatprep.subr.mxu0 0.0
    %476 = vmatpush1.msra.mxu0 0.0
    %477 = vmatprep.subr.mxu0 0.0
    %478 = vmatpush1.msra.mxu0 0.0
    %479 = vmatprep.subr.mxu0 0.0
    %480 = vmatpush1.msra.mxu0 %v328
    %481 = vmatprep.subr.mxu0 0.0
    %482 = vmatpush1.msra.mxu0 %v327
    %483 = vmatprep.subr.mxu0 0.0
    %484 = vmatpush1.msra.mxu0 %v326
    %485 = vmatprep.subr.mxu0 0.0
    %486 = vmatpush1.msra.mxu0 %v325
    %487 = vmatprep.subr.mxu0 0.0
    %488 = vmatpush2.msra.mxu0 0.0
    %489 = vmatprep.subr.mxu0 0.0
    %490 = vmatpush2.msra.mxu0 0.0
    %491 = vmatprep.subr.mxu0 0.0
    %492 = vmatpush2.msra.mxu0 0.0
    %493 = vmatprep.subr.mxu0 0.0
    %494 = vmatpush2.msra.mxu0 0.0
    %495 = vmatprep.subr.mxu0 0.0
    %496 = vmatpush2.msra.mxu0 0.0
    %497 = vmatprep.subr.mxu0 0.0
    %498 = vmatpush2.msra.mxu0 0.0
    %499 = vmatprep.subr.mxu0 0.0
    %500 = vmatpush2.msra.mxu0 0.0
    %501 = vmatprep.subr.mxu0 0.0
    %502 = vmatpush2.msra.mxu0 0.0
    %503 = vmatprep.subr.mxu0 0.0
    %504 = vmatpush2.msra.mxu0 0.0
    %505 = vmatprep.subr.mxu0 0.0
    %506 = vmatpush2.msra.mxu0 0.0
    %507 = vmatprep.subr.mxu0 0.0
    %508 = vmatpush2.msra.mxu0 0.0
    %509 = vmatprep.subr.mxu0 0.0
    %510 = vmatpush2.msra.mxu0 0.0
    %511 = vmatprep.subr.mxu0 0.0
    %512 = vmatpush2.msra.mxu0 0.0
    %513 = vmatprep.subr.mxu0 0.0
    %514 = vmatpush2.msra.mxu0 0.0
    %515 = vmatprep.subr.mxu0 0.0
    %516 = vmatpush2.msra.mxu0 0.0
    %517 = vmatprep.subr.mxu0 0.0
    %518 = vmatpush2.msra.mxu0 0.0
    %519 = vmatprep.mubr.f32.mxu0 0.0
    %520 = vmatmul.mubr.f32.gmra.mxu0 %v408
    %v521 = vpop.f32.mrf.mxu0
    %v522 = vadd.f32 %v405, %v521
    %v523 = vpop.f32.mrf.mxu0
    %524 = vmatprep.mubr.f32.mxu0 0.0
    %525 = vmatmul.mubr.f32.gmra.mxu0 %v411
    %v526 = vpop.f32.mrf.mxu0
    %v527 = vadd.f32 %v405, %v526
    %v528 = vpop.f32.mrf.mxu0
    %529 = vmatprep.mubr.f32.mxu0 0.0
    %530 = vmatmul.mubr.f32.gmra.mxu0 %v414
    %v531 = vpop.f32.mrf.mxu0
    %v532 = vadd.f32 %v405, %v531
    %v533 = vpop.f32.mrf.mxu0
    %534 = vmatprep.mubr.f32.mxu0 0.0
    %535 = vmatmul.mubr.f32.gmra.mxu0 %v417
    %v536 = vpop.f32.mrf.mxu0
    %v537 = vadd.f32 %v405, %v536
    %v538 = vpop.f32.mrf.mxu0
    %539 = vmatprep.mubr.f32.mxu0 0.0
    %540 = vmatmul.mubr.f32.gmra.mxu0 %v420
    %v541 = vpop.f32.mrf.mxu0
    %v542 = vadd.f32 %v405, %v541
    %v543 = vpop.f32.mrf.mxu0
    %544 = vmatprep.mubr.f32.mxu0 0.0
    %545 = vmatmul.mubr.f32.gmra.mxu0 %v423
    %v546 = vpop.f32.mrf.mxu0
    %v547 = vadd.f32 %v405, %v546
    %v548 = vpop.f32.mrf.mxu0
    %549 = vmatprep.mubr.f32.mxu0 0.0
    %550 = vmatmul.mubr.f32.gmra.mxu0 %v426
    %v551 = vpop.f32.mrf.mxu0
    %v552 = vadd.f32 %v405, %v551
    %v553 = vpop.f32.mrf.mxu0
    %554 = vmatprep.mubr.f32.mxu0 0.0
    %555 = vmatmul.mubr.f32.gmra.mxu0 %v429
    %v556 = vpop.f32.mrf.mxu0
    %v557 = vadd.f32 %v405, %v556
    %v558 = vpop.f32.mrf.mxu0
    %559 = vmatprep.mubr.f32.mxu0 0.0
    %560 = vmatmul.mubr.f32.gmra.mxu0 %v432
    %v561 = vpop.f32.mrf.mxu0
    %v562 = vadd.f32 %v405, %v561
    %v563 = vpop.f32.mrf.mxu0
    %564 = vmatprep.mubr.f32.mxu0 0.0
    %565 = vmatmul.mubr.f32.gmra.mxu0 %v435
    %v566 = vpop.f32.mrf.mxu0
    %v567 = vadd.f32 %v405, %v566
    %v568 = vpop.f32.mrf.mxu0
    %569 = vmatprep.mubr.f32.mxu0 0.0
    %570 = vmatmul.mubr.f32.gmra.mxu0 %v438
    %v571 = vpop.f32.mrf.mxu0
    %v572 = vadd.f32 %v405, %v571
    %v573 = vpop.f32.mrf.mxu0
    %574 = vmatprep.mubr.f32.mxu0 0.0
    %575 = vmatmul.mubr.f32.gmra.mxu0 %v441
    %v576 = vpop.f32.mrf.mxu0
    %v577 = vadd.f32 %v405, %v576
    %v578 = vpop.f32.mrf.mxu0
    %579 = vmatprep.mubr.f32.mxu0 0.0
    %580 = vmatmul.mubr.f32.gmra.mxu0 %v444
    %v581 = vpop.f32.mrf.mxu0
    %v582 = vadd.f32 %v405, %v581
    %v583 = vpop.f32.mrf.mxu0
    %584 = vmatprep.mubr.f32.mxu0 0.0
    %585 = vmatmul.mubr.f32.gmra.mxu0 %v447
    %v586 = vpop.f32.mrf.mxu0
    %v587 = vadd.f32 %v405, %v586
    %v588 = vpop.f32.mrf.mxu0
    %589 = vmatprep.mubr.f32.mxu0 0.0
    %590 = vmatmul.mubr.f32.gmra.mxu0 %v450
    %v591 = vpop.f32.mrf.mxu0
    %v592 = vadd.f32 %v405, %v591
    %v593 = vpop.f32.mrf.mxu0
    %594 = vmatprep.mubr.f32.mxu0 0.0
    %595 = vmatmul.mubr.f32.gmra.mxu0 %v453
    %v596 = vpop.f32.mrf.mxu0
    %v597 = vadd.f32 %v405, %v596
    %v598 = vpop.f32.mrf.mxu0
    %599 = vdwg.mxu0
    %vm600 = vcmask 523264
    %v601 = vsel %vm600, %v522, -inf
    %602 = vmax.xlane.f32.xlu0 %v601
    %v603 = vpop.xlane.xlu0 %602
    %v604 = vsel %vm600, %v527, -inf
    %605 = vmax.xlane.f32.xlu0 %v604
    %v606 = vpop.xlane.xlu0 %605
    %v607 = vsel %vm600, %v532, -inf
    %608 = vmax.xlane.f32.xlu0 %v607
    %v609 = vpop.xlane.xlu0 %608
    %v610 = vsel %vm600, %v537, -inf
    %611 = vmax.xlane.f32.xlu0 %v610
    %v612 = vpop.xlane.xlu0 %611
    %v613 = vsel %vm600, %v542, -inf
    %614 = vmax.xlane.f32.xlu0 %v613
    %v615 = vpop.xlane.xlu0 %614
    %v616 = vsel %vm600, %v547, -inf
    %617 = vmax.xlane.f32.xlu0 %v616
    %v618 = vpop.xlane.xlu0 %617
    %v619 = vsel %vm600, %v552, -inf
    %620 = vmax.xlane.f32.xlu0 %v619
    %v621 = vpop.xlane.xlu0 %620
    %v622 = vsel %vm600, %v557, -inf
    %623 = vmax.xlane.f32.xlu0 %v622
    %v624 = vpop.xlane.xlu0 %623
    %v625 = vsel %vm600, %v562, -inf
    %626 = vmax.xlane.f32.xlu0 %v625
    %v627 = vpop.xlane.xlu0 %626
    %v628 = vsel %vm600, %v567, -inf
    %629 = vmax.xlane.f32.xlu0 %v628
    %v630 = vpop.xlane.xlu0 %629
    %v631 = vsel %vm600, %v572, -inf
    %632 = vmax.xlane.f32.xlu0 %v631
    %v633 = vpop.xlane.xlu0 %632
    %v634 = vsel %vm600, %v577, -inf
    %635 = vmax.xlane.f32.xlu0 %v634
    %v636 = vpop.xlane.xlu0 %635
    %v637 = vsel %vm600, %v582, -inf
    %638 = vmax.xlane.f32.xlu0 %v637
    %v639 = vpop.xlane.xlu0 %638
    %v640 = vsel %vm600, %v587, -inf
    %641 = vmax.xlane.f32.xlu0 %v640
    %v642 = vpop.xlane.xlu0 %641
    %v643 = vsel %vm600, %v592, -inf
    %644 = vmax.xlane.f32.xlu0 %v643
    %v645 = vpop.xlane.xlu0 %644
    %v646 = vsel %vm600, %v597, -inf
    %647 = vmax.xlane.f32.xlu0 %v646
    %v648 = vpop.xlane.xlu0 %647
    %v649 = vmax.f32 %v603, %v615
    %v650 = vmax.f32 %v606, %v618
    %v651 = vmax.f32 %v609, %v621
    %v652 = vmax.f32 %v612, %v624
    %v653 = vmax.f32 %v649, %v627
    %v654 = vmax.f32 %v650, %v630
    %v655 = vmax.f32 %v651, %v633
    %v656 = vmax.f32 %v652, %v636
    %v657 = vmax.f32 %v653, %v639
    %v658 = vmax.f32 %v654, %v642
    %v659 = vmax.f32 %v655, %v645
    %v660 = vmax.f32 %v656, %v648
    %v661 = vmax.f32 %v657, %v658
    %v662 = vmax.f32 %v659, %v660
    %v663 = vmax.f32 %v661, %v662
    %v664 = vrot.slane %v663, 4
    %v665 = vmax.f32 %v663, %v664
    %v666 = vrot.slane %v665, 2
    %v667 = vmax.f32 %v665, %v666
    %v668 = vrot.slane %v667, 1
    %v669 = vmax.f32 %v667, %v668
    %v670 = vsub.f32 %v522, %v669
    %v671 = vsub.f32 %v527, %v669
    %v672 = vsub.f32 %v532, %v669
    %v673 = vsub.f32 %v537, %v669
    %v674 = vsub.f32 %v542, %v669
    %v675 = vsub.f32 %v547, %v669
    %v676 = vsub.f32 %v552, %v669
    %v677 = vsub.f32 %v557, %v669
    %v678 = vsub.f32 %v562, %v669
    %v679 = vsub.f32 %v567, %v669
    %v680 = vsub.f32 %v572, %v669
    %v681 = vsub.f32 %v577, %v669
    %v682 = vsub.f32 %v582, %v669
    %v683 = vsub.f32 %v587, %v669
    %v684 = vsub.f32 %v592, %v669
    %v685 = vsub.f32 %v597, %v669
    %v686 = vmul.f32 %v670, 1.442695
    %v687 = vpow.pop %v686
    %v688 = vmul.f32 %v671, 1.442695
    %v689 = vpow.pop %v688
    %v690 = vmul.f32 %v672, 1.442695
    %v691 = vpow.pop %v690
    %v692 = vmul.f32 %v673, 1.442695
    %v693 = vpow.pop %v692
    %v694 = vmul.f32 %v674, 1.442695
    %v695 = vpow.pop %v694
    %v696 = vmul.f32 %v675, 1.442695
    %v697 = vpow.pop %v696
    %v698 = vmul.f32 %v676, 1.442695
    %v699 = vpow.pop %v698
    %v700 = vmul.f32 %v677, 1.442695
    %v701 = vpow.pop %v700
    %v702 = vmul.f32 %v678, 1.442695
    %v703 = vpow.pop %v702
    %v704 = vmul.f32 %v679, 1.442695
    %v705 = vpow.pop %v704
    %v706 = vmul.f32 %v680, 1.442695
    %v707 = vpow.pop %v706
    %v708 = vmul.f32 %v681, 1.442695
    %v709 = vpow.pop %v708
    %v710 = vmul.f32 %v682, 1.442695
    %v711 = vpow.pop %v710
    %v712 = vmul.f32 %v683, 1.442695
    %v713 = vpow.pop %v712
    %v714 = vmul.f32 %v684, 1.442695
    %v715 = vpow.pop %v714
    %v716 = vmul.f32 %v685, 1.442695
    %v717 = vpow.pop %v716
    %718 = vmatprep.subr.mxu0 0.0
    %719 = vmatpush1.msra.mxu0 %v717
    %720 = vmatprep.subr.mxu0 0.0
    %721 = vmatpush1.msra.mxu0 %v715
    %722 = vmatprep.subr.mxu0 0.0
    %723 = vmatpush1.msra.mxu0 %v713
    %724 = vmatprep.subr.mxu0 0.0
    %725 = vmatpush1.msra.mxu0 %v711
    %726 = vmatprep.subr.mxu0 0.0
    %727 = vmatpush1.msra.mxu0 %v709
    %728 = vmatprep.subr.mxu0 0.0
    %729 = vmatpush1.msra.mxu0 %v707
    %730 = vmatprep.subr.mxu0 0.0
    %731 = vmatpush1.msra.mxu0 %v705
    %732 = vmatprep.subr.mxu0 0.0
    %733 = vmatpush1.msra.mxu0 %v703
    %734 = vmatprep.subr.mxu0 0.0
    %735 = vmatpush1.msra.mxu0 %v701
    %736 = vmatprep.subr.mxu0 0.0
    %737 = vmatpush1.msra.mxu0 %v699
    %738 = vmatprep.subr.mxu0 0.0
    %739 = vmatpush1.msra.mxu0 %v697
    %740 = vmatprep.subr.mxu0 0.0
    %741 = vmatpush1.msra.mxu0 %v695
    %742 = vmatprep.subr.mxu0 0.0
    %743 = vmatpush1.msra.mxu0 %v693
    %744 = vmatprep.subr.mxu0 0.0
    %745 = vmatpush1.msra.mxu0 %v691
    %746 = vmatprep.subr.mxu0 0.0
    %747 = vmatpush1.msra.mxu0 %v689
    %748 = vmatprep.subr.mxu0 0.0
    %749 = vmatpush1.msra.mxu0 %v687
    %750 = vmatprep.subr.mxu0 0.0
    %751 = vmatpush2.msra.mxu0 0.0
    %752 = vmatprep.subr.mxu0 0.0
    %753 = vmatpush2.msra.mxu0 0.0
    %754 = vmatprep.subr.mxu0 0.0
    %755 = vmatpush2.msra.mxu0 0.0
    %756 = vmatprep.subr.mxu0 0.0
    %757 = vmatpush2.msra.mxu0 0.0
    %758 = vmatprep.subr.mxu0 0.0
    %759 = vmatpush2.msra.mxu0 0.0
    %760 = vmatprep.subr.mxu0 0.0
    %761 = vmatpush2.msra.mxu0 0.0
    %762 = vmatprep.subr.mxu0 0.0
    %763 = vmatpush2.msra.mxu0 0.0
    %764 = vmatprep.subr.mxu0 0.0
    %765 = vmatpush2.msra.mxu0 0.0
    %766 = vmatprep.subr.mxu0 0.0
    %767 = vmatpush2.msra.mxu0 0.0
    %768 = vmatprep.subr.mxu0 0.0
    %769 = vmatpush2.msra.mxu0 0.0
    %770 = vmatprep.subr.mxu0 0.0
    %771 = vmatpush2.msra.mxu0 0.0
    %772 = vmatprep.subr.mxu0 0.0
    %773 = vmatpush2.msra.mxu0 0.0
    %774 = vmatprep.subr.mxu0 0.0
    %775 = vmatpush2.msra.mxu0 0.0
    %776 = vmatprep.subr.mxu0 0.0
    %777 = vmatpush2.msra.mxu0 0.0
    %778 = vmatprep.subr.mxu0 0.0
    %779 = vmatpush2.msra.mxu0 0.0
    %780 = vmatprep.subr.mxu0 0.0
    %781 = vmatpush2.msra.mxu0 0.0
    %782 = vmatprep.mubr.f32.mxu0 0.0
    %783 = vmatmul.mubr.f32.gmra.mxu0 %v316
    %v784 = vpop.f32.mrf.mxu0
    %v785 = vadd.f32 0.0, %v784
    %v786 = vpop.f32.mrf.mxu0
    %787 = vdwg.mxu0
    %v789 = vsel %vm600, %v785, 0
    %791 = vmatprep.subr.mxu0 0.0
    %792 = vmatpush1.msra.mxu0 0.0
    %793 = vmatprep.subr.mxu0 0.0
    %794 = vmatpush1.msra.mxu0 0.0
    %795 = vmatprep.subr.mxu0 0.0
    %796 = vmatpush1.msra.mxu0 0.0
    %797 = vmatprep.subr.mxu0 0.0
    %798 = vmatpush1.msra.mxu0 0.0
    %799 = vmatprep.subr.mxu0 0.0
    %800 = vmatpush1.msra.mxu0 0.0
    %801 = vmatprep.subr.mxu0 0.0
    %802 = vmatpush1.msra.mxu0 0.0
    %803 = vmatprep.subr.mxu0 0.0
    %804 = vmatpush1.msra.mxu0 0.0
    %805 = vmatprep.subr.mxu0 0.0
    %806 = vmatpush1.msra.mxu0 0.0
    %807 = vmatprep.subr.mxu0 0.0
    %808 = vmatpush1.msra.mxu0 %v324
    %809 = vmatprep.subr.mxu0 0.0
    %810 = vmatpush1.msra.mxu0 %v323
    %811 = vmatprep.subr.mxu0 0.0
    %812 = vmatpush1.msra.mxu0 %v322
    %813 = vmatprep.subr.mxu0 0.0
    %814 = vmatpush1.msra.mxu0 %v321
    %815 = vmatprep.subr.mxu0 0.0
    %816 = vmatpush1.msra.mxu0 %v320
    %817 = vmatprep.subr.mxu0 0.0
    %818 = vmatpush1.msra.mxu0 %v319
    %819 = vmatprep.subr.mxu0 0.0
    %820 = vmatpush1.msra.mxu0 %v318
    %821 = vmatprep.subr.mxu0 0.0
    %822 = vmatpush1.msra.mxu0 %v317
    %823 = vmatprep.subr.mxu0 0.0
    %824 = vmatpush2.msra.mxu0 0.0
    %825 = vmatprep.subr.mxu0 0.0
    %826 = vmatpush2.msra.mxu0 0.0
    %827 = vmatprep.subr.mxu0 0.0
    %828 = vmatpush2.msra.mxu0 0.0
    %829 = vmatprep.subr.mxu0 0.0
    %830 = vmatpush2.msra.mxu0 0.0
    %831 = vmatprep.subr.mxu0 0.0
    %832 = vmatpush2.msra.mxu0 0.0
    %833 = vmatprep.subr.mxu0 0.0
    %834 = vmatpush2.msra.mxu0 0.0
    %835 = vmatprep.subr.mxu0 0.0
    %836 = vmatpush2.msra.mxu0 0.0
    %837 = vmatprep.subr.mxu0 0.0
    %838 = vmatpush2.msra.mxu0 0.0
    %839 = vmatprep.subr.mxu0 0.0
    %840 = vmatpush2.msra.mxu0 0.0
    %841 = vmatprep.subr.mxu0 0.0
    %842 = vmatpush2.msra.mxu0 0.0
    %843 = vmatprep.subr.mxu0 0.0
    %844 = vmatpush2.msra.mxu0 0.0
    %845 = vmatprep.subr.mxu0 0.0
    %846 = vmatpush2.msra.mxu0 0.0
    %847 = vmatprep.subr.mxu0 0.0
    %848 = vmatpush2.msra.mxu0 0.0
    %849 = vmatprep.subr.mxu0 0.0
    %850 = vmatpush2.msra.mxu0 0.0
    %851 = vmatprep.subr.mxu0 0.0
    %852 = vmatpush2.msra.mxu0 0.0
    %853 = vmatprep.subr.mxu0 0.0
    %854 = vmatpush2.msra.mxu0 0.0
    %855 = vmatprep.mubr.f32.mxu0 0.0
    %856 = vmatmul.mubr.f32.gmra.mxu0 %v789
    %v857 = vpop.f32.mrf.mxu0
    %v858 = vadd.f32 0.0, %v857
    %v859 = vpop.f32.mrf.mxu0
    %860 = vdwg.mxu0
    %v861 = vrcp.pop %v858
    %v862 = vmul.f32 1.0, %v861
    %864 = vrot.lane.b32.xlu0 %v862, 8
    %v865 = vpop.permute.xlu0 %864
    %v867 = vmul.f32 %v858, %v865
    %v868 = vrot.slane %v862, 6
    %v870 = vmul.f32 %v858, %v868
    %v871 = vrot.slane %v862, 4
    %v873 = vmul.f32 %v858, %v871
    %v874 = vld [vmem:[%s5] sm:$0xff]
    %v875 = vld [vmem:[%s5 + $0x8] sm:$0xff]
    %v876 = vld [vmem:[%s5 + $0x10] sm:$0xff]
    %v877 = vld [vmem:[%s5 + $0x18] sm:$0xff]
    %v878 = vld [vmem:[%s5 + $0x20] sm:$0xff]
    %v879 = vld [vmem:[%s5 + $0x28] sm:$0xff]
    %v880 = vld [vmem:[%s5 + $0x30] sm:$0xff]
    %v881 = vld [vmem:[%s5 + $0x38] sm:$0xff]
    %v882 = vld [vmem:[%s5 + $0x40] sm:$0xff]
    %v883 = vld [vmem:[%s5 + $0x48] sm:$0xff]
    %v884 = vld [vmem:[%s5 + $0x50] sm:$0xff]
    %v885 = vld [vmem:[%s5 + $0x58] sm:$0xff]
    %v886 = vld [vmem:[%s5 + $0x60] sm:$0xff]
    %v887 = vld [vmem:[%s5 + $0x68] sm:$0xff]
    %v888 = vld [vmem:[%s5 + $0x70] sm:$0xff]
    %v889 = vld [vmem:[%s5 + $0x78] sm:$0xff]
    %v890 = vld [vmem:[%s6] sm:$0xf]
    %v892 = vlaneseq
    %v893 = vshrl.u32 %v892, 7
    %v894 = vsub.s32 0, %v893
    %v895 = vrot.slane %v890, %v894
    %v896 = vlaneseq
    %v897 = vshrl.u32 %v896, 7
    %v898 = vsub.s32 1, %v897
    %v899 = vrot.slane %v890, %v898
    %v900 = vlaneseq
    %v901 = vshrl.u32 %v900, 7
    %v902 = vsub.s32 2, %v901
    %v903 = vrot.slane %v890, %v902
    %v904 = vlaneseq
    %v905 = vshrl.u32 %v904, 7
    %v906 = vsub.s32 3, %v905
    %v907 = vrot.slane %v890, %v906
    %v913 = vsel %vm299, %v400, 0
    %915 = vmatprep.subr.mxu0 0.0
    %916 = vmatpush1.msra.mxu0 0.0
    %917 = vmatprep.subr.mxu0 0.0
    %918 = vmatpush1.msra.mxu0 0.0
    %919 = vmatprep.subr.mxu0 0.0
    %920 = vmatpush1.msra.mxu0 0.0
    %921 = vmatprep.subr.mxu0 0.0
    %922 = vmatpush1.msra.mxu0 0.0
    %923 = vmatprep.subr.mxu0 0.0
    %924 = vmatpush1.msra.mxu0 0.0
    %925 = vmatprep.subr.mxu0 0.0
    %926 = vmatpush1.msra.mxu0 0.0
    %927 = vmatprep.subr.mxu0 0.0
    %928 = vmatpush1.msra.mxu0 0.0
    %929 = vmatprep.subr.mxu0 0.0
    %930 = vmatpush1.msra.mxu0 0.0
    %931 = vmatprep.subr.mxu0 0.0
    %932 = vmatpush1.msra.mxu0 0.0
    %933 = vmatprep.subr.mxu0 0.0
    %934 = vmatpush1.msra.mxu0 0.0
    %935 = vmatprep.subr.mxu0 0.0
    %936 = vmatpush1.msra.mxu0 0.0
    %937 = vmatprep.subr.mxu0 0.0
    %938 = vmatpush1.msra.mxu0 0.0
    %939 = vmatprep.subr.mxu0 %v887
    %940 = vmatpush1.msra.mxu0 %v886
    %941 = vmatprep.subr.mxu0 %v883
    %942 = vmatpush1.msra.mxu0 %v882
    %943 = vmatprep.subr.mxu0 %v879
    %944 = vmatpush1.msra.mxu0 %v878
    %945 = vmatprep.subr.mxu0 %v875
    %946 = vmatpush1.msra.mxu0 %v874
    %947 = vmatprep.subr.mxu0 0.0
    %948 = vmatpush2.msra.mxu0 0.0
    %949 = vmatprep.subr.mxu0 0.0
    %950 = vmatpush2.msra.mxu0 0.0
    %951 = vmatprep.subr.mxu0 0.0
    %952 = vmatpush2.msra.mxu0 0.0
    %953 = vmatprep.subr.mxu0 0.0
    %954 = vmatpush2.msra.mxu0 0.0
    %955 = vmatprep.subr.mxu0 0.0
    %956 = vmatpush2.msra.mxu0 0.0
    %957 = vmatprep.subr.mxu0 0.0
    %958 = vmatpush2.msra.mxu0 0.0
    %959 = vmatprep.subr.mxu0 0.0
    %960 = vmatpush2.msra.mxu0 0.0
    %961 = vmatprep.subr.mxu0 0.0
    %962 = vmatpush2.msra.mxu0 0.0
    %963 = vmatprep.subr.mxu0 0.0
    %964 = vmatpush2.msra.mxu0 0.0
    %965 = vmatprep.subr.mxu0 0.0
    %966 = vmatpush2.msra.mxu0 0.0
    %967 = vmatprep.subr.mxu0 0.0
    %968 = vmatpush2.msra.mxu0 0.0
    %969 = vmatprep.subr.mxu0 0.0
    %970 = vmatpush2.msra.mxu0 0.0
    %971 = vmatprep.subr.mxu0 0.0
    %972 = vmatpush2.msra.mxu0 0.0
    %973 = vmatprep.subr.mxu0 0.0
    %974 = vmatpush2.msra.mxu0 0.0
    %975 = vmatprep.subr.mxu0 0.0
    %976 = vmatpush2.msra.mxu0 0.0
    %977 = vmatprep.subr.mxu0 0.0
    %978 = vmatpush2.msra.mxu0 0.0
    %979 = vmatprep.mubr.f32.mxu0 0.0
    %980 = vmatmul.mubr.f32.gmra.mxu0 %v913
    %v981 = vpop.f32.mrf.mxu0
    %v982 = vadd.f32 %v895, %v981
    %v983 = vpop.f32.mrf.mxu0
    %v984 = vadd.f32 %v899, %v983
    %985 = vdwg.mxu0
    %986 = vmatprep.subr.mxu0 0.0
    %987 = vmatpush1.msra.mxu0 0.0
    %988 = vmatprep.subr.mxu0 0.0
    %989 = vmatpush1.msra.mxu0 0.0
    %990 = vmatprep.subr.mxu0 0.0
    %991 = vmatpush1.msra.mxu0 0.0
    %992 = vmatprep.subr.mxu0 0.0
    %993 = vmatpush1.msra.mxu0 0.0
    %994 = vmatprep.subr.mxu0 0.0
    %995 = vmatpush1.msra.mxu0 0.0
    %996 = vmatprep.subr.mxu0 0.0
    %997 = vmatpush1.msra.mxu0 0.0
    %998 = vmatprep.subr.mxu0 0.0
    %999 = vmatpush1.msra.mxu0 0.0
    %1000 = vmatprep.subr.mxu0 0.0
    %1001 = vmatpush1.msra.mxu0 0.0
    %1002 = vmatprep.subr.mxu0 0.0
    %1003 = vmatpush1.msra.mxu0 0.0
    %1004 = vmatprep.subr.mxu0 0.0
    %1005 = vmatpush1.msra.mxu0 0.0
    %1006 = vmatprep.subr.mxu0 0.0
    %1007 = vmatpush1.msra.mxu0 0.0
    %1008 = vmatprep.subr.mxu0 0.0
    %1009 = vmatpush1.msra.mxu0 0.0
    %1010 = vmatprep.subr.mxu0 %v889
    %1011 = vmatpush1.msra.mxu0 %v888
    %1012 = vmatprep.subr.mxu0 %v885
    %1013 = vmatpush1.msra.mxu0 %v884
    %1014 = vmatprep.subr.mxu0 %v881
    %1015 = vmatpush1.msra.mxu0 %v880
    %1016 = vmatprep.subr.mxu0 %v877
    %1017 = vmatpush1.msra.mxu0 %v876
    %1018 = vmatprep.subr.mxu0 0.0
    %1019 = vmatpush2.msra.mxu0 0.0
    %1020 = vmatprep.subr.mxu0 0.0
    %1021 = vmatpush2.msra.mxu0 0.0
    %1022 = vmatprep.subr.mxu0 0.0
    %1023 = vmatpush2.msra.mxu0 0.0
    %1024 = vmatprep.subr.mxu0 0.0
    %1025 = vmatpush2.msra.mxu0 0.0
    %1026 = vmatprep.subr.mxu0 0.0
    %1027 = vmatpush2.msra.mxu0 0.0
    %1028 = vmatprep.subr.mxu0 0.0
    %1029 = vmatpush2.msra.mxu0 0.0
    %1030 = vmatprep.subr.mxu0 0.0
    %1031 = vmatpush2.msra.mxu0 0.0
    %1032 = vmatprep.subr.mxu0 0.0
    %1033 = vmatpush2.msra.mxu0 0.0
    %1034 = vmatprep.subr.mxu0 0.0
    %1035 = vmatpush2.msra.mxu0 0.0
    %1036 = vmatprep.subr.mxu0 0.0
    %1037 = vmatpush2.msra.mxu0 0.0
    %1038 = vmatprep.subr.mxu0 0.0
    %1039 = vmatpush2.msra.mxu0 0.0
    %1040 = vmatprep.subr.mxu0 0.0
    %1041 = vmatpush2.msra.mxu0 0.0
    %1042 = vmatprep.subr.mxu0 0.0
    %1043 = vmatpush2.msra.mxu0 0.0
    %1044 = vmatprep.subr.mxu0 0.0
    %1045 = vmatpush2.msra.mxu0 0.0
    %1046 = vmatprep.subr.mxu0 0.0
    %1047 = vmatpush2.msra.mxu0 0.0
    %1048 = vmatprep.subr.mxu0 0.0
    %1049 = vmatpush2.msra.mxu0 0.0
    %1050 = vmatprep.mubr.f32.mxu0 0.0
    %1051 = vmatmul.mubr.f32.gmra.mxu0 %v913
    %v1052 = vpop.f32.mrf.mxu0
    %v1053 = vadd.f32 %v903, %v1052
    %v1054 = vpop.f32.mrf.mxu0
    %v1055 = vadd.f32 %v907, %v1054
    %1056 = vdwg.mxu0
    %v1058 = vrot.slane %v873, 2
    %1059 = vrot.lane.b32.xlu0 %v1058, 8
    %v1060 = vpop.permute.xlu0 %1059
    %v1063 = vrot.slane %v867, 6
    %1064 = vrot.lane.b32.xlu0 %v1063, 8
    %v1065 = vpop.permute.xlu0 %1064
    %vm1067 = vcmask 64512
    %v1068 = vsel %vm1067, %v870, %v1060
    %vm1069 = vcmask 130048
    %v1070 = vsel %vm1069, %v1068, %v1065
    %vm1071 = vcmask 191490
    %1072 = vst.msk [vmem:[%s22 - $0x2] sm:$0xc] %vm1071, %v1070
    %1073 = vmatprep.subr.mxu0 0.0
    %1074 = vmatpush1.msra.mxu0 %v597
    %1075 = vmatprep.subr.mxu0 0.0
    %1076 = vmatpush1.msra.mxu0 %v592
    %1077 = vmatprep.subr.mxu0 0.0
    %1078 = vmatpush1.msra.mxu0 %v587
    %1079 = vmatprep.subr.mxu0 0.0
    %1080 = vmatpush1.msra.mxu0 %v582
    %1081 = vmatprep.subr.mxu0 0.0
    %1082 = vmatpush1.msra.mxu0 %v577
    %1083 = vmatprep.subr.mxu0 0.0
    %1084 = vmatpush1.msra.mxu0 %v572
    %1085 = vmatprep.subr.mxu0 0.0
    %1086 = vmatpush1.msra.mxu0 %v567
    %1087 = vmatprep.subr.mxu0 0.0
    %1088 = vmatpush1.msra.mxu0 %v562
    %1089 = vmatprep.subr.mxu0 0.0
    %1090 = vmatpush1.msra.mxu0 %v557
    %1091 = vmatprep.subr.mxu0 0.0
    %1092 = vmatpush1.msra.mxu0 %v552
    %1093 = vmatprep.subr.mxu0 0.0
    %1094 = vmatpush1.msra.mxu0 %v547
    %1095 = vmatprep.subr.mxu0 0.0
    %1096 = vmatpush1.msra.mxu0 %v542
    %1097 = vmatprep.subr.mxu0 0.0
    %1098 = vmatpush1.msra.mxu0 %v537
    %1099 = vmatprep.subr.mxu0 0.0
    %1100 = vmatpush1.msra.mxu0 %v532
    %1101 = vmatprep.subr.mxu0 0.0
    %1102 = vmatpush1.msra.mxu0 %v527
    %1103 = vmatprep.subr.mxu0 0.0
    %1104 = vmatpush1.msra.mxu0 %v522
    %1105 = vmatprep.subr.mxu0 0.0
    %1106 = vmatpush2.msra.mxu0 0.0
    %1107 = vmatprep.subr.mxu0 0.0
    %1108 = vmatpush2.msra.mxu0 0.0
    %1109 = vmatprep.subr.mxu0 0.0
    %1110 = vmatpush2.msra.mxu0 0.0
    %1111 = vmatprep.subr.mxu0 0.0
    %1112 = vmatpush2.msra.mxu0 0.0
    %1113 = vmatprep.subr.mxu0 0.0
    %1114 = vmatpush2.msra.mxu0 0.0
    %1115 = vmatprep.subr.mxu0 0.0
    %1116 = vmatpush2.msra.mxu0 0.0
    %1117 = vmatprep.subr.mxu0 0.0
    %1118 = vmatpush2.msra.mxu0 0.0
    %1119 = vmatprep.subr.mxu0 0.0
    %1120 = vmatpush2.msra.mxu0 0.0
    %1121 = vmatprep.subr.mxu0 0.0
    %1122 = vmatpush2.msra.mxu0 0.0
    %1123 = vmatprep.subr.mxu0 0.0
    %1124 = vmatpush2.msra.mxu0 0.0
    %1125 = vmatprep.subr.mxu0 0.0
    %1126 = vmatpush2.msra.mxu0 0.0
    %1127 = vmatprep.subr.mxu0 0.0
    %1128 = vmatpush2.msra.mxu0 0.0
    %1129 = vmatprep.subr.mxu0 0.0
    %1130 = vmatpush2.msra.mxu0 0.0
    %1131 = vmatprep.subr.mxu0 0.0
    %1132 = vmatpush2.msra.mxu0 0.0
    %1133 = vmatprep.subr.mxu0 0.0
    %1134 = vmatpush2.msra.mxu0 0.0
    %1135 = vmatprep.subr.mxu0 0.0
    %1136 = vmatpush2.msra.mxu0 0.0
    %1137 = vmatprep.mubr.f32.mxu0 0.0
    %1138 = vmatmul.mubr.f32.gmra.mxu0 %v316
    %v1139 = vpop.f32.mrf.mxu0
    %v1140 = vadd.f32 0.0, %v1139
    %v1141 = vpop.f32.mrf.mxu0
    %1142 = vdwg.mxu0
    %v1143 = vld [vmem:[%s2] sm:$0xff]
    %v1144 = vld [vmem:[%s2 + $0x8] sm:$0xff]
    %v1145 = vld [vmem:[%s2 + $0x10] sm:$0xff]
    %v1146 = vld [vmem:[%s2 + $0x18] sm:$0xff]
    %v1147 = vld [vmem:[%s2 + $0x20] sm:$0xff]
    %v1148 = vld [vmem:[%s2 + $0x28] sm:$0xff]
    %v1149 = vld [vmem:[%s2 + $0x30] sm:$0xff]
    %v1150 = vld [vmem:[%s2 + $0x38] sm:$0xff]
    %v1152 = vsel %vm600, %v1140, 0
    %1154 = vmatprep.subr.mxu0 0.0
    %1155 = vmatpush1.msra.mxu0 0.0
    %1156 = vmatprep.subr.mxu0 0.0
    %1157 = vmatpush1.msra.mxu0 0.0
    %1158 = vmatprep.subr.mxu0 0.0
    %1159 = vmatpush1.msra.mxu0 0.0
    %1160 = vmatprep.subr.mxu0 0.0
    %1161 = vmatpush1.msra.mxu0 0.0
    %1162 = vmatprep.subr.mxu0 0.0
    %1163 = vmatpush1.msra.mxu0 0.0
    %1164 = vmatprep.subr.mxu0 0.0
    %1165 = vmatpush1.msra.mxu0 0.0
    %1166 = vmatprep.subr.mxu0 0.0
    %1167 = vmatpush1.msra.mxu0 0.0
    %1168 = vmatprep.subr.mxu0 0.0
    %1169 = vmatpush1.msra.mxu0 0.0
    %1170 = vmatprep.subr.mxu0 0.0
    %1171 = vmatpush1.msra.mxu0 %v1150
    %1172 = vmatprep.subr.mxu0 0.0
    %1173 = vmatpush1.msra.mxu0 %v1149
    %1174 = vmatprep.subr.mxu0 0.0
    %1175 = vmatpush1.msra.mxu0 %v1148
    %1176 = vmatprep.subr.mxu0 0.0
    %1177 = vmatpush1.msra.mxu0 %v1147
    %1178 = vmatprep.subr.mxu0 0.0
    %1179 = vmatpush1.msra.mxu0 %v1146
    %1180 = vmatprep.subr.mxu0 0.0
    %1181 = vmatpush1.msra.mxu0 %v1145
    %1182 = vmatprep.subr.mxu0 0.0
    %1183 = vmatpush1.msra.mxu0 %v1144
    %1184 = vmatprep.subr.mxu0 0.0
    %1185 = vmatpush1.msra.mxu0 %v1143
    %1186 = vmatprep.subr.mxu0 0.0
    %1187 = vmatpush2.msra.mxu0 0.0
    %1188 = vmatprep.subr.mxu0 0.0
    %1189 = vmatpush2.msra.mxu0 0.0
    %1190 = vmatprep.subr.mxu0 0.0
    %1191 = vmatpush2.msra.mxu0 0.0
    %1192 = vmatprep.subr.mxu0 0.0
    %1193 = vmatpush2.msra.mxu0 0.0
    %1194 = vmatprep.subr.mxu0 0.0
    %1195 = vmatpush2.msra.mxu0 0.0
    %1196 = vmatprep.subr.mxu0 0.0
    %1197 = vmatpush2.msra.mxu0 0.0
    %1198 = vmatprep.subr.mxu0 0.0
    %1199 = vmatpush2.msra.mxu0 0.0
    %1200 = vmatprep.subr.mxu0 0.0
    %1201 = vmatpush2.msra.mxu0 0.0
    %1202 = vmatprep.subr.mxu0 0.0
    %1203 = vmatpush2.msra.mxu0 0.0
    %1204 = vmatprep.subr.mxu0 0.0
    %1205 = vmatpush2.msra.mxu0 0.0
    %1206 = vmatprep.subr.mxu0 0.0
    %1207 = vmatpush2.msra.mxu0 0.0
    %1208 = vmatprep.subr.mxu0 0.0
    %1209 = vmatpush2.msra.mxu0 0.0
    %1210 = vmatprep.subr.mxu0 0.0
    %1211 = vmatpush2.msra.mxu0 0.0
    %1212 = vmatprep.subr.mxu0 0.0
    %1213 = vmatpush2.msra.mxu0 0.0
    %1214 = vmatprep.subr.mxu0 0.0
    %1215 = vmatpush2.msra.mxu0 0.0
    %1216 = vmatprep.subr.mxu0 0.0
    %1217 = vmatpush2.msra.mxu0 0.0
    %1218 = vmatprep.mubr.f32.mxu0 0.0
    %1219 = vmatmul.mubr.f32.gmra.mxu0 %v1152
    %v1220 = vpop.f32.mrf.mxu0
    %v1221 = vadd.f32 0.0, %v1220
    %v1222 = vpop.f32.mrf.mxu0
    %1223 = vdwg.mxu0
    %v1224 = vmul.f32 %v1221, 0.001953125
    %v1225 = vld [vmem:[%s9] sm:$0xff]
    %v1226 = vld [vmem:[%s9 + $0x8] sm:$0xff]
    %v1227 = vld [vmem:[%s9 + $0x10] sm:$0xff]
    %v1228 = vld [vmem:[%s9 + $0x18] sm:$0xff]
    %v1229 = vld [vmem:[%s9 + $0x20] sm:$0xff]
    %v1230 = vld [vmem:[%s9 + $0x28] sm:$0xff]
    %v1231 = vld [vmem:[%s9 + $0x30] sm:$0xff]
    %v1232 = vld [vmem:[%s9 + $0x38] sm:$0xff]
    %v1233 = vld [vmem:[%s9 + $0x40] sm:$0xff]
    %v1234 = vld [vmem:[%s9 + $0x48] sm:$0xff]
    %v1235 = vld [vmem:[%s9 + $0x50] sm:$0xff]
    %v1236 = vld [vmem:[%s9 + $0x58] sm:$0xff]
    %v1237 = vld [vmem:[%s9 + $0x60] sm:$0xff]
    %v1238 = vld [vmem:[%s9 + $0x68] sm:$0xff]
    %v1239 = vld [vmem:[%s9 + $0x70] sm:$0xff]
    %v1240 = vld [vmem:[%s9 + $0x78] sm:$0xff]
    %v1241 = vld [vmem:[%s9 + $0x80] sm:$0xff]
    %v1242 = vld [vmem:[%s9 + $0x88] sm:$0xff]
    %v1243 = vld [vmem:[%s9 + $0x90] sm:$0xff]
    %v1244 = vld [vmem:[%s9 + $0x98] sm:$0xff]
    %v1245 = vld [vmem:[%s9 + $0xa0] sm:$0xff]
    %v1246 = vld [vmem:[%s9 + $0xa8] sm:$0xff]
    %v1247 = vld [vmem:[%s9 + $0xb0] sm:$0xff]
    %v1248 = vld [vmem:[%s9 + $0xb8] sm:$0xff]
    %v1249 = vld [vmem:[%s9 + $0xc0] sm:$0xff]
    %v1250 = vld [vmem:[%s9 + $0xc8] sm:$0xff]
    %v1251 = vld [vmem:[%s9 + $0xd0] sm:$0xff]
    %v1252 = vld [vmem:[%s9 + $0xd8] sm:$0xff]
    %v1253 = vld [vmem:[%s9 + $0xe0] sm:$0xff]
    %v1254 = vld [vmem:[%s9 + $0xe8] sm:$0xff]
    %v1255 = vld [vmem:[%s9 + $0xf0] sm:$0xff]
    %v1256 = vld [vmem:[%s9 + $0xf8] sm:$0xff]
    %v1257 = vld [vmem:[%s10] sm:$0xff]
    %v1259 = vrot.slane %v870, 2
    %v1260 = vsel %vm1067, %v1259, 0
    %1262 = vmatprep.subr.mxu0 0.0
    %1263 = vmatpush1.msra.mxu0 0.0
    %1264 = vmatprep.subr.mxu0 0.0
    %1265 = vmatpush1.msra.mxu0 0.0
    %1266 = vmatprep.subr.mxu0 0.0
    %1267 = vmatpush1.msra.mxu0 0.0
    %1268 = vmatprep.subr.mxu0 0.0
    %1269 = vmatpush1.msra.mxu0 0.0
    %1270 = vmatprep.subr.mxu0 0.0
    %1271 = vmatpush1.msra.mxu0 0.0
    %1272 = vmatprep.subr.mxu0 0.0
    %1273 = vmatpush1.msra.mxu0 0.0
    %1274 = vmatprep.subr.mxu0 0.0
    %1275 = vmatpush1.msra.mxu0 0.0
    %1276 = vmatprep.subr.mxu0 0.0
    %1277 = vmatpush1.msra.mxu0 0.0
    %1278 = vmatprep.subr.mxu0 0.0
    %1279 = vmatpush1.msra.mxu0 0.0
    %1280 = vmatprep.subr.mxu0 0.0
    %1281 = vmatpush1.msra.mxu0 0.0
    %1282 = vmatprep.subr.mxu0 0.0
    %1283 = vmatpush1.msra.mxu0 0.0
    %1284 = vmatprep.subr.mxu0 0.0
    %1285 = vmatpush1.msra.mxu0 0.0
    %1286 = vmatprep.subr.mxu0 0.0
    %1287 = vmatpush1.msra.mxu0 0.0
    %1288 = vmatprep.subr.mxu0 0.0
    %1289 = vmatpush1.msra.mxu0 0.0
    %1290 = vmatprep.subr.mxu0 0.0
    %1291 = vmatpush1.msra.mxu0 0.0
    %1292 = vmatprep.subr.mxu0 0.0
    %1293 = vmatpush1.msra.mxu0 %v1257
    %1294 = vmatprep.subr.mxu0 0.0
    %1295 = vmatpush2.msra.mxu0 0.0
    %1296 = vmatprep.subr.mxu0 0.0
    %1297 = vmatpush2.msra.mxu0 0.0
    %1298 = vmatprep.subr.mxu0 0.0
    %1299 = vmatpush2.msra.mxu0 0.0
    %1300 = vmatprep.subr.mxu0 0.0
    %1301 = vmatpush2.msra.mxu0 0.0
    %1302 = vmatprep.subr.mxu0 0.0
    %1303 = vmatpush2.msra.mxu0 0.0
    %1304 = vmatprep.subr.mxu0 0.0
    %1305 = vmatpush2.msra.mxu0 0.0
    %1306 = vmatprep.subr.mxu0 0.0
    %1307 = vmatpush2.msra.mxu0 0.0
    %1308 = vmatprep.subr.mxu0 0.0
    %1309 = vmatpush2.msra.mxu0 0.0
    %1310 = vmatprep.subr.mxu0 0.0
    %1311 = vmatpush2.msra.mxu0 0.0
    %1312 = vmatprep.subr.mxu0 0.0
    %1313 = vmatpush2.msra.mxu0 0.0
    %1314 = vmatprep.subr.mxu0 0.0
    %1315 = vmatpush2.msra.mxu0 0.0
    %1316 = vmatprep.subr.mxu0 0.0
    %1317 = vmatpush2.msra.mxu0 0.0
    %1318 = vmatprep.subr.mxu0 0.0
    %1319 = vmatpush2.msra.mxu0 0.0
    %1320 = vmatprep.subr.mxu0 0.0
    %1321 = vmatpush2.msra.mxu0 0.0
    %1322 = vmatprep.subr.mxu0 0.0
    %1323 = vmatpush2.msra.mxu0 0.0
    %1324 = vmatprep.subr.mxu0 0.0
    %1325 = vmatpush2.msra.mxu0 0.0
    %1326 = vmatprep.mubr.f32.mxu0 0.0
    %1327 = vmatmul.mubr.f32.gmra.mxu0 %v1260
    %v1328 = vpop.f32.mrf.mxu0
    %v1329 = vadd.f32 0.0, %v1328
    %v1330 = vpop.f32.mrf.mxu0
    %1331 = vdwg.mxu0
    %1335 = vrot.lane.b32.xlu0 %v984, 64
    %v1336 = vpop.permute.xlu0 %1335
    %1337 = vrot.lane.b32.xlu0 %v1053, 64
    %v1338 = vpop.permute.xlu0 %1337
    %1339 = vrot.lane.b32.xlu0 %v1055, 64
    %v1340 = vpop.permute.xlu0 %1339
    %v1341 = vsel %vm600, %v1336, %v1338
    %v1342 = vsel %vm600, %v1338, %v1340
    %1345 = vmatprep.subr.mxu0 0.0
    %1346 = vmatpush1.msra.mxu0 %v1240
    %1347 = vmatprep.subr.mxu0 0.0
    %1348 = vmatpush1.msra.mxu0 %v1239
    %1349 = vmatprep.subr.mxu0 0.0
    %1350 = vmatpush1.msra.mxu0 %v1238
    %1351 = vmatprep.subr.mxu0 0.0
    %1352 = vmatpush1.msra.mxu0 %v1237
    %1353 = vmatprep.subr.mxu0 0.0
    %1354 = vmatpush1.msra.mxu0 %v1236
    %1355 = vmatprep.subr.mxu0 0.0
    %1356 = vmatpush1.msra.mxu0 %v1235
    %1357 = vmatprep.subr.mxu0 0.0
    %1358 = vmatpush1.msra.mxu0 %v1234
    %1359 = vmatprep.subr.mxu0 0.0
    %1360 = vmatpush1.msra.mxu0 %v1233
    %1361 = vmatprep.subr.mxu0 0.0
    %1362 = vmatpush1.msra.mxu0 %v1232
    %1363 = vmatprep.subr.mxu0 0.0
    %1364 = vmatpush1.msra.mxu0 %v1231
    %1365 = vmatprep.subr.mxu0 0.0
    %1366 = vmatpush1.msra.mxu0 %v1230
    %1367 = vmatprep.subr.mxu0 0.0
    %1368 = vmatpush1.msra.mxu0 %v1229
    %1369 = vmatprep.subr.mxu0 0.0
    %1370 = vmatpush1.msra.mxu0 %v1228
    %1371 = vmatprep.subr.mxu0 0.0
    %1372 = vmatpush1.msra.mxu0 %v1227
    %1373 = vmatprep.subr.mxu0 0.0
    %1374 = vmatpush1.msra.mxu0 %v1226
    %1375 = vmatprep.subr.mxu0 0.0
    %1376 = vmatpush1.msra.mxu0 %v1225
    %1377 = vmatprep.subr.mxu0 0.0
    %1378 = vmatpush2.msra.mxu0 %v1256
    %1379 = vmatprep.subr.mxu0 0.0
    %1380 = vmatpush2.msra.mxu0 %v1255
    %1381 = vmatprep.subr.mxu0 0.0
    %1382 = vmatpush2.msra.mxu0 %v1254
    %1383 = vmatprep.subr.mxu0 0.0
    %1384 = vmatpush2.msra.mxu0 %v1253
    %1385 = vmatprep.subr.mxu0 0.0
    %1386 = vmatpush2.msra.mxu0 %v1252
    %1387 = vmatprep.subr.mxu0 0.0
    %1388 = vmatpush2.msra.mxu0 %v1251
    %1389 = vmatprep.subr.mxu0 0.0
    %1390 = vmatpush2.msra.mxu0 %v1250
    %1391 = vmatprep.subr.mxu0 0.0
    %1392 = vmatpush2.msra.mxu0 %v1249
    %1393 = vmatprep.subr.mxu0 0.0
    %1394 = vmatpush2.msra.mxu0 %v1248
    %1395 = vmatprep.subr.mxu0 0.0
    %1396 = vmatpush2.msra.mxu0 %v1247
    %1397 = vmatprep.subr.mxu0 0.0
    %1398 = vmatpush2.msra.mxu0 %v1246
    %1399 = vmatprep.subr.mxu0 0.0
    %1400 = vmatpush2.msra.mxu0 %v1245
    %1401 = vmatprep.subr.mxu0 0.0
    %1402 = vmatpush2.msra.mxu0 %v1244
    %1403 = vmatprep.subr.mxu0 0.0
    %1404 = vmatpush2.msra.mxu0 %v1243
    %1405 = vmatprep.subr.mxu0 0.0
    %1406 = vmatpush2.msra.mxu0 %v1242
    %1407 = vmatprep.subr.mxu0 0.0
    %1408 = vmatpush2.msra.mxu0 %v1241
    %1409 = vmatprep.mubr.f32.mxu0 %v1342
    %1410 = vmatmul.mubr.f32.gmra.mxu0 %v1341
    %v1411 = vpop.f32.mrf.mxu0
    %v1412 = vadd.f32 %v1329, %v1411
    %v1413 = vpop.f32.mrf.mxu0
    %1414 = vdwg.mxu0
    %v1415 = vld [vmem:[%s11] sm:$0xff]
    %v1416 = vrot.slane %v873, 4
    %v1417 = vsel %vm1067, %v1416, 0
    %1419 = vmatprep.subr.mxu0 0.0
    %1420 = vmatpush1.msra.mxu0 0.0
    %1421 = vmatprep.subr.mxu0 0.0
    %1422 = vmatpush1.msra.mxu0 0.0
    %1423 = vmatprep.subr.mxu0 0.0
    %1424 = vmatpush1.msra.mxu0 0.0
    %1425 = vmatprep.subr.mxu0 0.0
    %1426 = vmatpush1.msra.mxu0 0.0
    %1427 = vmatprep.subr.mxu0 0.0
    %1428 = vmatpush1.msra.mxu0 0.0
    %1429 = vmatprep.subr.mxu0 0.0
    %1430 = vmatpush1.msra.mxu0 0.0
    %1431 = vmatprep.subr.mxu0 0.0
    %1432 = vmatpush1.msra.mxu0 0.0
    %1433 = vmatprep.subr.mxu0 0.0
    %1434 = vmatpush1.msra.mxu0 0.0
    %1435 = vmatprep.subr.mxu0 0.0
    %1436 = vmatpush1.msra.mxu0 0.0
    %1437 = vmatprep.subr.mxu0 0.0
    %1438 = vmatpush1.msra.mxu0 0.0
    %1439 = vmatprep.subr.mxu0 0.0
    %1440 = vmatpush1.msra.mxu0 0.0
    %1441 = vmatprep.subr.mxu0 0.0
    %1442 = vmatpush1.msra.mxu0 0.0
    %1443 = vmatprep.subr.mxu0 0.0
    %1444 = vmatpush1.msra.mxu0 0.0
    %1445 = vmatprep.subr.mxu0 0.0
    %1446 = vmatpush1.msra.mxu0 0.0
    %1447 = vmatprep.subr.mxu0 0.0
    %1448 = vmatpush1.msra.mxu0 0.0
    %1449 = vmatprep.subr.mxu0 0.0
    %1450 = vmatpush1.msra.mxu0 %v1415
    %1451 = vmatprep.subr.mxu0 0.0
    %1452 = vmatpush2.msra.mxu0 0.0
    %1453 = vmatprep.subr.mxu0 0.0
    %1454 = vmatpush2.msra.mxu0 0.0
    %1455 = vmatprep.subr.mxu0 0.0
    %1456 = vmatpush2.msra.mxu0 0.0
    %1457 = vmatprep.subr.mxu0 0.0
    %1458 = vmatpush2.msra.mxu0 0.0
    %1459 = vmatprep.subr.mxu0 0.0
    %1460 = vmatpush2.msra.mxu0 0.0
    %1461 = vmatprep.subr.mxu0 0.0
    %1462 = vmatpush2.msra.mxu0 0.0
    %1463 = vmatprep.subr.mxu0 0.0
    %1464 = vmatpush2.msra.mxu0 0.0
    %1465 = vmatprep.subr.mxu0 0.0
    %1466 = vmatpush2.msra.mxu0 0.0
    %1467 = vmatprep.subr.mxu0 0.0
    %1468 = vmatpush2.msra.mxu0 0.0
    %1469 = vmatprep.subr.mxu0 0.0
    %1470 = vmatpush2.msra.mxu0 0.0
    %1471 = vmatprep.subr.mxu0 0.0
    %1472 = vmatpush2.msra.mxu0 0.0
    %1473 = vmatprep.subr.mxu0 0.0
    %1474 = vmatpush2.msra.mxu0 0.0
    %1475 = vmatprep.subr.mxu0 0.0
    %1476 = vmatpush2.msra.mxu0 0.0
    %1477 = vmatprep.subr.mxu0 0.0
    %1478 = vmatpush2.msra.mxu0 0.0
    %1479 = vmatprep.subr.mxu0 0.0
    %1480 = vmatpush2.msra.mxu0 0.0
    %1481 = vmatprep.subr.mxu0 0.0
    %1482 = vmatpush2.msra.mxu0 0.0
    %1483 = vmatprep.mubr.f32.mxu0 0.0
    %1484 = vmatmul.mubr.f32.gmra.mxu0 %v1417
    %v1485 = vpop.f32.mrf.mxu0
    %v1486 = vadd.f32 0.0, %v1485
    %v1487 = vpop.f32.mrf.mxu0
    %1488 = vdwg.mxu0
    %v1489 = vadd.f32 %v1412, %v1486
    %v1490 = vld [vmem:[%s12] sm:$0xff]
    %1491 = vrot.lane.b32.xlu0 %v867, 120
    %v1492 = vpop.permute.xlu0 %1491
    %v1493 = vsel %vm1067, %v1492, 0
    %1495 = vmatprep.subr.mxu0 0.0
    %1496 = vmatpush1.msra.mxu0 0.0
    %1497 = vmatprep.subr.mxu0 0.0
    %1498 = vmatpush1.msra.mxu0 0.0
    %1499 = vmatprep.subr.mxu0 0.0
    %1500 = vmatpush1.msra.mxu0 0.0
    %1501 = vmatprep.subr.mxu0 0.0
    %1502 = vmatpush1.msra.mxu0 0.0
    %1503 = vmatprep.subr.mxu0 0.0
    %1504 = vmatpush1.msra.mxu0 0.0
    %1505 = vmatprep.subr.mxu0 0.0
    %1506 = vmatpush1.msra.mxu0 0.0
    %1507 = vmatprep.subr.mxu0 0.0
    %1508 = vmatpush1.msra.mxu0 0.0
    %1509 = vmatprep.subr.mxu0 0.0
    %1510 = vmatpush1.msra.mxu0 0.0
    %1511 = vmatprep.subr.mxu0 0.0
    %1512 = vmatpush1.msra.mxu0 0.0
    %1513 = vmatprep.subr.mxu0 0.0
    %1514 = vmatpush1.msra.mxu0 0.0
    %1515 = vmatprep.subr.mxu0 0.0
    %1516 = vmatpush1.msra.mxu0 0.0
    %1517 = vmatprep.subr.mxu0 0.0
    %1518 = vmatpush1.msra.mxu0 0.0
    %1519 = vmatprep.subr.mxu0 0.0
    %1520 = vmatpush1.msra.mxu0 0.0
    %1521 = vmatprep.subr.mxu0 0.0
    %1522 = vmatpush1.msra.mxu0 0.0
    %1523 = vmatprep.subr.mxu0 0.0
    %1524 = vmatpush1.msra.mxu0 0.0
    %1525 = vmatprep.subr.mxu0 0.0
    %1526 = vmatpush1.msra.mxu0 %v1490
    %1527 = vmatprep.subr.mxu0 0.0
    %1528 = vmatpush2.msra.mxu0 0.0
    %1529 = vmatprep.subr.mxu0 0.0
    %1530 = vmatpush2.msra.mxu0 0.0
    %1531 = vmatprep.subr.mxu0 0.0
    %1532 = vmatpush2.msra.mxu0 0.0
    %1533 = vmatprep.subr.mxu0 0.0
    %1534 = vmatpush2.msra.mxu0 0.0
    %1535 = vmatprep.subr.mxu0 0.0
    %1536 = vmatpush2.msra.mxu0 0.0
    %1537 = vmatprep.subr.mxu0 0.0
    %1538 = vmatpush2.msra.mxu0 0.0
    %1539 = vmatprep.subr.mxu0 0.0
    %1540 = vmatpush2.msra.mxu0 0.0
    %1541 = vmatprep.subr.mxu0 0.0
    %1542 = vmatpush2.msra.mxu0 0.0
    %1543 = vmatprep.subr.mxu0 0.0
    %1544 = vmatpush2.msra.mxu0 0.0
    %1545 = vmatprep.subr.mxu0 0.0
    %1546 = vmatpush2.msra.mxu0 0.0
    %1547 = vmatprep.subr.mxu0 0.0
    %1548 = vmatpush2.msra.mxu0 0.0
    %1549 = vmatprep.subr.mxu0 0.0
    %1550 = vmatpush2.msra.mxu0 0.0
    %1551 = vmatprep.subr.mxu0 0.0
    %1552 = vmatpush2.msra.mxu0 0.0
    %1553 = vmatprep.subr.mxu0 0.0
    %1554 = vmatpush2.msra.mxu0 0.0
    %1555 = vmatprep.subr.mxu0 0.0
    %1556 = vmatpush2.msra.mxu0 0.0
    %1557 = vmatprep.subr.mxu0 0.0
    %1558 = vmatpush2.msra.mxu0 0.0
    %1559 = vmatprep.mubr.f32.mxu0 0.0
    %1560 = vmatmul.mubr.f32.gmra.mxu0 %v1493
    %v1561 = vpop.f32.mrf.mxu0
    %v1562 = vadd.f32 0.0, %v1561
    %v1563 = vpop.f32.mrf.mxu0
    %1564 = vdwg.mxu0
    %v1565 = vadd.f32 %v1489, %v1562
    %v1566 = vld [vmem:[%s13] sm:$0x1]
    %v1568 = vlaneseq
    %v1569 = vshrl.u32 %v1568, 7
    %v1570 = vsub.s32 0, %v1569
    %v1571 = vrot.slane %v1566, %v1570
    %v1573 = vadd.f32 %v1565, %v1571
    %vm1574 = vcmask 1025024
    %1575 = vst.msk [vmem:[%s23] sm:$0x3] %vm1574, %v1573
    %v1576 = vld [vmem:[%s14] sm:$0xff]
    %v1577 = vld [vmem:[%s14 + $0x8] sm:$0xff]
    %v1578 = vld [vmem:[%s14 + $0x10] sm:$0xff]
    %v1579 = vld [vmem:[%s14 + $0x18] sm:$0xff]
    %v1580 = vld [vmem:[%s15] sm:$0x1]
    %v1582 = vlaneseq
    %v1583 = vshrl.u32 %v1582, 7
    %v1584 = vsub.s32 0, %v1583
    %v1585 = vrot.slane %v1580, %v1584
    %v1588 = vsel %vm299, %v982, 0
    %1590 = vmatprep.subr.mxu0 0.0
    %1591 = vmatpush1.msra.mxu0 0.0
    %1592 = vmatprep.subr.mxu0 0.0
    %1593 = vmatpush1.msra.mxu0 0.0
    %1594 = vmatprep.subr.mxu0 0.0
    %1595 = vmatpush1.msra.mxu0 0.0
    %1596 = vmatprep.subr.mxu0 0.0
    %1597 = vmatpush1.msra.mxu0 0.0
    %1598 = vmatprep.subr.mxu0 0.0
    %1599 = vmatpush1.msra.mxu0 0.0
    %1600 = vmatprep.subr.mxu0 0.0
    %1601 = vmatpush1.msra.mxu0 0.0
    %1602 = vmatprep.subr.mxu0 0.0
    %1603 = vmatpush1.msra.mxu0 0.0
    %1604 = vmatprep.subr.mxu0 0.0
    %1605 = vmatpush1.msra.mxu0 0.0
    %1606 = vmatprep.subr.mxu0 0.0
    %1607 = vmatpush1.msra.mxu0 0.0
    %1608 = vmatprep.subr.mxu0 0.0
    %1609 = vmatpush1.msra.mxu0 0.0
    %1610 = vmatprep.subr.mxu0 0.0
    %1611 = vmatpush1.msra.mxu0 0.0
    %1612 = vmatprep.subr.mxu0 0.0
    %1613 = vmatpush1.msra.mxu0 0.0
    %1614 = vmatprep.subr.mxu0 0.0
    %1615 = vmatpush1.msra.mxu0 %v1579
    %1616 = vmatprep.subr.mxu0 0.0
    %1617 = vmatpush1.msra.mxu0 %v1578
    %1618 = vmatprep.subr.mxu0 0.0
    %1619 = vmatpush1.msra.mxu0 %v1577
    %1620 = vmatprep.subr.mxu0 0.0
    %1621 = vmatpush1.msra.mxu0 %v1576
    %1622 = vmatprep.subr.mxu0 0.0
    %1623 = vmatpush2.msra.mxu0 0.0
    %1624 = vmatprep.subr.mxu0 0.0
    %1625 = vmatpush2.msra.mxu0 0.0
    %1626 = vmatprep.subr.mxu0 0.0
    %1627 = vmatpush2.msra.mxu0 0.0
    %1628 = vmatprep.subr.mxu0 0.0
    %1629 = vmatpush2.msra.mxu0 0.0
    %1630 = vmatprep.subr.mxu0 0.0
    %1631 = vmatpush2.msra.mxu0 0.0
    %1632 = vmatprep.subr.mxu0 0.0
    %1633 = vmatpush2.msra.mxu0 0.0
    %1634 = vmatprep.subr.mxu0 0.0
    %1635 = vmatpush2.msra.mxu0 0.0
    %1636 = vmatprep.subr.mxu0 0.0
    %1637 = vmatpush2.msra.mxu0 0.0
    %1638 = vmatprep.subr.mxu0 0.0
    %1639 = vmatpush2.msra.mxu0 0.0
    %1640 = vmatprep.subr.mxu0 0.0
    %1641 = vmatpush2.msra.mxu0 0.0
    %1642 = vmatprep.subr.mxu0 0.0
    %1643 = vmatpush2.msra.mxu0 0.0
    %1644 = vmatprep.subr.mxu0 0.0
    %1645 = vmatpush2.msra.mxu0 0.0
    %1646 = vmatprep.subr.mxu0 0.0
    %1647 = vmatpush2.msra.mxu0 0.0
    %1648 = vmatprep.subr.mxu0 0.0
    %1649 = vmatpush2.msra.mxu0 0.0
    %1650 = vmatprep.subr.mxu0 0.0
    %1651 = vmatpush2.msra.mxu0 0.0
    %1652 = vmatprep.subr.mxu0 0.0
    %1653 = vmatpush2.msra.mxu0 0.0
    %1654 = vmatprep.mubr.f32.mxu0 0.0
    %1655 = vmatmul.mubr.f32.gmra.mxu0 %v1588
    %v1656 = vpop.f32.mrf.mxu0
    %v1657 = vadd.f32 %v1585, %v1656
    %v1658 = vpop.f32.mrf.mxu0
    %1659 = vdwg.mxu0
    %vm1660 = vcmask 74752
    %1661 = vst.msk [vmem:[#allocation2] sm:$0x3] %vm1660, %v1657
    %v1662 = vld [vmem:[%s16] sm:$0xff]
    %v1663 = vld [vmem:[%s16 + $0x8] sm:$0xff]
    %v1664 = vld [vmem:[%s16 + $0x10] sm:$0xff]
    %v1665 = vld [vmem:[%s16 + $0x18] sm:$0xff]
    %v1666 = vld [vmem:[%s17] sm:$0x1]
    %v1668 = vlaneseq
    %v1669 = vshrl.u32 %v1668, 7
    %v1670 = vsub.s32 0, %v1669
    %v1671 = vrot.slane %v1666, %v1670
    %1673 = vrot.lane.b32.xlu0 %v982, 96
    %v1674 = vpop.permute.xlu0 %1673
    %v1675 = vsel %vm299, %v1674, 0
    %1677 = vmatprep.subr.mxu0 0.0
    %1678 = vmatpush1.msra.mxu0 0.0
    %1679 = vmatprep.subr.mxu0 0.0
    %1680 = vmatpush1.msra.mxu0 0.0
    %1681 = vmatprep.subr.mxu0 0.0
    %1682 = vmatpush1.msra.mxu0 0.0
    %1683 = vmatprep.subr.mxu0 0.0
    %1684 = vmatpush1.msra.mxu0 0.0
    %1685 = vmatprep.subr.mxu0 0.0
    %1686 = vmatpush1.msra.mxu0 0.0
    %1687 = vmatprep.subr.mxu0 0.0
    %1688 = vmatpush1.msra.mxu0 0.0
    %1689 = vmatprep.subr.mxu0 0.0
    %1690 = vmatpush1.msra.mxu0 0.0
    %1691 = vmatprep.subr.mxu0 0.0
    %1692 = vmatpush1.msra.mxu0 0.0
    %1693 = vmatprep.subr.mxu0 0.0
    %1694 = vmatpush1.msra.mxu0 0.0
    %1695 = vmatprep.subr.mxu0 0.0
    %1696 = vmatpush1.msra.mxu0 0.0
    %1697 = vmatprep.subr.mxu0 0.0
    %1698 = vmatpush1.msra.mxu0 0.0
    %1699 = vmatprep.subr.mxu0 0.0
    %1700 = vmatpush1.msra.mxu0 0.0
    %1701 = vmatprep.subr.mxu0 0.0
    %1702 = vmatpush1.msra.mxu0 %v1665
    %1703 = vmatprep.subr.mxu0 0.0
    %1704 = vmatpush1.msra.mxu0 %v1664
    %1705 = vmatprep.subr.mxu0 0.0
    %1706 = vmatpush1.msra.mxu0 %v1663
    %1707 = vmatprep.subr.mxu0 0.0
    %1708 = vmatpush1.msra.mxu0 %v1662
    %1709 = vmatprep.subr.mxu0 0.0
    %1710 = vmatpush2.msra.mxu0 0.0
    %1711 = vmatprep.subr.mxu0 0.0
    %1712 = vmatpush2.msra.mxu0 0.0
    %1713 = vmatprep.subr.mxu0 0.0
    %1714 = vmatpush2.msra.mxu0 0.0
    %1715 = vmatprep.subr.mxu0 0.0
    %1716 = vmatpush2.msra.mxu0 0.0
    %1717 = vmatprep.subr.mxu0 0.0
    %1718 = vmatpush2.msra.mxu0 0.0
    %1719 = vmatprep.subr.mxu0 0.0
    %1720 = vmatpush2.msra.mxu0 0.0
    %1721 = vmatprep.subr.mxu0 0.0
    %1722 = vmatpush2.msra.mxu0 0.0
    %1723 = vmatprep.subr.mxu0 0.0
    %1724 = vmatpush2.msra.mxu0 0.0
    %1725 = vmatprep.subr.mxu0 0.0
    %1726 = vmatpush2.msra.mxu0 0.0
    %1727 = vmatprep.subr.mxu0 0.0
    %1728 = vmatpush2.msra.mxu0 0.0
    %1729 = vmatprep.subr.mxu0 0.0
    %1730 = vmatpush2.msra.mxu0 0.0
    %1731 = vmatprep.subr.mxu0 0.0
    %1732 = vmatpush2.msra.mxu0 0.0
    %1733 = vmatprep.subr.mxu0 0.0
    %1734 = vmatpush2.msra.mxu0 0.0
    %1735 = vmatprep.subr.mxu0 0.0
    %1736 = vmatpush2.msra.mxu0 0.0
    %1737 = vmatprep.subr.mxu0 0.0
    %1738 = vmatpush2.msra.mxu0 0.0
    %1739 = vmatprep.subr.mxu0 0.0
    %1740 = vmatpush2.msra.mxu0 0.0
    %1741 = vmatprep.mubr.f32.mxu0 0.0
    %1742 = vmatmul.mubr.f32.gmra.mxu0 %v1675
    %v1743 = vpop.f32.mrf.mxu0
    %v1744 = vadd.f32 %v1671, %v1743
    %v1745 = vpop.f32.mrf.mxu0
    %1746 = vdwg.mxu0
    %v1747 = vsub.f32 0.0, %v1744
    %v1748 = vmul.f32 %v1747, 1.442695
    %v1749 = vpow.pop %v1748
    %v1750 = vadd.f32 %v1749, 1.0
    %v1751 = vrcp.pop %v1750
    %v1752 = vmul.f32 1.0, %v1751
    %v1753 = vmul.f32 %v1752, 781.25
    %vm1754 = vcmask 15360
    %v1755 = vsel %vm1754, %v1744, %v1753
    %vm1756 = vcmask 17408
    %1757 = vst.msk [vmem:[#allocation4] sm:$0x3] %vm1756, %v1755
    %v1758 = vld [vmem:[%s18] sm:$0xff]
    %v1759 = vld [vmem:[%s18 + $0x8] sm:$0xff]
    %v1760 = vld [vmem:[%s18 + $0x10] sm:$0xff]
    %v1761 = vld [vmem:[%s18 + $0x18] sm:$0xff]
    %v1762 = vld [vmem:[%s19] sm:$0xff]
    %v1764 = vsel %vm1067, %v1224, 0
    %1766 = vmatprep.subr.mxu0 0.0
    %1767 = vmatpush1.msra.mxu0 0.0
    %1768 = vmatprep.subr.mxu0 0.0
    %1769 = vmatpush1.msra.mxu0 0.0
    %1770 = vmatprep.subr.mxu0 0.0
    %1771 = vmatpush1.msra.mxu0 0.0
    %1772 = vmatprep.subr.mxu0 0.0
    %1773 = vmatpush1.msra.mxu0 0.0
    %1774 = vmatprep.subr.mxu0 0.0
    %1775 = vmatpush1.msra.mxu0 0.0
    %1776 = vmatprep.subr.mxu0 0.0
    %1777 = vmatpush1.msra.mxu0 0.0
    %1778 = vmatprep.subr.mxu0 0.0
    %1779 = vmatpush1.msra.mxu0 0.0
    %1780 = vmatprep.subr.mxu0 0.0
    %1781 = vmatpush1.msra.mxu0 0.0
    %1782 = vmatprep.subr.mxu0 0.0
    %1783 = vmatpush1.msra.mxu0 0.0
    %1784 = vmatprep.subr.mxu0 0.0
    %1785 = vmatpush1.msra.mxu0 0.0
    %1786 = vmatprep.subr.mxu0 0.0
    %1787 = vmatpush1.msra.mxu0 0.0
    %1788 = vmatprep.subr.mxu0 0.0
    %1789 = vmatpush1.msra.mxu0 0.0
    %1790 = vmatprep.subr.mxu0 0.0
    %1791 = vmatpush1.msra.mxu0 0.0
    %1792 = vmatprep.subr.mxu0 0.0
    %1793 = vmatpush1.msra.mxu0 0.0
    %1794 = vmatprep.subr.mxu0 0.0
    %1795 = vmatpush1.msra.mxu0 0.0
    %1796 = vmatprep.subr.mxu0 0.0
    %1797 = vmatpush1.msra.mxu0 %v1762
    %1798 = vmatprep.subr.mxu0 0.0
    %1799 = vmatpush2.msra.mxu0 0.0
    %1800 = vmatprep.subr.mxu0 0.0
    %1801 = vmatpush2.msra.mxu0 0.0
    %1802 = vmatprep.subr.mxu0 0.0
    %1803 = vmatpush2.msra.mxu0 0.0
    %1804 = vmatprep.subr.mxu0 0.0
    %1805 = vmatpush2.msra.mxu0 0.0
    %1806 = vmatprep.subr.mxu0 0.0
    %1807 = vmatpush2.msra.mxu0 0.0
    %1808 = vmatprep.subr.mxu0 0.0
    %1809 = vmatpush2.msra.mxu0 0.0
    %1810 = vmatprep.subr.mxu0 0.0
    %1811 = vmatpush2.msra.mxu0 0.0
    %1812 = vmatprep.subr.mxu0 0.0
    %1813 = vmatpush2.msra.mxu0 0.0
    %1814 = vmatprep.subr.mxu0 0.0
    %1815 = vmatpush2.msra.mxu0 0.0
    %1816 = vmatprep.subr.mxu0 0.0
    %1817 = vmatpush2.msra.mxu0 0.0
    %1818 = vmatprep.subr.mxu0 0.0
    %1819 = vmatpush2.msra.mxu0 0.0
    %1820 = vmatprep.subr.mxu0 0.0
    %1821 = vmatpush2.msra.mxu0 0.0
    %1822 = vmatprep.subr.mxu0 0.0
    %1823 = vmatpush2.msra.mxu0 0.0
    %1824 = vmatprep.subr.mxu0 0.0
    %1825 = vmatpush2.msra.mxu0 0.0
    %1826 = vmatprep.subr.mxu0 0.0
    %1827 = vmatpush2.msra.mxu0 0.0
    %1828 = vmatprep.subr.mxu0 0.0
    %1829 = vmatpush2.msra.mxu0 0.0
    %1830 = vmatprep.mubr.f32.mxu0 0.0
    %1831 = vmatmul.mubr.f32.gmra.mxu0 %v1764
    %v1832 = vpop.f32.mrf.mxu0
    %v1833 = vadd.f32 0.0, %v1832
    %v1834 = vpop.f32.mrf.mxu0
    %1835 = vdwg.mxu0
    %1836 = vmatprep.subr.mxu0 0.0
    %1837 = vmatpush1.msra.mxu0 0.0
    %1838 = vmatprep.subr.mxu0 0.0
    %1839 = vmatpush1.msra.mxu0 0.0
    %1840 = vmatprep.subr.mxu0 0.0
    %1841 = vmatpush1.msra.mxu0 0.0
    %1842 = vmatprep.subr.mxu0 0.0
    %1843 = vmatpush1.msra.mxu0 0.0
    %1844 = vmatprep.subr.mxu0 0.0
    %1845 = vmatpush1.msra.mxu0 0.0
    %1846 = vmatprep.subr.mxu0 0.0
    %1847 = vmatpush1.msra.mxu0 0.0
    %1848 = vmatprep.subr.mxu0 0.0
    %1849 = vmatpush1.msra.mxu0 0.0
    %1850 = vmatprep.subr.mxu0 0.0
    %1851 = vmatpush1.msra.mxu0 0.0
    %1852 = vmatprep.subr.mxu0 0.0
    %1853 = vmatpush1.msra.mxu0 0.0
    %1854 = vmatprep.subr.mxu0 0.0
    %1855 = vmatpush1.msra.mxu0 0.0
    %1856 = vmatprep.subr.mxu0 0.0
    %1857 = vmatpush1.msra.mxu0 0.0
    %1858 = vmatprep.subr.mxu0 0.0
    %1859 = vmatpush1.msra.mxu0 0.0
    %1860 = vmatprep.subr.mxu0 0.0
    %1861 = vmatpush1.msra.mxu0 %v1761
    %1862 = vmatprep.subr.mxu0 0.0
    %1863 = vmatpush1.msra.mxu0 %v1760
    %1864 = vmatprep.subr.mxu0 0.0
    %1865 = vmatpush1.msra.mxu0 %v1759
    %1866 = vmatprep.subr.mxu0 0.0
    %1867 = vmatpush1.msra.mxu0 %v1758
    %1868 = vmatprep.subr.mxu0 0.0
    %1869 = vmatpush2.msra.mxu0 0.0
    %1870 = vmatprep.subr.mxu0 0.0
    %1871 = vmatpush2.msra.mxu0 0.0
    %1872 = vmatprep.subr.mxu0 0.0
    %1873 = vmatpush2.msra.mxu0 0.0
    %1874 = vmatprep.subr.mxu0 0.0
    %1875 = vmatpush2.msra.mxu0 0.0
    %1876 = vmatprep.subr.mxu0 0.0
    %1877 = vmatpush2.msra.mxu0 0.0
    %1878 = vmatprep.subr.mxu0 0.0
    %1879 = vmatpush2.msra.mxu0 0.0
    %1880 = vmatprep.subr.mxu0 0.0
    %1881 = vmatpush2.msra.mxu0 0.0
    %1882 = vmatprep.subr.mxu0 0.0
    %1883 = vmatpush2.msra.mxu0 0.0
    %1884 = vmatprep.subr.mxu0 0.0
    %1885 = vmatpush2.msra.mxu0 0.0
    %1886 = vmatprep.subr.mxu0 0.0
    %1887 = vmatpush2.msra.mxu0 0.0
    %1888 = vmatprep.subr.mxu0 0.0
    %1889 = vmatpush2.msra.mxu0 0.0
    %1890 = vmatprep.subr.mxu0 0.0
    %1891 = vmatpush2.msra.mxu0 0.0
    %1892 = vmatprep.subr.mxu0 0.0
    %1893 = vmatpush2.msra.mxu0 0.0
    %1894 = vmatprep.subr.mxu0 0.0
    %1895 = vmatpush2.msra.mxu0 0.0
    %1896 = vmatprep.subr.mxu0 0.0
    %1897 = vmatpush2.msra.mxu0 0.0
    %1898 = vmatprep.subr.mxu0 0.0
    %1899 = vmatpush2.msra.mxu0 0.0
    %1900 = vmatprep.mubr.f32.mxu0 0.0
    %1901 = vmatmul.mubr.f32.gmra.mxu0 %v913
    %v1902 = vpop.f32.mrf.mxu0
    %v1903 = vadd.f32 %v1833, %v1902
    %v1904 = vpop.f32.mrf.mxu0
    %1905 = vdwg.mxu0
    %v1906 = vld [vmem:[%s20] sm:$0x1]
    %v1908 = vlaneseq
    %v1909 = vshrl.u32 %v1908, 7
    %v1910 = vsub.s32 0, %v1909
    %v1911 = vrot.slane %v1906, %v1910
    %v1913 = vadd.f32 %v1903, %v1911
    %v1914 = vsub.f32 0.0, %v1913
    %v1915 = vmul.f32 %v1914, 1.442695
    %v1916 = vpow.pop %v1915
    %v1917 = vadd.f32 %v1916, 1.0
    %v1918 = vrcp.pop %v1917
    %v1919 = vmul.f32 1.0, %v1918
    %vm1920 = vcmask 91136
    %1921 = vst.msk [vmem:[%s26] sm:$0x3] %vm1920, %v1919
    // Predicated region
    $region86: #{_lambda_.4} parent=1 // pred_check
      _
    $region87: #{_lambda_.4} parent=1 // pred_check_branch
      %1923 = sbr.rel (0) target = $region89
    $region88: #{_lambda_.4} parent=1 // pred_region
      _
    $region89: #{_lambda_.4} parent=1 // pred_fallthru
      _
    // Predicated region
    $region90: #{_lambda_.4} parent=1 // pred_check
      _
    $region91: #{_lambda_.4} parent=1 // pred_check_branch
      %1925 = sbr.rel (0) target = $region93
    $region92: #{_lambda_.4} parent=1 // pred_region
      _
    $region93: #{_lambda_.4} parent=1 // pred_fallthru
      _
    // Predicated region
    $region94: #{_lambda_.4} parent=1 // pred_check
      _
    $region95: #{_lambda_.4} parent=1 // pred_check_branch
      %1927 = sbr.rel (0) target = $region97
    $region96: #{_lambda_.4} parent=1 // pred_region
      _
    $region97: #{_lambda_.4} parent=1 // pred_fallthru
      _
    // Predicated region
    $region98: #{_lambda_.4} parent=1 // pred_check
      _
    $region99: #{_lambda_.4} parent=1 // pred_check_branch
      %1929 = sbr.rel (0) target = $region101
    $region100: #{_lambda_.4} parent=1 // pred_region
      %s1931 = ssub.s32 32, 32
      %1932 = vsyncadd [#allocation3], %s1931
      %s1934 = sshll.u32 [#allocation2], 4
      %s1935 = int_to_ptr.vmem [resolvable:$true] %s1934
      %1937 = dma.vmem_to_hbm [thread:$0]  %s1935, 32, %s24, [#allocation3]
    $region101: #{_lambda_.4} parent=1 // pred_fallthru
      _
    // Predicated region
    $region102: #{_lambda_.4} parent=1 // pred_check
      _
    $region103: #{_lambda_.4} parent=1 // pred_check_branch
      %1939 = sbr.rel (0) target = $region105
    $region104: #{_lambda_.4} parent=1 // pred_region
      %s1941 = ssub.s32 32, 32
      %1942 = vsyncadd [#allocation5], %s1941
      %s1944 = sshll.u32 [#allocation4], 4
      %s1945 = int_to_ptr.vmem [resolvable:$true] %s1944
      %1947 = dma.vmem_to_hbm [thread:$0]  %s1945, 32, %s25, [#allocation5]
    $region105: #{_lambda_.4} parent=1 // pred_fallthru
      _
    // Predicated region
    $region106: #{_lambda_.4} parent=1 // pred_check
      _
    $region107: #{_lambda_.4} parent=1 // pred_check_branch
      %1949 = sbr.rel (0) target = $region109
    $region108: #{_lambda_.4} parent=1 // pred_region
      _
    $region109: #{_lambda_.4} parent=1 // pred_fallthru
      _
    // Predicated region
    $region110: #{_lambda_.4} parent=1 // pred_check
      _
    $region111: #{_lambda_.4} parent=1 // pred_check_branch
      %1951 = sbr.rel (0) target = $region113
    $region112: #{_lambda_.4} parent=1 // pred_region
      _
    $region113: #{_lambda_.4} parent=1 // pred_fallthru
      _
    // Predicated region
    $region114: #{_lambda_.4} parent=1 // pred_check
      _
    $region115: #{_lambda_.4} parent=1 // pred_check_branch
      %1953 = sbr.rel (0) target = $region117
    $region116: #{_lambda_.4} parent=1 // pred_region
      _
    $region117: #{_lambda_.4} parent=1 // pred_fallthru
      _
    // Predicated region
    $region118: #{_lambda_.4} parent=1 // pred_check
      _
    $region119: #{_lambda_.4} parent=1 // pred_check_branch
      %1955 = sbr.rel (0) target = $region121
    $region120: #{_lambda_.4} parent=1 // pred_region
      _
    $region121: #{_lambda_.4} parent=1 // pred_fallthru
      _
    // Predicated region
    $region122: #{_lambda_.4} parent=1 // pred_check
      _
    $region123: #{_lambda_.4} parent=1 // pred_check_branch
      %1957 = sbr.rel (0) target = $region125
    $region124: #{_lambda_.4} parent=1 // pred_region
      %1958 = dma.done [#allocation3], 32
    $region125: #{_lambda_.4} parent=1 // pred_fallthru
      _
    // Predicated region
    $region126: #{_lambda_.4} parent=1 // pred_check
      _
    $region127: #{_lambda_.4} parent=1 // pred_check_branch
      %1960 = sbr.rel (0) target = $region129
    $region128: #{_lambda_.4} parent=1 // pred_region
      %1961 = dma.done [#allocation5], 32
    $region129: #{_lambda_.4} parent=1 // pred_fallthru
      _
    // Predicated region
    $region130: #{_lambda_.4} parent=1 // pred_check
      _
    $region131: #{_lambda_.4} parent=1 // pred_check_branch
      %1963 = sbr.rel (0) target = $region133
    $region132: #{_lambda_.4} parent=1 // pred_region
      _
    $region133: #{_lambda_.4} parent=1 // pred_fallthru
      _
    %1964 = vsyncpa [#allocation3], 1
    %1965 = vsyncpa [#allocation5], 1

// kernel: _lambda_.7
$region0: #{_lambda_.7}
  #allocation0 [shape = 'u32[]', space=smem, size = 0x4, offset = 0x4, fixed_abs, tag = 'smem constant byte address 0x4 - core index']
  #allocation1 [shape = 'u32[144,128]{1,0:T(1,128)}', space=vmem, size = 0x12000, scoped, tag = 'internal scratch']
  %s0 = inlined_call_operand.vmem [shape: f32[3,105], index: 0, kind: input, shape index: {}]
  %s1 = inlined_call_operand.vmem [shape: f32[3,105], index: 1, kind: input, shape index: {}]
  %s2 = inlined_call_operand.vmem [shape: f32[4,105], index: 2, kind: output, shape index: {}]
  %s3 = sld [smem:[#allocation0]]
  $region18: #{_lambda_.7} parent=0
    _
  %s5 = ssub.s32 1, %s3
  %s6 = scalar_select 0, %s5, %s3
  // Predicated region
  $region2: #{_lambda_.7} parent=0 // pred_check
    _
  $region3: #{_lambda_.7} parent=0 // pred_check_branch
    %8 = sbr.rel (0) target = $region5
  $region4: #{_lambda_.7} parent=0 // pred_region
    _
  $region5: #{_lambda_.7} parent=0 // pred_fallthru
    _
  // Predicated region
  $region6: #{_lambda_.7} parent=0 // pred_check
    _
  $region7: #{_lambda_.7} parent=0 // pred_check_branch
    %10 = sbr.rel (0) target = $region9
  $region8: #{_lambda_.7} parent=0 // pred_region
    _
  $region9: #{_lambda_.7} parent=0 // pred_fallthru
    _
  %v11 = vld [vmem:[%s0] sm:$0x7]
  %v12 = vld [vmem:[%s1] sm:$0x7]
  %v13 = vmul.f32 %v11, %v11
  %vm14 = vcmask 854016
  %v15 = vsel %vm14, %v13, 0.0
  %v16 = vrot.slane %v15, 4
  %v17 = vadd.f32 %v15, %v16
  %v18 = vrot.slane %v17, 2
  %v19 = vadd.f32 %v17, %v18
  %v20 = vrot.slane %v19, 1
  %v21 = vadd.f32 %v19, %v20
  %v22 = vadd.f32 %v21, 1e-08
  %v23 = vrsqrt.pop %v22
  %v24 = vmul.f32 %v11, %v23
  %v25 = vmul.f32 %v24, %v12
  %v26 = vsel %vm14, %v25, 0.0
  %v27 = vrot.slane %v26, 4
  %v28 = vadd.f32 %v26, %v27
  %v29 = vrot.slane %v28, 2
  %v30 = vadd.f32 %v28, %v29
  %v31 = vrot.slane %v30, 1
  %v32 = vadd.f32 %v30, %v31
  %v33 = vmul.f32 %v32, %v24
  %v34 = vsub.f32 %v12, %v33
  %v35 = vmul.f32 %v34, %v34
  %v36 = vsel %vm14, %v35, 0.0
  %v37 = vrot.slane %v36, 4
  %v38 = vadd.f32 %v36, %v37
  %v39 = vrot.slane %v38, 2
  %v40 = vadd.f32 %v38, %v39
  %v41 = vrot.slane %v40, 1
  %v42 = vadd.f32 %v40, %v41
  %v43 = vadd.f32 %v42, 1e-08
  %v44 = vrsqrt.pop %v43
  %v45 = vmul.f32 %v34, %v44
  %v47 = vrot.slane %v45, 1
  %v49 = vmul.f32 %v24, %v47
  %v50 = vrot.slane %v45, 7
  %v52 = vmul.f32 %v24, %v50
  %v54 = vrot.slane %v52, 1
  %v56 = vsub.f32 %v49, %v54
  %v57 = vrot.slane %v45, 6
  %v59 = vmul.f32 %v24, %v57
  %v60 = vrot.slane %v45, 2
  %v62 = vmul.f32 %v24, %v60
  %v64 = vrot.slane %v62, 6
  %v66 = vsub.f32 %v59, %v64
  %v67 = vadd.f32 %v24, %v47
  %v68 = vadd.f32 %v67, %v56
  %v69 = vsub.f32 %v45, %v66
  %v71 = vrot.slane %v24, 1
  %v73 = vsub.f32 %v56, %v71
  %v74 = vsub.f32 %v24, %v50
  %v76 = vrot.slane %v69, 1
  %v79 = vrot.slane %v73, 7
  %v82 = vrot.slane %v74, 6
  %vm84 = vcmask 1040384
  %v85 = vsel %vm84, %v68, %v76
  %vm86 = vcmask 1041408
  %v87 = vsel %vm86, %v85, %v79
  %vm88 = vcmask 1042432
  %v89 = vsel %vm88, %v87, %v82
  %vm90 = vcmask 855040
  %91 = vst.msk [vmem:[%s2] sm:$0xf] %vm90, %v89
  // Predicated region
  $region10: #{_lambda_.7} parent=0 // pred_check
    _
  $region11: #{_lambda_.7} parent=0 // pred_check_branch
    %93 = sbr.rel (0) target = $region13
  $region12: #{_lambda_.7} parent=0 // pred_region
    _
  $region13: #{_lambda_.7} parent=0 // pred_fallthru
    _
  // Predicated region
  $region14: #{_lambda_.7} parent=0 // pred_check
    _
  $region15: #{_lambda_.7} parent=0 // pred_check_branch
    %95 = sbr.rel (0) target = $region17
  $region16: #{_lambda_.7} parent=0 // pred_region
    _
  $region17: #{_lambda_.7} parent=0 // pred_fallthru
    _

// kernel: _lambda_.6
$region0: #{_lambda_.6}
  #allocation0 [shape = 'u32[]', space=smem, size = 0x4, offset = 0x4, fixed_abs, tag = 'smem constant byte address 0x4 - core index']
  #allocation1 [shape = 'u32[144,128]{1,0:T(1,128)}', space=vmem, size = 0x12000, scoped, tag = 'internal scratch']
  %s0 = inlined_call_operand.vmem [shape: f32[128,32], index: 0, kind: input, shape index: {}]
  %s1 = inlined_call_operand.vmem [shape: f32[6,128], index: 1, kind: input, shape index: {}]
  %s2 = inlined_call_operand.vmem [shape: f32[64,16], index: 2, kind: input, shape index: {}]
  %s3 = inlined_call_operand.vmem [shape: f32[32,64], index: 3, kind: input, shape index: {}]
  %s4 = inlined_call_operand.vmem [shape: f32[1,64], index: 4, kind: input, shape index: {}]
  %s5 = inlined_call_operand.vmem [shape: f32[32,256], index: 5, kind: input, shape index: {}]
  %s6 = inlined_call_operand.vmem [shape: f32[1,256], index: 6, kind: input, shape index: {}]
  %s7 = inlined_call_operand.vmem [shape: f32[8,256], index: 7, kind: input, shape index: {}]
  %s8 = inlined_call_operand.vmem [shape: f32[8,256], index: 8, kind: input, shape index: {}]
  %s9 = inlined_call_operand.vmem [shape: f32[8,256], index: 9, kind: input, shape index: {}]
  %s10 = inlined_call_operand.vmem [shape: f32[256,16], index: 10, kind: input, shape index: {}]
  %s11 = inlined_call_operand.vmem [shape: f32[8,16], index: 11, kind: input, shape index: {}]
  %s12 = inlined_call_operand.vmem [shape: f32[8,16], index: 12, kind: input, shape index: {}]
  %s13 = inlined_call_operand.vmem [shape: f32[8,16], index: 13, kind: input, shape index: {}]
  %s14 = inlined_call_operand.vmem [shape: f32[32,16], index: 14, kind: input, shape index: {}]
  %s15 = inlined_call_operand.vmem [shape: f32[1,16], index: 15, kind: input, shape index: {}]
  %s16 = inlined_call_operand.vmem [shape: f32[2,16], index: 16, kind: output, shape index: {}]
  %s17 = sld [smem:[#allocation0]]
  $region74: #{_lambda_.6} parent=0
    _
  %s19 = ssub.s32 1, %s17
  %s20 = scalar_select 0, %s19, %s17
  // Predicated region
  $region2: #{_lambda_.6} parent=0 // pred_check
    _
  $region3: #{_lambda_.6} parent=0 // pred_check_branch
    %22 = sbr.rel (0) target = $region5
  $region4: #{_lambda_.6} parent=0 // pred_region
    _
  $region5: #{_lambda_.6} parent=0 // pred_fallthru
    _
  // Predicated region
  $region6: #{_lambda_.6} parent=0 // pred_check
    _
  $region7: #{_lambda_.6} parent=0 // pred_check_branch
    %24 = sbr.rel (0) target = $region9
  $region8: #{_lambda_.6} parent=0 // pred_region
    _
  $region9: #{_lambda_.6} parent=0 // pred_fallthru
    _
  // Predicated region
  $region10: #{_lambda_.6} parent=0 // pred_check
    _
  $region11: #{_lambda_.6} parent=0 // pred_check_branch
    %26 = sbr.rel (0) target = $region13
  $region12: #{_lambda_.6} parent=0 // pred_region
    _
  $region13: #{_lambda_.6} parent=0 // pred_fallthru
    _
  // Predicated region
  $region14: #{_lambda_.6} parent=0 // pred_check
    _
  $region15: #{_lambda_.6} parent=0 // pred_check_branch
    %28 = sbr.rel (0) target = $region17
  $region16: #{_lambda_.6} parent=0 // pred_region
    _
  $region17: #{_lambda_.6} parent=0 // pred_fallthru
    _
  // Predicated region
  $region18: #{_lambda_.6} parent=0 // pred_check
    _
  $region19: #{_lambda_.6} parent=0 // pred_check_branch
    %30 = sbr.rel (0) target = $region21
  $region20: #{_lambda_.6} parent=0 // pred_region
    _
  $region21: #{_lambda_.6} parent=0 // pred_fallthru
    _
  // Predicated region
  $region22: #{_lambda_.6} parent=0 // pred_check
    _
  $region23: #{_lambda_.6} parent=0 // pred_check_branch
    %32 = sbr.rel (0) target = $region25
  $region24: #{_lambda_.6} parent=0 // pred_region
    _
  $region25: #{_lambda_.6} parent=0 // pred_fallthru
    _
  // Predicated region
  $region26: #{_lambda_.6} parent=0 // pred_check
    _
  $region27: #{_lambda_.6} parent=0 // pred_check_branch
    %34 = sbr.rel (0) target = $region29
  $region28: #{_lambda_.6} parent=0 // pred_region
    _
  $region29: #{_lambda_.6} parent=0 // pred_fallthru
    _
  // Predicated region
  $region30: #{_lambda_.6} parent=0 // pred_check
    _
  $region31: #{_lambda_.6} parent=0 // pred_check_branch
    %36 = sbr.rel (0) target = $region33
  $region32: #{_lambda_.6} parent=0 // pred_region
    _
  $region33: #{_lambda_.6} parent=0 // pred_fallthru
    _
  // Predicated region
  $region34: #{_lambda_.6} parent=0 // pred_check
    _
  $region35: #{_lambda_.6} parent=0 // pred_check_branch
    %38 = sbr.rel (0) target = $region37
  $region36: #{_lambda_.6} parent=0 // pred_region
    _
  $region37: #{_lambda_.6} parent=0 // pred_fallthru
    _
  // Predicated region
  $region38: #{_lambda_.6} parent=0 // pred_check
    _
  $region39: #{_lambda_.6} parent=0 // pred_check_branch
    %40 = sbr.rel (0) target = $region41
  $region40: #{_lambda_.6} parent=0 // pred_region
    _
  $region41: #{_lambda_.6} parent=0 // pred_fallthru
    _
  // Predicated region
  $region42: #{_lambda_.6} parent=0 // pred_check
    _
  $region43: #{_lambda_.6} parent=0 // pred_check_branch
    %42 = sbr.rel (0) target = $region45
  $region44: #{_lambda_.6} parent=0 // pred_region
    _
  $region45: #{_lambda_.6} parent=0 // pred_fallthru
    _
  // Predicated region
  $region46: #{_lambda_.6} parent=0 // pred_check
    _
  $region47: #{_lambda_.6} parent=0 // pred_check_branch
    %44 = sbr.rel (0) target = $region49
  $region48: #{_lambda_.6} parent=0 // pred_region
    _
  $region49: #{_lambda_.6} parent=0 // pred_fallthru
    _
  // Predicated region
  $region50: #{_lambda_.6} parent=0 // pred_check
    _
  $region51: #{_lambda_.6} parent=0 // pred_check_branch
    %46 = sbr.rel (0) target = $region53
  $region52: #{_lambda_.6} parent=0 // pred_region
    _
  $region53: #{_lambda_.6} parent=0 // pred_fallthru
    _
  // Predicated region
  $region54: #{_lambda_.6} parent=0 // pred_check
    _
  $region55: #{_lambda_.6} parent=0 // pred_check_branch
    %48 = sbr.rel (0) target = $region57
  $region56: #{_lambda_.6} parent=0 // pred_region
    _
  $region57: #{_lambda_.6} parent=0 // pred_fallthru
    _
  // Predicated region
  $region58: #{_lambda_.6} parent=0 // pred_check
    _
  $region59: #{_lambda_.6} parent=0 // pred_check_branch
    %50 = sbr.rel (0) target = $region61
  $region60: #{_lambda_.6} parent=0 // pred_region
    _
  $region61: #{_lambda_.6} parent=0 // pred_fallthru
    _
  // Predicated region
  $region62: #{_lambda_.6} parent=0 // pred_check
    _
  $region63: #{_lambda_.6} parent=0 // pred_check_branch
    %52 = sbr.rel (0) target = $region65
  $region64: #{_lambda_.6} parent=0 // pred_region
    _
  $region65: #{_lambda_.6} parent=0 // pred_fallthru
    _
  %v53 = vld [vmem:[%s0] sm:$0xff]
  %v54 = vld [vmem:[%s0 + $0x8] sm:$0xff]
  %v55 = vld [vmem:[%s0 + $0x10] sm:$0xff]
  %v56 = vld [vmem:[%s0 + $0x18] sm:$0xff]
  %v57 = vld [vmem:[%s0 + $0x20] sm:$0xff]
  %v58 = vld [vmem:[%s0 + $0x28] sm:$0xff]
  %v59 = vld [vmem:[%s0 + $0x30] sm:$0xff]
  %v60 = vld [vmem:[%s0 + $0x38] sm:$0xff]
  %v61 = vld [vmem:[%s0 + $0x40] sm:$0xff]
  %v62 = vld [vmem:[%s0 + $0x48] sm:$0xff]
  %v63 = vld [vmem:[%s0 + $0x50] sm:$0xff]
  %v64 = vld [vmem:[%s0 + $0x58] sm:$0xff]
  %v65 = vld [vmem:[%s0 + $0x60] sm:$0xff]
  %v66 = vld [vmem:[%s0 + $0x68] sm:$0xff]
  %v67 = vld [vmem:[%s0 + $0x70] sm:$0xff]
  %v68 = vld [vmem:[%s0 + $0x78] sm:$0xff]
  %v69 = vld [vmem:[%s1] sm:$0x3f]
  %v70 = vld [vmem:[%s2] sm:$0xff]
  %v71 = vld [vmem:[%s2 + $0x8] sm:$0xff]
  %v72 = vld [vmem:[%s2 + $0x10] sm:$0xff]
  %v73 = vld [vmem:[%s2 + $0x18] sm:$0xff]
  %v74 = vld [vmem:[%s2 + $0x20] sm:$0xff]
  %v75 = vld [vmem:[%s2 + $0x28] sm:$0xff]
  %v76 = vld [vmem:[%s2 + $0x30] sm:$0xff]
  %v77 = vld [vmem:[%s2 + $0x38] sm:$0xff]
  %v78 = vld [vmem:[%s3] sm:$0xff]
  %v79 = vld [vmem:[%s3 + $0x8] sm:$0xff]
  %v80 = vld [vmem:[%s3 + $0x10] sm:$0xff]
  %v81 = vld [vmem:[%s3 + $0x18] sm:$0xff]
  %v82 = vld [vmem:[%s4] sm:$0x1]
  %83 = vmatprep.subr.mxu0 0.0
  %84 = vmatpush1.msra.mxu0 %v68
  %85 = vmatprep.subr.mxu0 0.0
  %86 = vmatpush1.msra.mxu0 %v67
  %87 = vmatprep.subr.mxu0 0.0
  %88 = vmatpush1.msra.mxu0 %v66
  %89 = vmatprep.subr.mxu0 0.0
  %90 = vmatpush1.msra.mxu0 %v65
  %91 = vmatprep.subr.mxu0 0.0
  %92 = vmatpush1.msra.mxu0 %v64
  %93 = vmatprep.subr.mxu0 0.0
  %94 = vmatpush1.msra.mxu0 %v63
  %95 = vmatprep.subr.mxu0 0.0
  %96 = vmatpush1.msra.mxu0 %v62
  %97 = vmatprep.subr.mxu0 0.0
  %98 = vmatpush1.msra.mxu0 %v61
  %99 = vmatprep.subr.mxu0 0.0
  %100 = vmatpush1.msra.mxu0 %v60
  %101 = vmatprep.subr.mxu0 0.0
  %102 = vmatpush1.msra.mxu0 %v59
  %103 = vmatprep.subr.mxu0 0.0
  %104 = vmatpush1.msra.mxu0 %v58
  %105 = vmatprep.subr.mxu0 0.0
  %106 = vmatpush1.msra.mxu0 %v57
  %107 = vmatprep.subr.mxu0 0.0
  %108 = vmatpush1.msra.mxu0 %v56
  %109 = vmatprep.subr.mxu0 0.0
  %110 = vmatpush1.msra.mxu0 %v55
  %111 = vmatprep.subr.mxu0 0.0
  %112 = vmatpush1.msra.mxu0 %v54
  %113 = vmatprep.subr.mxu0 0.0
  %114 = vmatpush1.msra.mxu0 %v53
  %115 = vmatprep.subr.mxu0 0.0
  %116 = vmatpush2.msra.mxu0 0.0
  %117 = vmatprep.subr.mxu0 0.0
  %118 = vmatpush2.msra.mxu0 0.0
  %119 = vmatprep.subr.mxu0 0.0
  %120 = vmatpush2.msra.mxu0 0.0
  %121 = vmatprep.subr.mxu0 0.0
  %122 = vmatpush2.msra.mxu0 0.0
  %123 = vmatprep.subr.mxu0 0.0
  %124 = vmatpush2.msra.mxu0 0.0
  %125 = vmatprep.subr.mxu0 0.0
  %126 = vmatpush2.msra.mxu0 0.0
  %127 = vmatprep.subr.mxu0 0.0
  %128 = vmatpush2.msra.mxu0 0.0
  %129 = vmatprep.subr.mxu0 0.0
  %130 = vmatpush2.msra.mxu0 0.0
  %131 = vmatprep.subr.mxu0 0.0
  %132 = vmatpush2.msra.mxu0 0.0
  %133 = vmatprep.subr.mxu0 0.0
  %134 = vmatpush2.msra.mxu0 0.0
  %135 = vmatprep.subr.mxu0 0.0
  %136 = vmatpush2.msra.mxu0 0.0
  %137 = vmatprep.subr.mxu0 0.0
  %138 = vmatpush2.msra.mxu0 0.0
  %139 = vmatprep.subr.mxu0 0.0
  %140 = vmatpush2.msra.mxu0 0.0
  %141 = vmatprep.subr.mxu0 0.0
  %142 = vmatpush2.msra.mxu0 0.0
  %143 = vmatprep.subr.mxu0 0.0
  %144 = vmatpush2.msra.mxu0 0.0
  %145 = vmatprep.subr.mxu0 0.0
  %146 = vmatpush2.msra.mxu0 0.0
  %147 = vmatprep.mubr.f32.mxu0 0.0
  %148 = vmatmul.mubr.f32.gmra.mxu0 %v69
  %v149 = vpop.f32.mrf.mxu0
  %v150 = vadd.f32 0.0, %v149
  %v151 = vpop.f32.mrf.mxu0
  %152 = vdwg.mxu0
  %v153 = vmul.f32 %v150, 0.015625
  %v155 = vlaneseq
  %v156 = vshrl.u32 %v155, 7
  %v157 = vsub.s32 0, %v156
  %v158 = vrot.slane %v82, %v157
  %vm160 = vcmask 261120
  %v162 = vsel %vm160, %v53, 0
  %v165 = vsel %vm160, %v54, 0
  %v168 = vsel %vm160, %v55, 0
  %v171 = vsel %vm160, %v56, 0
  %v174 = vsel %vm160, %v57, 0
  %v177 = vsel %vm160, %v58, 0
  %v180 = vsel %vm160, %v59, 0
  %v183 = vsel %vm160, %v60, 0
  %v186 = vsel %vm160, %v61, 0
  %v189 = vsel %vm160, %v62, 0
  %v192 = vsel %vm160, %v63, 0
  %v195 = vsel %vm160, %v64, 0
  %v198 = vsel %vm160, %v65, 0
  %v201 = vsel %vm160, %v66, 0
  %v204 = vsel %vm160, %v67, 0
  %v207 = vsel %vm160, %v68, 0
  %209 = vmatprep.subr.mxu0 0.0
  %210 = vmatpush1.msra.mxu0 0.0
  %211 = vmatprep.subr.mxu0 0.0
  %212 = vmatpush1.msra.mxu0 0.0
  %213 = vmatprep.subr.mxu0 0.0
  %214 = vmatpush1.msra.mxu0 0.0
  %215 = vmatprep.subr.mxu0 0.0
  %216 = vmatpush1.msra.mxu0 0.0
  %217 = vmatprep.subr.mxu0 0.0
  %218 = vmatpush1.msra.mxu0 0.0
  %219 = vmatprep.subr.mxu0 0.0
  %220 = vmatpush1.msra.mxu0 0.0
  %221 = vmatprep.subr.mxu0 0.0
  %222 = vmatpush1.msra.mxu0 0.0
  %223 = vmatprep.subr.mxu0 0.0
  %224 = vmatpush1.msra.mxu0 0.0
  %225 = vmatprep.subr.mxu0 0.0
  %226 = vmatpush1.msra.mxu0 0.0
  %227 = vmatprep.subr.mxu0 0.0
  %228 = vmatpush1.msra.mxu0 0.0
  %229 = vmatprep.subr.mxu0 0.0
  %230 = vmatpush1.msra.mxu0 0.0
  %231 = vmatprep.subr.mxu0 0.0
  %232 = vmatpush1.msra.mxu0 0.0
  %233 = vmatprep.subr.mxu0 0.0
  %234 = vmatpush1.msra.mxu0 %v81
  %235 = vmatprep.subr.mxu0 0.0
  %236 = vmatpush1.msra.mxu0 %v80
  %237 = vmatprep.subr.mxu0 0.0
  %238 = vmatpush1.msra.mxu0 %v79
  %239 = vmatprep.subr.mxu0 0.0
  %240 = vmatpush1.msra.mxu0 %v78
  %241 = vmatprep.subr.mxu0 0.0
  %242 = vmatpush2.msra.mxu0 0.0
  %243 = vmatprep.subr.mxu0 0.0
  %244 = vmatpush2.msra.mxu0 0.0
  %245 = vmatprep.subr.mxu0 0.0
  %246 = vmatpush2.msra.mxu0 0.0
  %247 = vmatprep.subr.mxu0 0.0
  %248 = vmatpush2.msra.mxu0 0.0
  %249 = vmatprep.subr.mxu0 0.0
  %250 = vmatpush2.msra.mxu0 0.0
  %251 = vmatprep.subr.mxu0 0.0
  %252 = vmatpush2.msra.mxu0 0.0
  %253 = vmatprep.subr.mxu0 0.0
  %254 = vmatpush2.msra.mxu0 0.0
  %255 = vmatprep.subr.mxu0 0.0
  %256 = vmatpush2.msra.mxu0 0.0
  %257 = vmatprep.subr.mxu0 0.0
  %258 = vmatpush2.msra.mxu0 0.0
  %259 = vmatprep.subr.mxu0 0.0
  %260 = vmatpush2.msra.mxu0 0.0
  %261 = vmatprep.subr.mxu0 0.0
  %262 = vmatpush2.msra.mxu0 0.0
  %263 = vmatprep.subr.mxu0 0.0
  %264 = vmatpush2.msra.mxu0 0.0
  %265 = vmatprep.subr.mxu0 0.0
  %266 = vmatpush2.msra.mxu0 0.0
  %267 = vmatprep.subr.mxu0 0.0
  %268 = vmatpush2.msra.mxu0 0.0
  %269 = vmatprep.subr.mxu0 0.0
  %270 = vmatpush2.msra.mxu0 0.0
  %271 = vmatprep.subr.mxu0 0.0
  %272 = vmatpush2.msra.mxu0 0.0
  %273 = vmatprep.mubr.f32.mxu0 0.0
  %274 = vmatmul.mubr.f32.gmra.mxu0 %v162
  %v275 = vpop.f32.mrf.mxu0
  %v276 = vadd.f32 %v158, %v275
  %v277 = vpop.f32.mrf.mxu0
  %278 = vmatprep.mubr.f32.mxu0 0.0
  %279 = vmatmul.mubr.f32.gmra.mxu0 %v165
  %v280 = vpop.f32.mrf.mxu0
  %v281 = vadd.f32 %v158, %v280
  %v282 = vpop.f32.mrf.mxu0
  %283 = vmatprep.mubr.f32.mxu0 0.0
  %284 = vmatmul.mubr.f32.gmra.mxu0 %v168
  %v285 = vpop.f32.mrf.mxu0
  %v286 = vadd.f32 %v158, %v285
  %v287 = vpop.f32.mrf.mxu0
  %288 = vmatprep.mubr.f32.mxu0 0.0
  %289 = vmatmul.mubr.f32.gmra.mxu0 %v171
  %v290 = vpop.f32.mrf.mxu0
  %v291 = vadd.f32 %v158, %v290
  %v292 = vpop.f32.mrf.mxu0
  %293 = vmatprep.mubr.f32.mxu0 0.0
  %294 = vmatmul.mubr.f32.gmra.mxu0 %v174
  %v295 = vpop.f32.mrf.mxu0
  %v296 = vadd.f32 %v158, %v295
  %v297 = vpop.f32.mrf.mxu0
  %298 = vmatprep.mubr.f32.mxu0 0.0
  %299 = vmatmul.mubr.f32.gmra.mxu0 %v177
  %v300 = vpop.f32.mrf.mxu0
  %v301 = vadd.f32 %v158, %v300
  %v302 = vpop.f32.mrf.mxu0
  %303 = vmatprep.mubr.f32.mxu0 0.0
  %304 = vmatmul.mubr.f32.gmra.mxu0 %v180
  %v305 = vpop.f32.mrf.mxu0
  %v306 = vadd.f32 %v158, %v305
  %v307 = vpop.f32.mrf.mxu0
  %308 = vmatprep.mubr.f32.mxu0 0.0
  %309 = vmatmul.mubr.f32.gmra.mxu0 %v183
  %v310 = vpop.f32.mrf.mxu0
  %v311 = vadd.f32 %v158, %v310
  %v312 = vpop.f32.mrf.mxu0
  %313 = vmatprep.mubr.f32.mxu0 0.0
  %314 = vmatmul.mubr.f32.gmra.mxu0 %v186
  %v315 = vpop.f32.mrf.mxu0
  %v316 = vadd.f32 %v158, %v315
  %v317 = vpop.f32.mrf.mxu0
  %318 = vmatprep.mubr.f32.mxu0 0.0
  %319 = vmatmul.mubr.f32.gmra.mxu0 %v189
  %v320 = vpop.f32.mrf.mxu0
  %v321 = vadd.f32 %v158, %v320
  %v322 = vpop.f32.mrf.mxu0
  %323 = vmatprep.mubr.f32.mxu0 0.0
  %324 = vmatmul.mubr.f32.gmra.mxu0 %v192
  %v325 = vpop.f32.mrf.mxu0
  %v326 = vadd.f32 %v158, %v325
  %v327 = vpop.f32.mrf.mxu0
  %328 = vmatprep.mubr.f32.mxu0 0.0
  %329 = vmatmul.mubr.f32.gmra.mxu0 %v195
  %v330 = vpop.f32.mrf.mxu0
  %v331 = vadd.f32 %v158, %v330
  %v332 = vpop.f32.mrf.mxu0
  %333 = vmatprep.mubr.f32.mxu0 0.0
  %334 = vmatmul.mubr.f32.gmra.mxu0 %v198
  %v335 = vpop.f32.mrf.mxu0
  %v336 = vadd.f32 %v158, %v335
  %v337 = vpop.f32.mrf.mxu0
  %338 = vmatprep.mubr.f32.mxu0 0.0
  %339 = vmatmul.mubr.f32.gmra.mxu0 %v201
  %v340 = vpop.f32.mrf.mxu0
  %v341 = vadd.f32 %v158, %v340
  %v342 = vpop.f32.mrf.mxu0
  %343 = vmatprep.mubr.f32.mxu0 0.0
  %344 = vmatmul.mubr.f32.gmra.mxu0 %v204
  %v345 = vpop.f32.mrf.mxu0
  %v346 = vadd.f32 %v158, %v345
  %v347 = vpop.f32.mrf.mxu0
  %348 = vmatprep.mubr.f32.mxu0 0.0
  %349 = vmatmul.mubr.f32.gmra.mxu0 %v207
  %v350 = vpop.f32.mrf.mxu0
  %v351 = vadd.f32 %v158, %v350
  %v352 = vpop.f32.mrf.mxu0
  %353 = vdwg.mxu0
  %vm354 = vcmask 523264
  %v355 = vsel %vm354, %v276, -inf
  %356 = vmax.xlane.f32.xlu0 %v355
  %v357 = vpop.xlane.xlu0 %356
  %v358 = vsel %vm354, %v281, -inf
  %359 = vmax.xlane.f32.xlu0 %v358
  %v360 = vpop.xlane.xlu0 %359
  %v361 = vsel %vm354, %v286, -inf
  %362 = vmax.xlane.f32.xlu0 %v361
  %v363 = vpop.xlane.xlu0 %362
  %v364 = vsel %vm354, %v291, -inf
  %365 = vmax.xlane.f32.xlu0 %v364
  %v366 = vpop.xlane.xlu0 %365
  %v367 = vsel %vm354, %v296, -inf
  %368 = vmax.xlane.f32.xlu0 %v367
  %v369 = vpop.xlane.xlu0 %368
  %v370 = vsel %vm354, %v301, -inf
  %371 = vmax.xlane.f32.xlu0 %v370
  %v372 = vpop.xlane.xlu0 %371
  %v373 = vsel %vm354, %v306, -inf
  %374 = vmax.xlane.f32.xlu0 %v373
  %v375 = vpop.xlane.xlu0 %374
  %v376 = vsel %vm354, %v311, -inf
  %377 = vmax.xlane.f32.xlu0 %v376
  %v378 = vpop.xlane.xlu0 %377
  %v379 = vsel %vm354, %v316, -inf
  %380 = vmax.xlane.f32.xlu0 %v379
  %v381 = vpop.xlane.xlu0 %380
  %v382 = vsel %vm354, %v321, -inf
  %383 = vmax.xlane.f32.xlu0 %v382
  %v384 = vpop.xlane.xlu0 %383
  %v385 = vsel %vm354, %v326, -inf
  %386 = vmax.xlane.f32.xlu0 %v385
  %v387 = vpop.xlane.xlu0 %386
  %v388 = vsel %vm354, %v331, -inf
  %389 = vmax.xlane.f32.xlu0 %v388
  %v390 = vpop.xlane.xlu0 %389
  %v391 = vsel %vm354, %v336, -inf
  %392 = vmax.xlane.f32.xlu0 %v391
  %v393 = vpop.xlane.xlu0 %392
  %v394 = vsel %vm354, %v341, -inf
  %395 = vmax.xlane.f32.xlu0 %v394
  %v396 = vpop.xlane.xlu0 %395
  %v397 = vsel %vm354, %v346, -inf
  %398 = vmax.xlane.f32.xlu0 %v397
  %v399 = vpop.xlane.xlu0 %398
  %v400 = vsel %vm354, %v351, -inf
  %401 = vmax.xlane.f32.xlu0 %v400
  %v402 = vpop.xlane.xlu0 %401
  %v403 = vmax.f32 %v357, %v369
  %v404 = vmax.f32 %v360, %v372
  %v405 = vmax.f32 %v363, %v375
  %v406 = vmax.f32 %v366, %v378
  %v407 = vmax.f32 %v403, %v381
  %v408 = vmax.f32 %v404, %v384
  %v409 = vmax.f32 %v405, %v387
  %v410 = vmax.f32 %v406, %v390
  %v411 = vmax.f32 %v407, %v393
  %v412 = vmax.f32 %v408, %v396
  %v413 = vmax.f32 %v409, %v399
  %v414 = vmax.f32 %v410, %v402
  %v415 = vmax.f32 %v411, %v412
  %v416 = vmax.f32 %v413, %v414
  %v417 = vmax.f32 %v415, %v416
  %v418 = vrot.slane %v417, 4
  %v419 = vmax.f32 %v417, %v418
  %v420 = vrot.slane %v419, 2
  %v421 = vmax.f32 %v419, %v420
  %v422 = vrot.slane %v421, 1
  %v423 = vmax.f32 %v421, %v422
  %v424 = vsub.f32 %v276, %v423
  %v425 = vsub.f32 %v281, %v423
  %v426 = vsub.f32 %v286, %v423
  %v427 = vsub.f32 %v291, %v423
  %v428 = vsub.f32 %v296, %v423
  %v429 = vsub.f32 %v301, %v423
  %v430 = vsub.f32 %v306, %v423
  %v431 = vsub.f32 %v311, %v423
  %v432 = vsub.f32 %v316, %v423
  %v433 = vsub.f32 %v321, %v423
  %v434 = vsub.f32 %v326, %v423
  %v435 = vsub.f32 %v331, %v423
  %v436 = vsub.f32 %v336, %v423
  %v437 = vsub.f32 %v341, %v423
  %v438 = vsub.f32 %v346, %v423
  %v439 = vsub.f32 %v351, %v423
  %v440 = vmul.f32 %v424, 1.442695
  %v441 = vpow.pop %v440
  %v442 = vmul.f32 %v425, 1.442695
  %v443 = vpow.pop %v442
  %v444 = vmul.f32 %v426, 1.442695
  %v445 = vpow.pop %v444
  %v446 = vmul.f32 %v427, 1.442695
  %v447 = vpow.pop %v446
  %v448 = vmul.f32 %v428, 1.442695
  %v449 = vpow.pop %v448
  %v450 = vmul.f32 %v429, 1.442695
  %v451 = vpow.pop %v450
  %v452 = vmul.f32 %v430, 1.442695
  %v453 = vpow.pop %v452
  %v454 = vmul.f32 %v431, 1.442695
  %v455 = vpow.pop %v454
  %v456 = vmul.f32 %v432, 1.442695
  %v457 = vpow.pop %v456
  %v458 = vmul.f32 %v433, 1.442695
  %v459 = vpow.pop %v458
  %v460 = vmul.f32 %v434, 1.442695
  %v461 = vpow.pop %v460
  %v462 = vmul.f32 %v435, 1.442695
  %v463 = vpow.pop %v462
  %v464 = vmul.f32 %v436, 1.442695
  %v465 = vpow.pop %v464
  %v466 = vmul.f32 %v437, 1.442695
  %v467 = vpow.pop %v466
  %v468 = vmul.f32 %v438, 1.442695
  %v469 = vpow.pop %v468
  %v470 = vmul.f32 %v439, 1.442695
  %v471 = vpow.pop %v470
  %472 = vmatprep.subr.mxu0 0.0
  %473 = vmatpush1.msra.mxu0 %v471
  %474 = vmatprep.subr.mxu0 0.0
  %475 = vmatpush1.msra.mxu0 %v469
  %476 = vmatprep.subr.mxu0 0.0
  %477 = vmatpush1.msra.mxu0 %v467
  %478 = vmatprep.subr.mxu0 0.0
  %479 = vmatpush1.msra.mxu0 %v465
  %480 = vmatprep.subr.mxu0 0.0
  %481 = vmatpush1.msra.mxu0 %v463
  %482 = vmatprep.subr.mxu0 0.0
  %483 = vmatpush1.msra.mxu0 %v461
  %484 = vmatprep.subr.mxu0 0.0
  %485 = vmatpush1.msra.mxu0 %v459
  %486 = vmatprep.subr.mxu0 0.0
  %487 = vmatpush1.msra.mxu0 %v457
  %488 = vmatprep.subr.mxu0 0.0
  %489 = vmatpush1.msra.mxu0 %v455
  %490 = vmatprep.subr.mxu0 0.0
  %491 = vmatpush1.msra.mxu0 %v453
  %492 = vmatprep.subr.mxu0 0.0
  %493 = vmatpush1.msra.mxu0 %v451
  %494 = vmatprep.subr.mxu0 0.0
  %495 = vmatpush1.msra.mxu0 %v449
  %496 = vmatprep.subr.mxu0 0.0
  %497 = vmatpush1.msra.mxu0 %v447
  %498 = vmatprep.subr.mxu0 0.0
  %499 = vmatpush1.msra.mxu0 %v445
  %500 = vmatprep.subr.mxu0 0.0
  %501 = vmatpush1.msra.mxu0 %v443
  %502 = vmatprep.subr.mxu0 0.0
  %503 = vmatpush1.msra.mxu0 %v441
  %504 = vmatprep.subr.mxu0 0.0
  %505 = vmatpush2.msra.mxu0 0.0
  %506 = vmatprep.subr.mxu0 0.0
  %507 = vmatpush2.msra.mxu0 0.0
  %508 = vmatprep.subr.mxu0 0.0
  %509 = vmatpush2.msra.mxu0 0.0
  %510 = vmatprep.subr.mxu0 0.0
  %511 = vmatpush2.msra.mxu0 0.0
  %512 = vmatprep.subr.mxu0 0.0
  %513 = vmatpush2.msra.mxu0 0.0
  %514 = vmatprep.subr.mxu0 0.0
  %515 = vmatpush2.msra.mxu0 0.0
  %516 = vmatprep.subr.mxu0 0.0
  %517 = vmatpush2.msra.mxu0 0.0
  %518 = vmatprep.subr.mxu0 0.0
  %519 = vmatpush2.msra.mxu0 0.0
  %520 = vmatprep.subr.mxu0 0.0
  %521 = vmatpush2.msra.mxu0 0.0
  %522 = vmatprep.subr.mxu0 0.0
  %523 = vmatpush2.msra.mxu0 0.0
  %524 = vmatprep.subr.mxu0 0.0
  %525 = vmatpush2.msra.mxu0 0.0
  %526 = vmatprep.subr.mxu0 0.0
  %527 = vmatpush2.msra.mxu0 0.0
  %528 = vmatprep.subr.mxu0 0.0
  %529 = vmatpush2.msra.mxu0 0.0
  %530 = vmatprep.subr.mxu0 0.0
  %531 = vmatpush2.msra.mxu0 0.0
  %532 = vmatprep.subr.mxu0 0.0
  %533 = vmatpush2.msra.mxu0 0.0
  %534 = vmatprep.subr.mxu0 0.0
  %535 = vmatpush2.msra.mxu0 0.0
  %536 = vmatprep.mubr.f32.mxu0 0.0
  %537 = vmatmul.mubr.f32.gmra.mxu0 %v69
  %v538 = vpop.f32.mrf.mxu0
  %v539 = vadd.f32 0.0, %v538
  %v540 = vpop.f32.mrf.mxu0
  %541 = vdwg.mxu0
  %v543 = vsel %vm354, %v539, 0
  %545 = vmatprep.subr.mxu0 0.0
  %546 = vmatpush1.msra.mxu0 0.0
  %547 = vmatprep.subr.mxu0 0.0
  %548 = vmatpush1.msra.mxu0 0.0
  %549 = vmatprep.subr.mxu0 0.0
  %550 = vmatpush1.msra.mxu0 0.0
  %551 = vmatprep.subr.mxu0 0.0
  %552 = vmatpush1.msra.mxu0 0.0
  %553 = vmatprep.subr.mxu0 0.0
  %554 = vmatpush1.msra.mxu0 0.0
  %555 = vmatprep.subr.mxu0 0.0
  %556 = vmatpush1.msra.mxu0 0.0
  %557 = vmatprep.subr.mxu0 0.0
  %558 = vmatpush1.msra.mxu0 0.0
  %559 = vmatprep.subr.mxu0 0.0
  %560 = vmatpush1.msra.mxu0 0.0
  %561 = vmatprep.subr.mxu0 0.0
  %562 = vmatpush1.msra.mxu0 %v77
  %563 = vmatprep.subr.mxu0 0.0
  %564 = vmatpush1.msra.mxu0 %v76
  %565 = vmatprep.subr.mxu0 0.0
  %566 = vmatpush1.msra.mxu0 %v75
  %567 = vmatprep.subr.mxu0 0.0
  %568 = vmatpush1.msra.mxu0 %v74
  %569 = vmatprep.subr.mxu0 0.0
  %570 = vmatpush1.msra.mxu0 %v73
  %571 = vmatprep.subr.mxu0 0.0
  %572 = vmatpush1.msra.mxu0 %v72
  %573 = vmatprep.subr.mxu0 0.0
  %574 = vmatpush1.msra.mxu0 %v71
  %575 = vmatprep.subr.mxu0 0.0
  %576 = vmatpush1.msra.mxu0 %v70
  %577 = vmatprep.subr.mxu0 0.0
  %578 = vmatpush2.msra.mxu0 0.0
  %579 = vmatprep.subr.mxu0 0.0
  %580 = vmatpush2.msra.mxu0 0.0
  %581 = vmatprep.subr.mxu0 0.0
  %582 = vmatpush2.msra.mxu0 0.0
  %583 = vmatprep.subr.mxu0 0.0
  %584 = vmatpush2.msra.mxu0 0.0
  %585 = vmatprep.subr.mxu0 0.0
  %586 = vmatpush2.msra.mxu0 0.0
  %587 = vmatprep.subr.mxu0 0.0
  %588 = vmatpush2.msra.mxu0 0.0
  %589 = vmatprep.subr.mxu0 0.0
  %590 = vmatpush2.msra.mxu0 0.0
  %591 = vmatprep.subr.mxu0 0.0
  %592 = vmatpush2.msra.mxu0 0.0
  %593 = vmatprep.subr.mxu0 0.0
  %594 = vmatpush2.msra.mxu0 0.0
  %595 = vmatprep.subr.mxu0 0.0
  %596 = vmatpush2.msra.mxu0 0.0
  %597 = vmatprep.subr.mxu0 0.0
  %598 = vmatpush2.msra.mxu0 0.0
  %599 = vmatprep.subr.mxu0 0.0
  %600 = vmatpush2.msra.mxu0 0.0
  %601 = vmatprep.subr.mxu0 0.0
  %602 = vmatpush2.msra.mxu0 0.0
  %603 = vmatprep.subr.mxu0 0.0
  %604 = vmatpush2.msra.mxu0 0.0
  %605 = vmatprep.subr.mxu0 0.0
  %606 = vmatpush2.msra.mxu0 0.0
  %607 = vmatprep.subr.mxu0 0.0
  %608 = vmatpush2.msra.mxu0 0.0
  %609 = vmatprep.mubr.f32.mxu0 0.0
  %610 = vmatmul.mubr.f32.gmra.mxu0 %v543
  %v611 = vpop.f32.mrf.mxu0
  %v612 = vadd.f32 0.0, %v611
  %v613 = vpop.f32.mrf.mxu0
  %614 = vdwg.mxu0
  %v615 = vrcp.pop %v612
  %v616 = vmul.f32 1.0, %v615
  %618 = vrot.lane.b32.xlu0 %v616, 8
  %v619 = vpop.permute.xlu0 %618
  %v621 = vmul.f32 %v612, %v619
  %v622 = vrot.slane %v616, 6
  %v624 = vmul.f32 %v612, %v622
  %v625 = vrot.slane %v616, 4
  %v627 = vmul.f32 %v612, %v625
  %v628 = vld [vmem:[%s5] sm:$0xff]
  %v629 = vld [vmem:[%s5 + $0x8] sm:$0xff]
  %v630 = vld [vmem:[%s5 + $0x10] sm:$0xff]
  %v631 = vld [vmem:[%s5 + $0x18] sm:$0xff]
  %v632 = vld [vmem:[%s5 + $0x20] sm:$0xff]
  %v633 = vld [vmem:[%s5 + $0x28] sm:$0xff]
  %v634 = vld [vmem:[%s5 + $0x30] sm:$0xff]
  %v635 = vld [vmem:[%s5 + $0x38] sm:$0xff]
  %v636 = vld [vmem:[%s6] sm:$0x3]
  %v638 = vlaneseq
  %v639 = vshrl.u32 %v638, 7
  %v640 = vsub.s32 0, %v639
  %v641 = vrot.slane %v636, %v640
  %v642 = vlaneseq
  %v643 = vshrl.u32 %v642, 7
  %v644 = vsub.s32 1, %v643
  %v645 = vrot.slane %v636, %v644
  %v649 = vsel %vm160, %v153, 0
  %651 = vmatprep.subr.mxu0 0.0
  %652 = vmatpush1.msra.mxu0 0.0
  %653 = vmatprep.subr.mxu0 0.0
  %654 = vmatpush1.msra.mxu0 0.0
  %655 = vmatprep.subr.mxu0 0.0
  %656 = vmatpush1.msra.mxu0 0.0
  %657 = vmatprep.subr.mxu0 0.0
  %658 = vmatpush1.msra.mxu0 0.0
  %659 = vmatprep.subr.mxu0 0.0
  %660 = vmatpush1.msra.mxu0 0.0
  %661 = vmatprep.subr.mxu0 0.0
  %662 = vmatpush1.msra.mxu0 0.0
  %663 = vmatprep.subr.mxu0 0.0
  %664 = vmatpush1.msra.mxu0 0.0
  %665 = vmatprep.subr.mxu0 0.0
  %666 = vmatpush1.msra.mxu0 0.0
  %667 = vmatprep.subr.mxu0 0.0
  %668 = vmatpush1.msra.mxu0 0.0
  %669 = vmatprep.subr.mxu0 0.0
  %670 = vmatpush1.msra.mxu0 0.0
  %671 = vmatprep.subr.mxu0 0.0
  %672 = vmatpush1.msra.mxu0 0.0
  %673 = vmatprep.subr.mxu0 0.0
  %674 = vmatpush1.msra.mxu0 0.0
  %675 = vmatprep.subr.mxu0 %v635
  %676 = vmatpush1.msra.mxu0 %v634
  %677 = vmatprep.subr.mxu0 %v633
  %678 = vmatpush1.msra.mxu0 %v632
  %679 = vmatprep.subr.mxu0 %v631
  %680 = vmatpush1.msra.mxu0 %v630
  %681 = vmatprep.subr.mxu0 %v629
  %682 = vmatpush1.msra.mxu0 %v628
  %683 = vmatprep.subr.mxu0 0.0
  %684 = vmatpush2.msra.mxu0 0.0
  %685 = vmatprep.subr.mxu0 0.0
  %686 = vmatpush2.msra.mxu0 0.0
  %687 = vmatprep.subr.mxu0 0.0
  %688 = vmatpush2.msra.mxu0 0.0
  %689 = vmatprep.subr.mxu0 0.0
  %690 = vmatpush2.msra.mxu0 0.0
  %691 = vmatprep.subr.mxu0 0.0
  %692 = vmatpush2.msra.mxu0 0.0
  %693 = vmatprep.subr.mxu0 0.0
  %694 = vmatpush2.msra.mxu0 0.0
  %695 = vmatprep.subr.mxu0 0.0
  %696 = vmatpush2.msra.mxu0 0.0
  %697 = vmatprep.subr.mxu0 0.0
  %698 = vmatpush2.msra.mxu0 0.0
  %699 = vmatprep.subr.mxu0 0.0
  %700 = vmatpush2.msra.mxu0 0.0
  %701 = vmatprep.subr.mxu0 0.0
  %702 = vmatpush2.msra.mxu0 0.0
  %703 = vmatprep.subr.mxu0 0.0
  %704 = vmatpush2.msra.mxu0 0.0
  %705 = vmatprep.subr.mxu0 0.0
  %706 = vmatpush2.msra.mxu0 0.0
  %707 = vmatprep.subr.mxu0 0.0
  %708 = vmatpush2.msra.mxu0 0.0
  %709 = vmatprep.subr.mxu0 0.0
  %710 = vmatpush2.msra.mxu0 0.0
  %711 = vmatprep.subr.mxu0 0.0
  %712 = vmatpush2.msra.mxu0 0.0
  %713 = vmatprep.subr.mxu0 0.0
  %714 = vmatpush2.msra.mxu0 0.0
  %715 = vmatprep.mubr.f32.mxu0 0.0
  %716 = vmatmul.mubr.f32.gmra.mxu0 %v649
  %v717 = vpop.f32.mrf.mxu0
  %v718 = vadd.f32 %v641, %v717
  %v719 = vpop.f32.mrf.mxu0
  %v720 = vadd.f32 %v645, %v719
  %721 = vdwg.mxu0
  %v722 = vld [vmem:[%s7] sm:$0xff]
  %v723 = vld [vmem:[%s7 + $0x8] sm:$0xff]
  %v725 = vrot.slane %v624, 2
  %vm726 = vcmask 64512
  %v727 = vsel %vm726, %v725, 0
  %729 = vmatprep.subr.mxu0 0.0
  %730 = vmatpush1.msra.mxu0 0.0
  %731 = vmatprep.subr.mxu0 0.0
  %732 = vmatpush1.msra.mxu0 0.0
  %733 = vmatprep.subr.mxu0 0.0
  %734 = vmatpush1.msra.mxu0 0.0
  %735 = vmatprep.subr.mxu0 0.0
  %736 = vmatpush1.msra.mxu0 0.0
  %737 = vmatprep.subr.mxu0 0.0
  %738 = vmatpush1.msra.mxu0 0.0
  %739 = vmatprep.subr.mxu0 0.0
  %740 = vmatpush1.msra.mxu0 0.0
  %741 = vmatprep.subr.mxu0 0.0
  %742 = vmatpush1.msra.mxu0 0.0
  %743 = vmatprep.subr.mxu0 0.0
  %744 = vmatpush1.msra.mxu0 0.0
  %745 = vmatprep.subr.mxu0 0.0
  %746 = vmatpush1.msra.mxu0 0.0
  %747 = vmatprep.subr.mxu0 0.0
  %748 = vmatpush1.msra.mxu0 0.0
  %749 = vmatprep.subr.mxu0 0.0
  %750 = vmatpush1.msra.mxu0 0.0
  %751 = vmatprep.subr.mxu0 0.0
  %752 = vmatpush1.msra.mxu0 0.0
  %753 = vmatprep.subr.mxu0 0.0
  %754 = vmatpush1.msra.mxu0 0.0
  %755 = vmatprep.subr.mxu0 0.0
  %756 = vmatpush1.msra.mxu0 0.0
  %757 = vmatprep.subr.mxu0 0.0
  %758 = vmatpush1.msra.mxu0 0.0
  %759 = vmatprep.subr.mxu0 %v723
  %760 = vmatpush1.msra.mxu0 %v722
  %761 = vmatprep.subr.mxu0 0.0
  %762 = vmatpush2.msra.mxu0 0.0
  %763 = vmatprep.subr.mxu0 0.0
  %764 = vmatpush2.msra.mxu0 0.0
  %765 = vmatprep.subr.mxu0 0.0
  %766 = vmatpush2.msra.mxu0 0.0
  %767 = vmatprep.subr.mxu0 0.0
  %768 = vmatpush2.msra.mxu0 0.0
  %769 = vmatprep.subr.mxu0 0.0
  %770 = vmatpush2.msra.mxu0 0.0
  %771 = vmatprep.subr.mxu0 0.0
  %772 = vmatpush2.msra.mxu0 0.0
  %773 = vmatprep.subr.mxu0 0.0
  %774 = vmatpush2.msra.mxu0 0.0
  %775 = vmatprep.subr.mxu0 0.0
  %776 = vmatpush2.msra.mxu0 0.0
  %777 = vmatprep.subr.mxu0 0.0
  %778 = vmatpush2.msra.mxu0 0.0
  %779 = vmatprep.subr.mxu0 0.0
  %780 = vmatpush2.msra.mxu0 0.0
  %781 = vmatprep.subr.mxu0 0.0
  %782 = vmatpush2.msra.mxu0 0.0
  %783 = vmatprep.subr.mxu0 0.0
  %784 = vmatpush2.msra.mxu0 0.0
  %785 = vmatprep.subr.mxu0 0.0
  %786 = vmatpush2.msra.mxu0 0.0
  %787 = vmatprep.subr.mxu0 0.0
  %788 = vmatpush2.msra.mxu0 0.0
  %789 = vmatprep.subr.mxu0 0.0
  %790 = vmatpush2.msra.mxu0 0.0
  %791 = vmatprep.subr.mxu0 0.0
  %792 = vmatpush2.msra.mxu0 0.0
  %793 = vmatprep.mubr.f32.mxu0 0.0
  %794 = vmatmul.mubr.f32.gmra.mxu0 %v727
  %v795 = vpop.f32.mrf.mxu0
  %v796 = vadd.f32 0.0, %v795
  %v797 = vpop.f32.mrf.mxu0
  %v798 = vadd.f32 0.0, %v797
  %799 = vdwg.mxu0
  %v800 = vadd.f32 %v718, %v796
  %v801 = vadd.f32 %v720, %v798
  %v802 = vld [vmem:[%s8] sm:$0xff]
  %v803 = vld [vmem:[%s8 + $0x8] sm:$0xff]
  %v805 = vrot.slane %v627, 4
  %v806 = vsel %vm726, %v805, 0
  %808 = vmatprep.subr.mxu0 0.0
  %809 = vmatpush1.msra.mxu0 0.0
  %810 = vmatprep.subr.mxu0 0.0
  %811 = vmatpush1.msra.mxu0 0.0
  %812 = vmatprep.subr.mxu0 0.0
  %813 = vmatpush1.msra.mxu0 0.0
  %814 = vmatprep.subr.mxu0 0.0
  %815 = vmatpush1.msra.mxu0 0.0
  %816 = vmatprep.subr.mxu0 0.0
  %817 = vmatpush1.msra.mxu0 0.0
  %818 = vmatprep.subr.mxu0 0.0
  %819 = vmatpush1.msra.mxu0 0.0
  %820 = vmatprep.subr.mxu0 0.0
  %821 = vmatpush1.msra.mxu0 0.0
  %822 = vmatprep.subr.mxu0 0.0
  %823 = vmatpush1.msra.mxu0 0.0
  %824 = vmatprep.subr.mxu0 0.0
  %825 = vmatpush1.msra.mxu0 0.0
  %826 = vmatprep.subr.mxu0 0.0
  %827 = vmatpush1.msra.mxu0 0.0
  %828 = vmatprep.subr.mxu0 0.0
  %829 = vmatpush1.msra.mxu0 0.0
  %830 = vmatprep.subr.mxu0 0.0
  %831 = vmatpush1.msra.mxu0 0.0
  %832 = vmatprep.subr.mxu0 0.0
  %833 = vmatpush1.msra.mxu0 0.0
  %834 = vmatprep.subr.mxu0 0.0
  %835 = vmatpush1.msra.mxu0 0.0
  %836 = vmatprep.subr.mxu0 0.0
  %837 = vmatpush1.msra.mxu0 0.0
  %838 = vmatprep.subr.mxu0 %v803
  %839 = vmatpush1.msra.mxu0 %v802
  %840 = vmatprep.subr.mxu0 0.0
  %841 = vmatpush2.msra.mxu0 0.0
  %842 = vmatprep.subr.mxu0 0.0
  %843 = vmatpush2.msra.mxu0 0.0
  %844 = vmatprep.subr.mxu0 0.0
  %845 = vmatpush2.msra.mxu0 0.0
  %846 = vmatprep.subr.mxu0 0.0
  %847 = vmatpush2.msra.mxu0 0.0
  %848 = vmatprep.subr.mxu0 0.0
  %849 = vmatpush2.msra.mxu0 0.0
  %850 = vmatprep.subr.mxu0 0.0
  %851 = vmatpush2.msra.mxu0 0.0
  %852 = vmatprep.subr.mxu0 0.0
  %853 = vmatpush2.msra.mxu0 0.0
  %854 = vmatprep.subr.mxu0 0.0
  %855 = vmatpush2.msra.mxu0 0.0
  %856 = vmatprep.subr.mxu0 0.0
  %857 = vmatpush2.msra.mxu0 0.0
  %858 = vmatprep.subr.mxu0 0.0
  %859 = vmatpush2.msra.mxu0 0.0
  %860 = vmatprep.subr.mxu0 0.0
  %861 = vmatpush2.msra.mxu0 0.0
  %862 = vmatprep.subr.mxu0 0.0
  %863 = vmatpush2.msra.mxu0 0.0
  %864 = vmatprep.subr.mxu0 0.0
  %865 = vmatpush2.msra.mxu0 0.0
  %866 = vmatprep.subr.mxu0 0.0
  %867 = vmatpush2.msra.mxu0 0.0
  %868 = vmatprep.subr.mxu0 0.0
  %869 = vmatpush2.msra.mxu0 0.0
  %870 = vmatprep.subr.mxu0 0.0
  %871 = vmatpush2.msra.mxu0 0.0
  %872 = vmatprep.mubr.f32.mxu0 0.0
  %873 = vmatmul.mubr.f32.gmra.mxu0 %v806
  %v874 = vpop.f32.mrf.mxu0
  %v875 = vadd.f32 0.0, %v874
  %v876 = vpop.f32.mrf.mxu0
  %v877 = vadd.f32 0.0, %v876
  %878 = vdwg.mxu0
  %v879 = vadd.f32 %v800, %v875
  %v880 = vadd.f32 %v801, %v877
  %v881 = vld [vmem:[%s9] sm:$0xff]
  %v882 = vld [vmem:[%s9 + $0x8] sm:$0xff]
  %884 = vrot.lane.b32.xlu0 %v621, 120
  %v885 = vpop.permute.xlu0 %884
  %v886 = vsel %vm726, %v885, 0
  %888 = vmatprep.subr.mxu0 0.0
  %889 = vmatpush1.msra.mxu0 0.0
  %890 = vmatprep.subr.mxu0 0.0
  %891 = vmatpush1.msra.mxu0 0.0
  %892 = vmatprep.subr.mxu0 0.0
  %893 = vmatpush1.msra.mxu0 0.0
  %894 = vmatprep.subr.mxu0 0.0
  %895 = vmatpush1.msra.mxu0 0.0
  %896 = vmatprep.subr.mxu0 0.0
  %897 = vmatpush1.msra.mxu0 0.0
  %898 = vmatprep.subr.mxu0 0.0
  %899 = vmatpush1.msra.mxu0 0.0
  %900 = vmatprep.subr.mxu0 0.0
  %901 = vmatpush1.msra.mxu0 0.0
  %902 = vmatprep.subr.mxu0 0.0
  %903 = vmatpush1.msra.mxu0 0.0
  %904 = vmatprep.subr.mxu0 0.0
  %905 = vmatpush1.msra.mxu0 0.0
  %906 = vmatprep.subr.mxu0 0.0
  %907 = vmatpush1.msra.mxu0 0.0
  %908 = vmatprep.subr.mxu0 0.0
  %909 = vmatpush1.msra.mxu0 0.0
  %910 = vmatprep.subr.mxu0 0.0
  %911 = vmatpush1.msra.mxu0 0.0
  %912 = vmatprep.subr.mxu0 0.0
  %913 = vmatpush1.msra.mxu0 0.0
  %914 = vmatprep.subr.mxu0 0.0
  %915 = vmatpush1.msra.mxu0 0.0
  %916 = vmatprep.subr.mxu0 0.0
  %917 = vmatpush1.msra.mxu0 0.0
  %918 = vmatprep.subr.mxu0 %v882
  %919 = vmatpush1.msra.mxu0 %v881
  %920 = vmatprep.subr.mxu0 0.0
  %921 = vmatpush2.msra.mxu0 0.0
  %922 = vmatprep.subr.mxu0 0.0
  %923 = vmatpush2.msra.mxu0 0.0
  %924 = vmatprep.subr.mxu0 0.0
  %925 = vmatpush2.msra.mxu0 0.0
  %926 = vmatprep.subr.mxu0 0.0
  %927 = vmatpush2.msra.mxu0 0.0
  %928 = vmatprep.subr.mxu0 0.0
  %929 = vmatpush2.msra.mxu0 0.0
  %930 = vmatprep.subr.mxu0 0.0
  %931 = vmatpush2.msra.mxu0 0.0
  %932 = vmatprep.subr.mxu0 0.0
  %933 = vmatpush2.msra.mxu0 0.0
  %934 = vmatprep.subr.mxu0 0.0
  %935 = vmatpush2.msra.mxu0 0.0
  %936 = vmatprep.subr.mxu0 0.0
  %937 = vmatpush2.msra.mxu0 0.0
  %938 = vmatprep.subr.mxu0 0.0
  %939 = vmatpush2.msra.mxu0 0.0
  %940 = vmatprep.subr.mxu0 0.0
  %941 = vmatpush2.msra.mxu0 0.0
  %942 = vmatprep.subr.mxu0 0.0
  %943 = vmatpush2.msra.mxu0 0.0
  %944 = vmatprep.subr.mxu0 0.0
  %945 = vmatpush2.msra.mxu0 0.0
  %946 = vmatprep.subr.mxu0 0.0
  %947 = vmatpush2.msra.mxu0 0.0
  %948 = vmatprep.subr.mxu0 0.0
  %949 = vmatpush2.msra.mxu0 0.0
  %950 = vmatprep.subr.mxu0 0.0
  %951 = vmatpush2.msra.mxu0 0.0
  %952 = vmatprep.mubr.f32.mxu0 0.0
  %953 = vmatmul.mubr.f32.gmra.mxu0 %v886
  %v954 = vpop.f32.mrf.mxu0
  %v955 = vadd.f32 0.0, %v954
  %v956 = vpop.f32.mrf.mxu0
  %v957 = vadd.f32 0.0, %v956
  %958 = vdwg.mxu0
  %v959 = vadd.f32 %v879, %v955
  %v960 = vadd.f32 %v880, %v957
  %v961 = vld [vmem:[%s10] sm:$0xff]
  %v962 = vld [vmem:[%s10 + $0x8] sm:$0xff]
  %v963 = vld [vmem:[%s10 + $0x10] sm:$0xff]
  %v964 = vld [vmem:[%s10 + $0x18] sm:$0xff]
  %v965 = vld [vmem:[%s10 + $0x20] sm:$0xff]
  %v966 = vld [vmem:[%s10 + $0x28] sm:$0xff]
  %v967 = vld [vmem:[%s10 + $0x30] sm:$0xff]
  %v968 = vld [vmem:[%s10 + $0x38] sm:$0xff]
  %v969 = vld [vmem:[%s10 + $0x40] sm:$0xff]
  %v970 = vld [vmem:[%s10 + $0x48] sm:$0xff]
  %v971 = vld [vmem:[%s10 + $0x50] sm:$0xff]
  %v972 = vld [vmem:[%s10 + $0x58] sm:$0xff]
  %v973 = vld [vmem:[%s10 + $0x60] sm:$0xff]
  %v974 = vld [vmem:[%s10 + $0x68] sm:$0xff]
  %v975 = vld [vmem:[%s10 + $0x70] sm:$0xff]
  %v976 = vld [vmem:[%s10 + $0x78] sm:$0xff]
  %v977 = vld [vmem:[%s10 + $0x80] sm:$0xff]
  %v978 = vld [vmem:[%s10 + $0x88] sm:$0xff]
  %v979 = vld [vmem:[%s10 + $0x90] sm:$0xff]
  %v980 = vld [vmem:[%s10 + $0x98] sm:$0xff]
  %v981 = vld [vmem:[%s10 + $0xa0] sm:$0xff]
  %v982 = vld [vmem:[%s10 + $0xa8] sm:$0xff]
  %v983 = vld [vmem:[%s10 + $0xb0] sm:$0xff]
  %v984 = vld [vmem:[%s10 + $0xb8] sm:$0xff]
  %v985 = vld [vmem:[%s10 + $0xc0] sm:$0xff]
  %v986 = vld [vmem:[%s10 + $0xc8] sm:$0xff]
  %v987 = vld [vmem:[%s10 + $0xd0] sm:$0xff]
  %v988 = vld [vmem:[%s10 + $0xd8] sm:$0xff]
  %v989 = vld [vmem:[%s10 + $0xe0] sm:$0xff]
  %v990 = vld [vmem:[%s10 + $0xe8] sm:$0xff]
  %v991 = vld [vmem:[%s10 + $0xf0] sm:$0xff]
  %v992 = vld [vmem:[%s10 + $0xf8] sm:$0xff]
  %v993 = vld [vmem:[%s11] sm:$0xff]
  %994 = vmatprep.subr.mxu0 0.0
  %995 = vmatpush1.msra.mxu0 0.0
  %996 = vmatprep.subr.mxu0 0.0
  %997 = vmatpush1.msra.mxu0 0.0
  %998 = vmatprep.subr.mxu0 0.0
  %999 = vmatpush1.msra.mxu0 0.0
  %1000 = vmatprep.subr.mxu0 0.0
  %1001 = vmatpush1.msra.mxu0 0.0
  %1002 = vmatprep.subr.mxu0 0.0
  %1003 = vmatpush1.msra.mxu0 0.0
  %1004 = vmatprep.subr.mxu0 0.0
  %1005 = vmatpush1.msra.mxu0 0.0
  %1006 = vmatprep.subr.mxu0 0.0
  %1007 = vmatpush1.msra.mxu0 0.0
  %1008 = vmatprep.subr.mxu0 0.0
  %1009 = vmatpush1.msra.mxu0 0.0
  %1010 = vmatprep.subr.mxu0 0.0
  %1011 = vmatpush1.msra.mxu0 0.0
  %1012 = vmatprep.subr.mxu0 0.0
  %1013 = vmatpush1.msra.mxu0 0.0
  %1014 = vmatprep.subr.mxu0 0.0
  %1015 = vmatpush1.msra.mxu0 0.0
  %1016 = vmatprep.subr.mxu0 0.0
  %1017 = vmatpush1.msra.mxu0 0.0
  %1018 = vmatprep.subr.mxu0 0.0
  %1019 = vmatpush1.msra.mxu0 0.0
  %1020 = vmatprep.subr.mxu0 0.0
  %1021 = vmatpush1.msra.mxu0 0.0
  %1022 = vmatprep.subr.mxu0 0.0
  %1023 = vmatpush1.msra.mxu0 0.0
  %1024 = vmatprep.subr.mxu0 0.0
  %1025 = vmatpush1.msra.mxu0 %v993
  %1026 = vmatprep.subr.mxu0 0.0
  %1027 = vmatpush2.msra.mxu0 0.0
  %1028 = vmatprep.subr.mxu0 0.0
  %1029 = vmatpush2.msra.mxu0 0.0
  %1030 = vmatprep.subr.mxu0 0.0
  %1031 = vmatpush2.msra.mxu0 0.0
  %1032 = vmatprep.subr.mxu0 0.0
  %1033 = vmatpush2.msra.mxu0 0.0
  %1034 = vmatprep.subr.mxu0 0.0
  %1035 = vmatpush2.msra.mxu0 0.0
  %1036 = vmatprep.subr.mxu0 0.0
  %1037 = vmatpush2.msra.mxu0 0.0
  %1038 = vmatprep.subr.mxu0 0.0
  %1039 = vmatpush2.msra.mxu0 0.0
  %1040 = vmatprep.subr.mxu0 0.0
  %1041 = vmatpush2.msra.mxu0 0.0
  %1042 = vmatprep.subr.mxu0 0.0
  %1043 = vmatpush2.msra.mxu0 0.0
  %1044 = vmatprep.subr.mxu0 0.0
  %1045 = vmatpush2.msra.mxu0 0.0
  %1046 = vmatprep.subr.mxu0 0.0
  %1047 = vmatpush2.msra.mxu0 0.0
  %1048 = vmatprep.subr.mxu0 0.0
  %1049 = vmatpush2.msra.mxu0 0.0
  %1050 = vmatprep.subr.mxu0 0.0
  %1051 = vmatpush2.msra.mxu0 0.0
  %1052 = vmatprep.subr.mxu0 0.0
  %1053 = vmatpush2.msra.mxu0 0.0
  %1054 = vmatprep.subr.mxu0 0.0
  %1055 = vmatpush2.msra.mxu0 0.0
  %1056 = vmatprep.subr.mxu0 0.0
  %1057 = vmatpush2.msra.mxu0 0.0
  %1058 = vmatprep.mubr.f32.mxu0 0.0
  %1059 = vmatmul.mubr.f32.gmra.mxu0 %v727
  %v1060 = vpop.f32.mrf.mxu0
  %v1061 = vadd.f32 0.0, %v1060
  %v1062 = vpop.f32.mrf.mxu0
  %1063 = vdwg.mxu0
  %1064 = vmatprep.subr.mxu0 0.0
  %1065 = vmatpush1.msra.mxu0 %v976
  %1066 = vmatprep.subr.mxu0 0.0
  %1067 = vmatpush1.msra.mxu0 %v975
  %1068 = vmatprep.subr.mxu0 0.0
  %1069 = vmatpush1.msra.mxu0 %v974
  %1070 = vmatprep.subr.mxu0 0.0
  %1071 = vmatpush1.msra.mxu0 %v973
  %1072 = vmatprep.subr.mxu0 0.0
  %1073 = vmatpush1.msra.mxu0 %v972
  %1074 = vmatprep.subr.mxu0 0.0
  %1075 = vmatpush1.msra.mxu0 %v971
  %1076 = vmatprep.subr.mxu0 0.0
  %1077 = vmatpush1.msra.mxu0 %v970
  %1078 = vmatprep.subr.mxu0 0.0
  %1079 = vmatpush1.msra.mxu0 %v969
  %1080 = vmatprep.subr.mxu0 0.0
  %1081 = vmatpush1.msra.mxu0 %v968
  %1082 = vmatprep.subr.mxu0 0.0
  %1083 = vmatpush1.msra.mxu0 %v967
  %1084 = vmatprep.subr.mxu0 0.0
  %1085 = vmatpush1.msra.mxu0 %v966
  %1086 = vmatprep.subr.mxu0 0.0
  %1087 = vmatpush1.msra.mxu0 %v965
  %1088 = vmatprep.subr.mxu0 0.0
  %1089 = vmatpush1.msra.mxu0 %v964
  %1090 = vmatprep.subr.mxu0 0.0
  %1091 = vmatpush1.msra.mxu0 %v963
  %1092 = vmatprep.subr.mxu0 0.0
  %1093 = vmatpush1.msra.mxu0 %v962
  %1094 = vmatprep.subr.mxu0 0.0
  %1095 = vmatpush1.msra.mxu0 %v961
  %1096 = vmatprep.subr.mxu0 0.0
  %1097 = vmatpush2.msra.mxu0 %v992
  %1098 = vmatprep.subr.mxu0 0.0
  %1099 = vmatpush2.msra.mxu0 %v991
  %1100 = vmatprep.subr.mxu0 0.0
  %1101 = vmatpush2.msra.mxu0 %v990
  %1102 = vmatprep.subr.mxu0 0.0
  %1103 = vmatpush2.msra.mxu0 %v989
  %1104 = vmatprep.subr.mxu0 0.0
  %1105 = vmatpush2.msra.mxu0 %v988
  %1106 = vmatprep.subr.mxu0 0.0
  %1107 = vmatpush2.msra.mxu0 %v987
  %1108 = vmatprep.subr.mxu0 0.0
  %1109 = vmatpush2.msra.mxu0 %v986
  %1110 = vmatprep.subr.mxu0 0.0
  %1111 = vmatpush2.msra.mxu0 %v985
  %1112 = vmatprep.subr.mxu0 0.0
  %1113 = vmatpush2.msra.mxu0 %v984
  %1114 = vmatprep.subr.mxu0 0.0
  %1115 = vmatpush2.msra.mxu0 %v983
  %1116 = vmatprep.subr.mxu0 0.0
  %1117 = vmatpush2.msra.mxu0 %v982
  %1118 = vmatprep.subr.mxu0 0.0
  %1119 = vmatpush2.msra.mxu0 %v981
  %1120 = vmatprep.subr.mxu0 0.0
  %1121 = vmatpush2.msra.mxu0 %v980
  %1122 = vmatprep.subr.mxu0 0.0
  %1123 = vmatpush2.msra.mxu0 %v979
  %1124 = vmatprep.subr.mxu0 0.0
  %1125 = vmatpush2.msra.mxu0 %v978
  %1126 = vmatprep.subr.mxu0 0.0
  %1127 = vmatpush2.msra.mxu0 %v977
  %1128 = vmatprep.mubr.f32.mxu0 %v960
  %1129 = vmatmul.mubr.f32.gmra.mxu0 %v959
  %v1130 = vpop.f32.mrf.mxu0
  %v1131 = vadd.f32 %v1061, %v1130
  %v1132 = vpop.f32.mrf.mxu0
  %1133 = vdwg.mxu0
  %v1134 = vld [vmem:[%s12] sm:$0xff]
  %1135 = vmatprep.subr.mxu0 0.0
  %1136 = vmatpush1.msra.mxu0 0.0
  %1137 = vmatprep.subr.mxu0 0.0
  %1138 = vmatpush1.msra.mxu0 0.0
  %1139 = vmatprep.subr.mxu0 0.0
  %1140 = vmatpush1.msra.mxu0 0.0
  %1141 = vmatprep.subr.mxu0 0.0
  %1142 = vmatpush1.msra.mxu0 0.0
  %1143 = vmatprep.subr.mxu0 0.0
  %1144 = vmatpush1.msra.mxu0 0.0
  %1145 = vmatprep.subr.mxu0 0.0
  %1146 = vmatpush1.msra.mxu0 0.0
  %1147 = vmatprep.subr.mxu0 0.0
  %1148 = vmatpush1.msra.mxu0 0.0
  %1149 = vmatprep.subr.mxu0 0.0
  %1150 = vmatpush1.msra.mxu0 0.0
  %1151 = vmatprep.subr.mxu0 0.0
  %1152 = vmatpush1.msra.mxu0 0.0
  %1153 = vmatprep.subr.mxu0 0.0
  %1154 = vmatpush1.msra.mxu0 0.0
  %1155 = vmatprep.subr.mxu0 0.0
  %1156 = vmatpush1.msra.mxu0 0.0
  %1157 = vmatprep.subr.mxu0 0.0
  %1158 = vmatpush1.msra.mxu0 0.0
  %1159 = vmatprep.subr.mxu0 0.0
  %1160 = vmatpush1.msra.mxu0 0.0
  %1161 = vmatprep.subr.mxu0 0.0
  %1162 = vmatpush1.msra.mxu0 0.0
  %1163 = vmatprep.subr.mxu0 0.0
  %1164 = vmatpush1.msra.mxu0 0.0
  %1165 = vmatprep.subr.mxu0 0.0
  %1166 = vmatpush1.msra.mxu0 %v1134
  %1167 = vmatprep.subr.mxu0 0.0
  %1168 = vmatpush2.msra.mxu0 0.0
  %1169 = vmatprep.subr.mxu0 0.0
  %1170 = vmatpush2.msra.mxu0 0.0
  %1171 = vmatprep.subr.mxu0 0.0
  %1172 = vmatpush2.msra.mxu0 0.0
  %1173 = vmatprep.subr.mxu0 0.0
  %1174 = vmatpush2.msra.mxu0 0.0
  %1175 = vmatprep.subr.mxu0 0.0
  %1176 = vmatpush2.msra.mxu0 0.0
  %1177 = vmatprep.subr.mxu0 0.0
  %1178 = vmatpush2.msra.mxu0 0.0
  %1179 = vmatprep.subr.mxu0 0.0
  %1180 = vmatpush2.msra.mxu0 0.0
  %1181 = vmatprep.subr.mxu0 0.0
  %1182 = vmatpush2.msra.mxu0 0.0
  %1183 = vmatprep.subr.mxu0 0.0
  %1184 = vmatpush2.msra.mxu0 0.0
  %1185 = vmatprep.subr.mxu0 0.0
  %1186 = vmatpush2.msra.mxu0 0.0
  %1187 = vmatprep.subr.mxu0 0.0
  %1188 = vmatpush2.msra.mxu0 0.0
  %1189 = vmatprep.subr.mxu0 0.0
  %1190 = vmatpush2.msra.mxu0 0.0
  %1191 = vmatprep.subr.mxu0 0.0
  %1192 = vmatpush2.msra.mxu0 0.0
  %1193 = vmatprep.subr.mxu0 0.0
  %1194 = vmatpush2.msra.mxu0 0.0
  %1195 = vmatprep.subr.mxu0 0.0
  %1196 = vmatpush2.msra.mxu0 0.0
  %1197 = vmatprep.subr.mxu0 0.0
  %1198 = vmatpush2.msra.mxu0 0.0
  %1199 = vmatprep.mubr.f32.mxu0 0.0
  %1200 = vmatmul.mubr.f32.gmra.mxu0 %v806
  %v1201 = vpop.f32.mrf.mxu0
  %v1202 = vadd.f32 0.0, %v1201
  %v1203 = vpop.f32.mrf.mxu0
  %1204 = vdwg.mxu0
  %v1205 = vadd.f32 %v1131, %v1202
  %v1206 = vld [vmem:[%s13] sm:$0xff]
  %1207 = vmatprep.subr.mxu0 0.0
  %1208 = vmatpush1.msra.mxu0 0.0
  %1209 = vmatprep.subr.mxu0 0.0
  %1210 = vmatpush1.msra.mxu0 0.0
  %1211 = vmatprep.subr.mxu0 0.0
  %1212 = vmatpush1.msra.mxu0 0.0
  %1213 = vmatprep.subr.mxu0 0.0
  %1214 = vmatpush1.msra.mxu0 0.0
  %1215 = vmatprep.subr.mxu0 0.0
  %1216 = vmatpush1.msra.mxu0 0.0
  %1217 = vmatprep.subr.mxu0 0.0
  %1218 = vmatpush1.msra.mxu0 0.0
  %1219 = vmatprep.subr.mxu0 0.0
  %1220 = vmatpush1.msra.mxu0 0.0
  %1221 = vmatprep.subr.mxu0 0.0
  %1222 = vmatpush1.msra.mxu0 0.0
  %1223 = vmatprep.subr.mxu0 0.0
  %1224 = vmatpush1.msra.mxu0 0.0
  %1225 = vmatprep.subr.mxu0 0.0
  %1226 = vmatpush1.msra.mxu0 0.0
  %1227 = vmatprep.subr.mxu0 0.0
  %1228 = vmatpush1.msra.mxu0 0.0
  %1229 = vmatprep.subr.mxu0 0.0
  %1230 = vmatpush1.msra.mxu0 0.0
  %1231 = vmatprep.subr.mxu0 0.0
  %1232 = vmatpush1.msra.mxu0 0.0
  %1233 = vmatprep.subr.mxu0 0.0
  %1234 = vmatpush1.msra.mxu0 0.0
  %1235 = vmatprep.subr.mxu0 0.0
  %1236 = vmatpush1.msra.mxu0 0.0
  %1237 = vmatprep.subr.mxu0 0.0
  %1238 = vmatpush1.msra.mxu0 %v1206
  %1239 = vmatprep.subr.mxu0 0.0
  %1240 = vmatpush2.msra.mxu0 0.0
  %1241 = vmatprep.subr.mxu0 0.0
  %1242 = vmatpush2.msra.mxu0 0.0
  %1243 = vmatprep.subr.mxu0 0.0
  %1244 = vmatpush2.msra.mxu0 0.0
  %1245 = vmatprep.subr.mxu0 0.0
  %1246 = vmatpush2.msra.mxu0 0.0
  %1247 = vmatprep.subr.mxu0 0.0
  %1248 = vmatpush2.msra.mxu0 0.0
  %1249 = vmatprep.subr.mxu0 0.0
  %1250 = vmatpush2.msra.mxu0 0.0
  %1251 = vmatprep.subr.mxu0 0.0
  %1252 = vmatpush2.msra.mxu0 0.0
  %1253 = vmatprep.subr.mxu0 0.0
  %1254 = vmatpush2.msra.mxu0 0.0
  %1255 = vmatprep.subr.mxu0 0.0
  %1256 = vmatpush2.msra.mxu0 0.0
  %1257 = vmatprep.subr.mxu0 0.0
  %1258 = vmatpush2.msra.mxu0 0.0
  %1259 = vmatprep.subr.mxu0 0.0
  %1260 = vmatpush2.msra.mxu0 0.0
  %1261 = vmatprep.subr.mxu0 0.0
  %1262 = vmatpush2.msra.mxu0 0.0
  %1263 = vmatprep.subr.mxu0 0.0
  %1264 = vmatpush2.msra.mxu0 0.0
  %1265 = vmatprep.subr.mxu0 0.0
  %1266 = vmatpush2.msra.mxu0 0.0
  %1267 = vmatprep.subr.mxu0 0.0
  %1268 = vmatpush2.msra.mxu0 0.0
  %1269 = vmatprep.subr.mxu0 0.0
  %1270 = vmatpush2.msra.mxu0 0.0
  %1271 = vmatprep.mubr.f32.mxu0 0.0
  %1272 = vmatmul.mubr.f32.gmra.mxu0 %v886
  %v1273 = vpop.f32.mrf.mxu0
  %v1274 = vadd.f32 0.0, %v1273
  %v1275 = vpop.f32.mrf.mxu0
  %1276 = vdwg.mxu0
  %v1277 = vadd.f32 %v1205, %v1274
  %v1278 = vld [vmem:[%s14] sm:$0xff]
  %v1279 = vld [vmem:[%s14 + $0x8] sm:$0xff]
  %v1280 = vld [vmem:[%s14 + $0x10] sm:$0xff]
  %v1281 = vld [vmem:[%s14 + $0x18] sm:$0xff]
  %1282 = vmatprep.subr.mxu0 0.0
  %1283 = vmatpush1.msra.mxu0 0.0
  %1284 = vmatprep.subr.mxu0 0.0
  %1285 = vmatpush1.msra.mxu0 0.0
  %1286 = vmatprep.subr.mxu0 0.0
  %1287 = vmatpush1.msra.mxu0 0.0
  %1288 = vmatprep.subr.mxu0 0.0
  %1289 = vmatpush1.msra.mxu0 0.0
  %1290 = vmatprep.subr.mxu0 0.0
  %1291 = vmatpush1.msra.mxu0 0.0
  %1292 = vmatprep.subr.mxu0 0.0
  %1293 = vmatpush1.msra.mxu0 0.0
  %1294 = vmatprep.subr.mxu0 0.0
  %1295 = vmatpush1.msra.mxu0 0.0
  %1296 = vmatprep.subr.mxu0 0.0
  %1297 = vmatpush1.msra.mxu0 0.0
  %1298 = vmatprep.subr.mxu0 0.0
  %1299 = vmatpush1.msra.mxu0 0.0
  %1300 = vmatprep.subr.mxu0 0.0
  %1301 = vmatpush1.msra.mxu0 0.0
  %1302 = vmatprep.subr.mxu0 0.0
  %1303 = vmatpush1.msra.mxu0 0.0
  %1304 = vmatprep.subr.mxu0 0.0
  %1305 = vmatpush1.msra.mxu0 0.0
  %1306 = vmatprep.subr.mxu0 0.0
  %1307 = vmatpush1.msra.mxu0 %v1281
  %1308 = vmatprep.subr.mxu0 0.0
  %1309 = vmatpush1.msra.mxu0 %v1280
  %1310 = vmatprep.subr.mxu0 0.0
  %1311 = vmatpush1.msra.mxu0 %v1279
  %1312 = vmatprep.subr.mxu0 0.0
  %1313 = vmatpush1.msra.mxu0 %v1278
  %1314 = vmatprep.subr.mxu0 0.0
  %1315 = vmatpush2.msra.mxu0 0.0
  %1316 = vmatprep.subr.mxu0 0.0
  %1317 = vmatpush2.msra.mxu0 0.0
  %1318 = vmatprep.subr.mxu0 0.0
  %1319 = vmatpush2.msra.mxu0 0.0
  %1320 = vmatprep.subr.mxu0 0.0
  %1321 = vmatpush2.msra.mxu0 0.0
  %1322 = vmatprep.subr.mxu0 0.0
  %1323 = vmatpush2.msra.mxu0 0.0
  %1324 = vmatprep.subr.mxu0 0.0
  %1325 = vmatpush2.msra.mxu0 0.0
  %1326 = vmatprep.subr.mxu0 0.0
  %1327 = vmatpush2.msra.mxu0 0.0
  %1328 = vmatprep.subr.mxu0 0.0
  %1329 = vmatpush2.msra.mxu0 0.0
  %1330 = vmatprep.subr.mxu0 0.0
  %1331 = vmatpush2.msra.mxu0 0.0
  %1332 = vmatprep.subr.mxu0 0.0
  %1333 = vmatpush2.msra.mxu0 0.0
  %1334 = vmatprep.subr.mxu0 0.0
  %1335 = vmatpush2.msra.mxu0 0.0
  %1336 = vmatprep.subr.mxu0 0.0
  %1337 = vmatpush2.msra.mxu0 0.0
  %1338 = vmatprep.subr.mxu0 0.0
  %1339 = vmatpush2.msra.mxu0 0.0
  %1340 = vmatprep.subr.mxu0 0.0
  %1341 = vmatpush2.msra.mxu0 0.0
  %1342 = vmatprep.subr.mxu0 0.0
  %1343 = vmatpush2.msra.mxu0 0.0
  %1344 = vmatprep.subr.mxu0 0.0
  %1345 = vmatpush2.msra.mxu0 0.0
  %1346 = vmatprep.mubr.f32.mxu0 0.0
  %1347 = vmatmul.mubr.f32.gmra.mxu0 %v649
  %v1348 = vpop.f32.mrf.mxu0
  %v1349 = vadd.f32 0.0, %v1348
  %v1350 = vpop.f32.mrf.mxu0
  %1351 = vdwg.mxu0
  %v1352 = vadd.f32 %v1277, %v1349
  %v1353 = vld [vmem:[%s15] sm:$0x1]
  %v1355 = vlaneseq
  %v1356 = vshrl.u32 %v1355, 7
  %v1357 = vsub.s32 0, %v1356
  %v1358 = vrot.slane %v1353, %v1357
  %v1360 = vadd.f32 %v1352, %v1358
  %vm1361 = vcmask 123904
  %1362 = vst.msk [vmem:[%s16] sm:$0x3] %vm1361, %v1360
  // Predicated region
  $region66: #{_lambda_.6} parent=0 // pred_check
    _
  $region67: #{_lambda_.6} parent=0 // pred_check_branch
    %1364 = sbr.rel (0) target = $region69
  $region68: #{_lambda_.6} parent=0 // pred_region
    _
  $region69: #{_lambda_.6} parent=0 // pred_fallthru
    _
  // Predicated region
  $region70: #{_lambda_.6} parent=0 // pred_check
    _
  $region71: #{_lambda_.6} parent=0 // pred_check_branch
    %1366 = sbr.rel (0) target = $region73
  $region72: #{_lambda_.6} parent=0 // pred_region
    _
  $region73: #{_lambda_.6} parent=0 // pred_fallthru
    _

</llo_original>
